<compile_context>
chip_gen: v5e
topology: v5e:2x2
jax: 0.10.0
libtpu: 0.0.40
codegen_flags: <defaults>
</compile_context>

<pallas_src>
import jax
import jax.numpy as jnp
from jax import lax
from jax.experimental import pallas as pl
from jax.experimental.pallas import tpu as pltpu

EMBED_DIM = 32
MAX_LEN = 3000
BLOCK_N = 512  # positions gathered per grid step (multiple of 128)


def _round_up(x: int, m: int) -> int:
    return ((x + m - 1) // m) * m


def prepare_position_table(weight):
    """Once-per-parameter prep: exact 3-plane bf16 split of the f32 table.

    weight: (max_len, E) f32
    returns: (K_pad, lane_pad) bf16 with the three planes concatenated along
             lanes:  [:, 0:E]=hi  [:, E:2E]=mid  [:, 2E:3E]=lo, zero padded.
    """
    max_len, e = weight.shape
    w = weight.astype(jnp.float32)
    hi = w.astype(jnp.bfloat16)
    r1 = w - hi.astype(jnp.float32)            # exact in f32
    mid = r1.astype(jnp.bfloat16)
    r2 = r1 - mid.astype(jnp.float32)          # exact in f32
    lo = r2.astype(jnp.bfloat16)               # remaining low bits
    planes = jnp.concatenate([hi, mid, lo], axis=1)        # (max_len, 3E)
    k_pad = _round_up(max_len, 128)
    lane_pad = _round_up(3 * e, 128)
    return jnp.pad(planes, ((0, k_pad - max_len), (0, lane_pad - 3 * e)))


def _embed_gather_kernel(idx_ref, wp_ref, out_ref):
    """Gather `blk` embedding rows with a one-hot bf16 MXU matmul.

    idx_ref : VMEM (blk, 1)          int32 -- positions for this grid step
    wp_ref  : VMEM (K_pad, lane_pad) bf16  -- packed hi/mid/lo table planes
    out_ref : VMEM (blk, E)          f32   -- gathered embeddings (row layout)
    """
    k_pad = wp_ref.shape[0]
    blk = idx_ref.shape[0]
    e = out_ref.shape[1]

    # one_hot[r, k] = (k == idx[r]); exact 0/1 values, so bf16 is lossless.
    col_ids = lax.broadcasted_iota(jnp.int32, (blk, k_pad), 1)
    one_hot = (col_ids == idx_ref[...]).astype(jnp.bfloat16)

    # Single default-precision bf16 matmul covers all three planes because
    # they are packed along the (<=128) output-lane dim:
    #   (blk, K_pad) @ (K_pad, lane_pad) -> (blk, lane_pad) f32
    planes = jnp.dot(one_hot, wp_ref[...], preferred_element_type=jnp.float32)

    # Exact f32 reconstruction: hi + mid + lo of the selected row.
    out_ref[...] = planes[:, 0:e] + planes[:, e:2 * e] + planes[:, 2 * e:3 * e]


def position_embedding_learned(residue_idx, weight, *, block_n=BLOCK_N,
                               table_planes=None, force_kernel=False):
    """residue_idx: (B, L) int; weight: (max_len, embed_dim) f32.

    Returns (B, L, embed_dim), matching nn.Embedding(residue_idx).
    """
    B, L = residue_idx.shape
    max_len, e = weight.shape
    n = B * L

    # Clamp (Pallas has no bounds checks; matches jnp's clamping gather).
    flat_idx = jnp.clip(residue_idx.reshape(-1).astype(jnp.int32), 0, max_len - 1)

    # Small-N fast path: staging the table + building a (blk, K_pad) one-hot
    # costs far more than a native XLA gather when only 1-2 blocks of work exist.
    if not force_kernel and n <= 2 * block_n:
        return weight[flat_idx].reshape(B, L, e)

    if table_planes is None:
        table_planes = prepare_position_table(weight)
    k_pad, lane_pad = table_planes.shape

    # Block size: multiple of 128, capped by the (padded) problem size.
    blk = min(_round_up(block_n, 128), _round_up(n, 128))
    n_pad = _round_up(n, blk)
    idx2d = jnp.pad(flat_idx, (0, n_pad - n)).reshape(n_pad, 1)

    out = pl.pallas_call(
        _embed_gather_kernel,
        out_shape=jax.ShapeDtypeStruct((n_pad, e), jnp.float32),
        grid=(n_pad // blk,),
        in_specs=[
            pl.BlockSpec((blk, 1), lambda i: (i, 0)),             # per-block indices
            pl.BlockSpec((k_pad, lane_pad), lambda i: (0, 0)),    # resident table planes
        ],
        out_specs=pl.BlockSpec((blk, e), lambda i: (i, 0)),       # (N, E) row layout
        compiler_params=pltpu.CompilerParams(
            # TODO(synk): on v7x verify "parallel" actually core-shards this
            # axis; otherwise add an explicit 2-way leading grid split.
            dimension_semantics=("parallel",),
            vmem_limit_bytes=48 * 1024 * 1024,
        ),
    )(idx2d, table_planes)

    return out[:n].reshape(B, L, e).astype(weight.dtype)


if __name__ == "__main__":
    key = jax.random.PRNGKey(0)
    k_w, k_idx, k_idx2 = jax.random.split(key, 3)

    # deterministic "nn.init.normal_" embedding weight
    weight = jax.random.normal(k_w, (MAX_LEN, EMBED_DIM), dtype=jnp.float32)

    # small residue_idx consistent with the module: batch=2, seq=8
    residue_idx = jax.random.randint(k_idx, (2, 8), 0, MAX_LEN, dtype=jnp.int32)
    ref_small = weight[residue_idx]

    # 1) auto path (small-N -> plain gather), bit-exact
    pos = jax.block_until_ready(position_embedding_learned(residue_idx, weight))
    assert pos.shape == (2, 8, EMBED_DIM)
    assert jnp.array_equal(pos, ref_small), "fast-path mismatch vs reference"

    # 2) force the Pallas kernel at the same tiny shape (single 128-wide block)
    pos_k = jax.block_until_ready(
        position_embedding_learned(residue_idx, weight, force_kernel=True))
    assert jnp.allclose(pos_k, ref_small, rtol=1e-6, atol=1e-6), \
        "kernel mismatch vs reference (tiny)"

    # 3) multi-block kernel path: batch=2, seq=640 -> 1280 positions, 3 grid steps
    residue_idx2 = jax.random.randint(k_idx2, (2, 640), 0, MAX_LEN, dtype=jnp.int32)
    table_planes = prepare_position_table(weight)   # hoisted once-per-param prep
    pos2 = jax.block_until_ready(
        position_embedding_learned(residue_idx2, weight, table_planes=table_planes))
    ref2 = weight[residue_idx2]
    assert pos2.shape == (2, 640, EMBED_DIM)
    assert jnp.allclose(pos2, ref2, rtol=1e-6, atol=1e-6), \
        "kernel mismatch vs reference (multi-block)"

    print("KERNEL_OK")
</pallas_src>

<mosaic_0001>
module attributes {stable_mosaic.version = 11 : i64} {
  func.func @_embed_gather_kernel(%arg0: i32, %arg1: memref<128x1xi32, #tpu.memory_space<vmem>>, %arg2: memref<3072x128xbf16, #tpu.memory_space<vmem>>, %arg3: memref<128x32xf32, #tpu.memory_space<vmem>>) attributes {dimension_semantics = [#tpu.dimension_semantics<parallel>], iteration_bounds = array<i64: 1>, scalar_prefetch = 0 : i64, scratch_operands = 0 : i64, tpu.core_type = #tpu.core_type<tc>, window_params = [{transform_indices = @transform_0, window_bounds = array<i64: 128, 1>}, {pipeline_mode = #tpu.pipeline_mode<synchronous>, transform_indices = @transform_1, window_bounds = array<i64: 3072, 128>}, {transform_indices = @transform_2, window_bounds = array<i64: 128, 32>}]} {
    %0 = tpu.iota {dimensions = array<i32: 1>} : vector<128x3072xi32>
    %c0 = arith.constant 0 : index
    %c0_0 = arith.constant 0 : index
    %1 = vector.load %arg1[%c0, %c0_0] : memref<128x1xi32, #tpu.memory_space<vmem>>, vector<128x1xi32>
    %2 = vector.broadcast %1 : vector<128x1xi32> to vector<128x3072xi32>
    %3 = arith.cmpi eq, %0, %2 : vector<128x3072xi32>
    %4 = arith.extui %3 : vector<128x3072xi1> to vector<128x3072xi32>
    %5 = arith.sitofp %4 : vector<128x3072xi32> to vector<128x3072xf32>
    %6 = arith.truncf %5 : vector<128x3072xf32> to vector<128x3072xbf16>
    %c0_1 = arith.constant 0 : index
    %c0_2 = arith.constant 0 : index
    %7 = vector.load %arg2[%c0_1, %c0_2] : memref<3072x128xbf16, #tpu.memory_space<vmem>>, vector<3072x128xbf16>
    %cst = arith.constant dense<0.000000e+00> : vector<128x128xf32>
    %8 = tpu.matmul %6, %7, %cst {dimension_numbers = #tpu.dot_dimension_numbers<[1], [0], [0], [1], [0, 0, 1, 1], [], []>} : vector<128x3072xbf16>, vector<3072x128xbf16>, vector<128x128xf32> -> vector<128x128xf32>
    %9 = vector.extract_strided_slice %8 {offsets = [0, 0], sizes = [128, 32], strides = [1, 1]} : vector<128x128xf32> to vector<128x32xf32>
    %10 = vector.extract_strided_slice %8 {offsets = [0, 32], sizes = [128, 32], strides = [1, 1]} : vector<128x128xf32> to vector<128x32xf32>
    %11 = arith.addf %9, %10 : vector<128x32xf32>
    %12 = vector.extract_strided_slice %8 {offsets = [0, 64], sizes = [128, 32], strides = [1, 1]} : vector<128x128xf32> to vector<128x32xf32>
    %13 = arith.addf %11, %12 : vector<128x32xf32>
    %c0_3 = arith.constant 0 : index
    %c0_4 = arith.constant 0 : index
    %14 = vector.load %arg3[%c0_3, %c0_4] : memref<128x32xf32, #tpu.memory_space<vmem>>, vector<128x32xf32>
    tpu.vector_store %arg3[%c0_3, %c0_4], %13 {strides = array<i32>} : memref<128x32xf32, #tpu.memory_space<vmem>>, vector<128x32xf32>,
    return
  }
  func.func @transform_0(%arg0: i32) -> (i32, i32) {
    %c0_i32 = arith.constant 0 : i32
    %c0_i32_0 = arith.constant 0 : i32
    return %arg0, %c0_i32 : i32, i32
  }
  func.func @transform_1(%arg0: i32) -> (i32, i32) {
    %c0_i32 = arith.constant 0 : i32
    %c0_i32_0 = arith.constant 0 : i32
    %c0_i32_1 = arith.constant 0 : i32
    return %c0_i32, %c0_i32_0 : i32, i32
  }
  func.func @transform_2(%arg0: i32) -> (i32, i32) {
    %c0_i32 = arith.constant 0 : i32
    %c0_i32_0 = arith.constant 0 : i32
    return %arg0, %c0_i32 : i32, i32
  }
}

</mosaic_0001>

<llo_original>
// kernel: tpu_custom_call.1
$region0: #{tpu_custom_call.1}
  #allocation0 [shape = 'u32[]', space=smem, size = 0x4, offset = 0x4, fixed_abs, tag = 'smem constant byte address 0x4 - core index']
  #allocation1 [shape = 'u32[72,128]{1,0:T(1,128)}', space=vmem, size = 0x9000, scoped, tag = 'internal scratch']
  %s0 = inlined_call_operand.vmem [shape: s32[128,1], index: 0, kind: input, shape index: {}]
  %s1 = inlined_call_operand.hbm [shape: bf16[3072,128], index: 1, kind: input, shape index: {}]
  %s2 = inlined_call_operand.vmem [shape: f32[128,32], index: 2, kind: output, shape index: {}]
  %s3 = sld [smem:[#allocation0]]
  $region22: #{tpu_custom_call.1} parent=0
    _
  %s5 = ssub.s32 1, %s3
  %s6 = scalar_select 0, %s5, %s3
  $region1: #{tpu_custom_call.1} parent=0
    #allocation2 [shape = 'u8[786432]{0}', space=vmem, size = 0xc0000, scoped, tag = 'input window, operand 1, single buffered']
    #allocation3 [shape = 's32[1]{0}', space=sflag, size = 0x4, scoped, tag = 'scoped memory for tpu_custom_call.1']
    %7 = vsyncpa [#allocation3], 0
    // Predicated region
    $region2: #{tpu_custom_call.1} parent=1 // pred_check
      _
    $region3: #{tpu_custom_call.1} parent=1 // pred_check_branch
      %9 = sbr.rel (0) target = $region5
    $region4: #{tpu_custom_call.1} parent=1 // pred_region
      _
    $region5: #{tpu_custom_call.1} parent=1 // pred_fallthru
      _
    // Predicated region
    $region6: #{tpu_custom_call.1} parent=1 // pred_check
      _
    $region7: #{tpu_custom_call.1} parent=1 // pred_check_branch
      %11 = sbr.rel (0) target = $region9
    $region8: #{tpu_custom_call.1} parent=1 // pred_region
      %13 = vsyncadd [#allocation3], 0
      %s14 = sshll.u32 %s1, 4
      %s15 = int_to_ptr.hbm [resolvable:$true] %s14
      %s16 = sshll.u32 [#allocation2], 4
      %s17 = int_to_ptr.vmem [resolvable:$true] %s16
      %22 = dma.hbm_to_vmem [thread:$0]  %s15, 24576, %s17, [#allocation3], 64, 64, 4
    $region9: #{tpu_custom_call.1} parent=1 // pred_fallthru
      _
    // Predicated region
    $region10: #{tpu_custom_call.1} parent=1 // pred_check
      _
    $region11: #{tpu_custom_call.1} parent=1 // pred_check_branch
      %24 = sbr.rel (0) target = $region13
    $region12: #{tpu_custom_call.1} parent=1 // pred_region
      %26 = dma.done [#allocation3], 24576
    $region13: #{tpu_custom_call.1} parent=1 // pred_fallthru
      _
    %v27 = vlaneseq
    %v28 = vand.u32 %v27, 127
    %v29 = vadd.s32 %v28, 128
    %v30 = vadd.s32 %v28, 256
    %v31 = vadd.s32 %v28, 384
    %v32 = vadd.s32 %v28, 512
    %v33 = vadd.s32 %v28, 640
    %v34 = vadd.s32 %v28, 768
    %v35 = vadd.s32 %v28, 896
    %v36 = vadd.s32 %v28, 1024
    %v37 = vadd.s32 %v28, 1152
    %v38 = vadd.s32 %v28, 1280
    %v39 = vadd.s32 %v28, 1408
    %v40 = vadd.s32 %v28, 1536
    %v41 = vadd.s32 %v28, 1664
    %v42 = vadd.s32 %v28, 1792
    %v43 = vadd.s32 %v28, 1920
    %v44 = vadd.s32 %v28, 2048
    %v45 = vadd.s32 %v28, 2176
    %v46 = vadd.s32 %v28, 2304
    %v47 = vadd.s32 %v28, 2432
    %v48 = vadd.s32 %v28, 2560
    %v49 = vadd.s32 %v28, 2688
    %v50 = vadd.s32 %v28, 2816
    %v51 = vadd.s32 %v28, 2944
    %v52 = vld [vmem:[%s0] sm:$0xff]
    %v53 = vld [vmem:[%s0 + $0x8] sm:$0xff]
    %v54 = vld [vmem:[%s0 + $0x10] sm:$0xff]
    %v55 = vld [vmem:[%s0 + $0x18] sm:$0xff]
    %v56 = vld [vmem:[%s0 + $0x20] sm:$0xff]
    %v57 = vld [vmem:[%s0 + $0x28] sm:$0xff]
    %v58 = vld [vmem:[%s0 + $0x30] sm:$0xff]
    %v59 = vld [vmem:[%s0 + $0x38] sm:$0xff]
    %v60 = vld [vmem:[%s0 + $0x40] sm:$0xff]
    %v61 = vld [vmem:[%s0 + $0x48] sm:$0xff]
    %v62 = vld [vmem:[%s0 + $0x50] sm:$0xff]
    %v63 = vld [vmem:[%s0 + $0x58] sm:$0xff]
    %v64 = vld [vmem:[%s0 + $0x60] sm:$0xff]
    %v65 = vld [vmem:[%s0 + $0x68] sm:$0xff]
    %v66 = vld [vmem:[%s0 + $0x70] sm:$0xff]
    %v67 = vld [vmem:[%s0 + $0x78] sm:$0xff]
    %68 = vset.pattern.permute.xlu0 0
    %69 = vperm.xlu0 %68, %v52
    %v70 = vpop.permute.xlu0 %69
    %71 = vset.pattern.permute.xlu0 0
    %72 = vperm.xlu0 %71, %v53
    %v73 = vpop.permute.xlu0 %72
    %74 = vset.pattern.permute.xlu0 0
    %75 = vperm.xlu0 %74, %v54
    %v76 = vpop.permute.xlu0 %75
    %77 = vset.pattern.permute.xlu0 0
    %78 = vperm.xlu0 %77, %v55
    %v79 = vpop.permute.xlu0 %78
    %80 = vset.pattern.permute.xlu0 0
    %81 = vperm.xlu0 %80, %v56
    %v82 = vpop.permute.xlu0 %81
    %83 = vset.pattern.permute.xlu0 0
    %84 = vperm.xlu0 %83, %v57
    %v85 = vpop.permute.xlu0 %84
    %86 = vset.pattern.permute.xlu0 0
    %87 = vperm.xlu0 %86, %v58
    %v88 = vpop.permute.xlu0 %87
    %89 = vset.pattern.permute.xlu0 0
    %90 = vperm.xlu0 %89, %v59
    %v91 = vpop.permute.xlu0 %90
    %92 = vset.pattern.permute.xlu0 0
    %93 = vperm.xlu0 %92, %v60
    %v94 = vpop.permute.xlu0 %93
    %95 = vset.pattern.permute.xlu0 0
    %96 = vperm.xlu0 %95, %v61
    %v97 = vpop.permute.xlu0 %96
    %98 = vset.pattern.permute.xlu0 0
    %99 = vperm.xlu0 %98, %v62
    %v100 = vpop.permute.xlu0 %99
    %101 = vset.pattern.permute.xlu0 0
    %102 = vperm.xlu0 %101, %v63
    %v103 = vpop.permute.xlu0 %102
    %104 = vset.pattern.permute.xlu0 0
    %105 = vperm.xlu0 %104, %v64
    %v106 = vpop.permute.xlu0 %105
    %107 = vset.pattern.permute.xlu0 0
    %108 = vperm.xlu0 %107, %v65
    %v109 = vpop.permute.xlu0 %108
    %110 = vset.pattern.permute.xlu0 0
    %111 = vperm.xlu0 %110, %v66
    %v112 = vpop.permute.xlu0 %111
    %113 = vset.pattern.permute.xlu0 0
    %114 = vperm.xlu0 %113, %v67
    %v115 = vpop.permute.xlu0 %114
    %vm116 = vcmp.eq.s32.totalorder %v28, %v70
    %vm117 = vcmp.eq.s32.totalorder %v29, %v70
    %vm118 = vcmp.eq.s32.totalorder %v30, %v70
    %vm119 = vcmp.eq.s32.totalorder %v31, %v70
    %vm120 = vcmp.eq.s32.totalorder %v32, %v70
    %vm121 = vcmp.eq.s32.totalorder %v33, %v70
    %vm122 = vcmp.eq.s32.totalorder %v34, %v70
    %vm123 = vcmp.eq.s32.totalorder %v35, %v70
    %vm124 = vcmp.eq.s32.totalorder %v36, %v70
    %vm125 = vcmp.eq.s32.totalorder %v37, %v70
    %vm126 = vcmp.eq.s32.totalorder %v38, %v70
    %vm127 = vcmp.eq.s32.totalorder %v39, %v70
    %vm128 = vcmp.eq.s32.totalorder %v40, %v70
    %vm129 = vcmp.eq.s32.totalorder %v41, %v70
    %vm130 = vcmp.eq.s32.totalorder %v42, %v70
    %vm131 = vcmp.eq.s32.totalorder %v43, %v70
    %vm132 = vcmp.eq.s32.totalorder %v44, %v70
    %vm133 = vcmp.eq.s32.totalorder %v45, %v70
    %vm134 = vcmp.eq.s32.totalorder %v46, %v70
    %vm135 = vcmp.eq.s32.totalorder %v47, %v70
    %vm136 = vcmp.eq.s32.totalorder %v48, %v70
    %vm137 = vcmp.eq.s32.totalorder %v49, %v70
    %vm138 = vcmp.eq.s32.totalorder %v50, %v70
    %vm139 = vcmp.eq.s32.totalorder %v51, %v70
    %vm140 = vcmp.eq.s32.totalorder %v28, %v73
    %vm141 = vcmp.eq.s32.totalorder %v29, %v73
    %vm142 = vcmp.eq.s32.totalorder %v30, %v73
    %vm143 = vcmp.eq.s32.totalorder %v31, %v73
    %vm144 = vcmp.eq.s32.totalorder %v32, %v73
    %vm145 = vcmp.eq.s32.totalorder %v33, %v73
    %vm146 = vcmp.eq.s32.totalorder %v34, %v73
    %vm147 = vcmp.eq.s32.totalorder %v35, %v73
    %vm148 = vcmp.eq.s32.totalorder %v36, %v73
    %vm149 = vcmp.eq.s32.totalorder %v37, %v73
    %vm150 = vcmp.eq.s32.totalorder %v38, %v73
    %vm151 = vcmp.eq.s32.totalorder %v39, %v73
    %vm152 = vcmp.eq.s32.totalorder %v40, %v73
    %vm153 = vcmp.eq.s32.totalorder %v41, %v73
    %vm154 = vcmp.eq.s32.totalorder %v42, %v73
    %vm155 = vcmp.eq.s32.totalorder %v43, %v73
    %vm156 = vcmp.eq.s32.totalorder %v44, %v73
    %vm157 = vcmp.eq.s32.totalorder %v45, %v73
    %vm158 = vcmp.eq.s32.totalorder %v46, %v73
    %vm159 = vcmp.eq.s32.totalorder %v47, %v73
    %vm160 = vcmp.eq.s32.totalorder %v48, %v73
    %vm161 = vcmp.eq.s32.totalorder %v49, %v73
    %vm162 = vcmp.eq.s32.totalorder %v50, %v73
    %vm163 = vcmp.eq.s32.totalorder %v51, %v73
    %vm164 = vcmp.eq.s32.totalorder %v28, %v76
    %vm165 = vcmp.eq.s32.totalorder %v29, %v76
    %vm166 = vcmp.eq.s32.totalorder %v30, %v76
    %vm167 = vcmp.eq.s32.totalorder %v31, %v76
    %vm168 = vcmp.eq.s32.totalorder %v32, %v76
    %vm169 = vcmp.eq.s32.totalorder %v33, %v76
    %vm170 = vcmp.eq.s32.totalorder %v34, %v76
    %vm171 = vcmp.eq.s32.totalorder %v35, %v76
    %vm172 = vcmp.eq.s32.totalorder %v36, %v76
    %vm173 = vcmp.eq.s32.totalorder %v37, %v76
    %vm174 = vcmp.eq.s32.totalorder %v38, %v76
    %vm175 = vcmp.eq.s32.totalorder %v39, %v76
    %vm176 = vcmp.eq.s32.totalorder %v40, %v76
    %vm177 = vcmp.eq.s32.totalorder %v41, %v76
    %vm178 = vcmp.eq.s32.totalorder %v42, %v76
    %vm179 = vcmp.eq.s32.totalorder %v43, %v76
    %vm180 = vcmp.eq.s32.totalorder %v44, %v76
    %vm181 = vcmp.eq.s32.totalorder %v45, %v76
    %vm182 = vcmp.eq.s32.totalorder %v46, %v76
    %vm183 = vcmp.eq.s32.totalorder %v47, %v76
    %vm184 = vcmp.eq.s32.totalorder %v48, %v76
    %vm185 = vcmp.eq.s32.totalorder %v49, %v76
    %vm186 = vcmp.eq.s32.totalorder %v50, %v76
    %vm187 = vcmp.eq.s32.totalorder %v51, %v76
    %vm188 = vcmp.eq.s32.totalorder %v28, %v79
    %vm189 = vcmp.eq.s32.totalorder %v29, %v79
    %vm190 = vcmp.eq.s32.totalorder %v30, %v79
    %vm191 = vcmp.eq.s32.totalorder %v31, %v79
    %vm192 = vcmp.eq.s32.totalorder %v32, %v79
    %vm193 = vcmp.eq.s32.totalorder %v33, %v79
    %vm194 = vcmp.eq.s32.totalorder %v34, %v79
    %vm195 = vcmp.eq.s32.totalorder %v35, %v79
    %vm196 = vcmp.eq.s32.totalorder %v36, %v79
    %vm197 = vcmp.eq.s32.totalorder %v37, %v79
    %vm198 = vcmp.eq.s32.totalorder %v38, %v79
    %vm199 = vcmp.eq.s32.totalorder %v39, %v79
    %vm200 = vcmp.eq.s32.totalorder %v40, %v79
    %vm201 = vcmp.eq.s32.totalorder %v41, %v79
    %vm202 = vcmp.eq.s32.totalorder %v42, %v79
    %vm203 = vcmp.eq.s32.totalorder %v43, %v79
    %vm204 = vcmp.eq.s32.totalorder %v44, %v79
    %vm205 = vcmp.eq.s32.totalorder %v45, %v79
    %vm206 = vcmp.eq.s32.totalorder %v46, %v79
    %vm207 = vcmp.eq.s32.totalorder %v47, %v79
    %vm208 = vcmp.eq.s32.totalorder %v48, %v79
    %vm209 = vcmp.eq.s32.totalorder %v49, %v79
    %vm210 = vcmp.eq.s32.totalorder %v50, %v79
    %vm211 = vcmp.eq.s32.totalorder %v51, %v79
    %vm212 = vcmp.eq.s32.totalorder %v28, %v82
    %vm213 = vcmp.eq.s32.totalorder %v29, %v82
    %vm214 = vcmp.eq.s32.totalorder %v30, %v82
    %vm215 = vcmp.eq.s32.totalorder %v31, %v82
    %vm216 = vcmp.eq.s32.totalorder %v32, %v82
    %vm217 = vcmp.eq.s32.totalorder %v33, %v82
    %vm218 = vcmp.eq.s32.totalorder %v34, %v82
    %vm219 = vcmp.eq.s32.totalorder %v35, %v82
    %vm220 = vcmp.eq.s32.totalorder %v36, %v82
    %vm221 = vcmp.eq.s32.totalorder %v37, %v82
    %vm222 = vcmp.eq.s32.totalorder %v38, %v82
    %vm223 = vcmp.eq.s32.totalorder %v39, %v82
    %vm224 = vcmp.eq.s32.totalorder %v40, %v82
    %vm225 = vcmp.eq.s32.totalorder %v41, %v82
    %vm226 = vcmp.eq.s32.totalorder %v42, %v82
    %vm227 = vcmp.eq.s32.totalorder %v43, %v82
    %vm228 = vcmp.eq.s32.totalorder %v44, %v82
    %vm229 = vcmp.eq.s32.totalorder %v45, %v82
    %vm230 = vcmp.eq.s32.totalorder %v46, %v82
    %vm231 = vcmp.eq.s32.totalorder %v47, %v82
    %vm232 = vcmp.eq.s32.totalorder %v48, %v82
    %vm233 = vcmp.eq.s32.totalorder %v49, %v82
    %vm234 = vcmp.eq.s32.totalorder %v50, %v82
    %vm235 = vcmp.eq.s32.totalorder %v51, %v82
    %vm236 = vcmp.eq.s32.totalorder %v28, %v85
    %vm237 = vcmp.eq.s32.totalorder %v29, %v85
    %vm238 = vcmp.eq.s32.totalorder %v30, %v85
    %vm239 = vcmp.eq.s32.totalorder %v31, %v85
    %vm240 = vcmp.eq.s32.totalorder %v32, %v85
    %vm241 = vcmp.eq.s32.totalorder %v33, %v85
    %vm242 = vcmp.eq.s32.totalorder %v34, %v85
    %vm243 = vcmp.eq.s32.totalorder %v35, %v85
    %vm244 = vcmp.eq.s32.totalorder %v36, %v85
    %vm245 = vcmp.eq.s32.totalorder %v37, %v85
    %vm246 = vcmp.eq.s32.totalorder %v38, %v85
    %vm247 = vcmp.eq.s32.totalorder %v39, %v85
    %vm248 = vcmp.eq.s32.totalorder %v40, %v85
    %vm249 = vcmp.eq.s32.totalorder %v41, %v85
    %vm250 = vcmp.eq.s32.totalorder %v42, %v85
    %vm251 = vcmp.eq.s32.totalorder %v43, %v85
    %vm252 = vcmp.eq.s32.totalorder %v44, %v85
    %vm253 = vcmp.eq.s32.totalorder %v45, %v85
    %vm254 = vcmp.eq.s32.totalorder %v46, %v85
    %vm255 = vcmp.eq.s32.totalorder %v47, %v85
    %vm256 = vcmp.eq.s32.totalorder %v48, %v85
    %vm257 = vcmp.eq.s32.totalorder %v49, %v85
    %vm258 = vcmp.eq.s32.totalorder %v50, %v85
    %vm259 = vcmp.eq.s32.totalorder %v51, %v85
    %vm260 = vcmp.eq.s32.totalorder %v28, %v88
    %vm261 = vcmp.eq.s32.totalorder %v29, %v88
    %vm262 = vcmp.eq.s32.totalorder %v30, %v88
    %vm263 = vcmp.eq.s32.totalorder %v31, %v88
    %vm264 = vcmp.eq.s32.totalorder %v32, %v88
    %vm265 = vcmp.eq.s32.totalorder %v33, %v88
    %vm266 = vcmp.eq.s32.totalorder %v34, %v88
    %vm267 = vcmp.eq.s32.totalorder %v35, %v88
    %vm268 = vcmp.eq.s32.totalorder %v36, %v88
    %vm269 = vcmp.eq.s32.totalorder %v37, %v88
    %vm270 = vcmp.eq.s32.totalorder %v38, %v88
    %vm271 = vcmp.eq.s32.totalorder %v39, %v88
    %vm272 = vcmp.eq.s32.totalorder %v40, %v88
    %vm273 = vcmp.eq.s32.totalorder %v41, %v88
    %vm274 = vcmp.eq.s32.totalorder %v42, %v88
    %vm275 = vcmp.eq.s32.totalorder %v43, %v88
    %vm276 = vcmp.eq.s32.totalorder %v44, %v88
    %vm277 = vcmp.eq.s32.totalorder %v45, %v88
    %vm278 = vcmp.eq.s32.totalorder %v46, %v88
    %vm279 = vcmp.eq.s32.totalorder %v47, %v88
    %vm280 = vcmp.eq.s32.totalorder %v48, %v88
    %vm281 = vcmp.eq.s32.totalorder %v49, %v88
    %vm282 = vcmp.eq.s32.totalorder %v50, %v88
    %vm283 = vcmp.eq.s32.totalorder %v51, %v88
    %vm284 = vcmp.eq.s32.totalorder %v28, %v91
    %vm285 = vcmp.eq.s32.totalorder %v29, %v91
    %vm286 = vcmp.eq.s32.totalorder %v30, %v91
    %vm287 = vcmp.eq.s32.totalorder %v31, %v91
    %vm288 = vcmp.eq.s32.totalorder %v32, %v91
    %vm289 = vcmp.eq.s32.totalorder %v33, %v91
    %vm290 = vcmp.eq.s32.totalorder %v34, %v91
    %vm291 = vcmp.eq.s32.totalorder %v35, %v91
    %vm292 = vcmp.eq.s32.totalorder %v36, %v91
    %vm293 = vcmp.eq.s32.totalorder %v37, %v91
    %vm294 = vcmp.eq.s32.totalorder %v38, %v91
    %vm295 = vcmp.eq.s32.totalorder %v39, %v91
    %vm296 = vcmp.eq.s32.totalorder %v40, %v91
    %vm297 = vcmp.eq.s32.totalorder %v41, %v91
    %vm298 = vcmp.eq.s32.totalorder %v42, %v91
    %vm299 = vcmp.eq.s32.totalorder %v43, %v91
    %vm300 = vcmp.eq.s32.totalorder %v44, %v91
    %vm301 = vcmp.eq.s32.totalorder %v45, %v91
    %vm302 = vcmp.eq.s32.totalorder %v46, %v91
    %vm303 = vcmp.eq.s32.totalorder %v47, %v91
    %vm304 = vcmp.eq.s32.totalorder %v48, %v91
    %vm305 = vcmp.eq.s32.totalorder %v49, %v91
    %vm306 = vcmp.eq.s32.totalorder %v50, %v91
    %vm307 = vcmp.eq.s32.totalorder %v51, %v91
    %vm308 = vcmp.eq.s32.totalorder %v28, %v94
    %vm309 = vcmp.eq.s32.totalorder %v29, %v94
    %vm310 = vcmp.eq.s32.totalorder %v30, %v94
    %vm311 = vcmp.eq.s32.totalorder %v31, %v94
    %vm312 = vcmp.eq.s32.totalorder %v32, %v94
    %vm313 = vcmp.eq.s32.totalorder %v33, %v94
    %vm314 = vcmp.eq.s32.totalorder %v34, %v94
    %vm315 = vcmp.eq.s32.totalorder %v35, %v94
    %vm316 = vcmp.eq.s32.totalorder %v36, %v94
    %vm317 = vcmp.eq.s32.totalorder %v37, %v94
    %vm318 = vcmp.eq.s32.totalorder %v38, %v94
    %vm319 = vcmp.eq.s32.totalorder %v39, %v94
    %vm320 = vcmp.eq.s32.totalorder %v40, %v94
    %vm321 = vcmp.eq.s32.totalorder %v41, %v94
    %vm322 = vcmp.eq.s32.totalorder %v42, %v94
    %vm323 = vcmp.eq.s32.totalorder %v43, %v94
    %vm324 = vcmp.eq.s32.totalorder %v44, %v94
    %vm325 = vcmp.eq.s32.totalorder %v45, %v94
    %vm326 = vcmp.eq.s32.totalorder %v46, %v94
    %vm327 = vcmp.eq.s32.totalorder %v47, %v94
    %vm328 = vcmp.eq.s32.totalorder %v48, %v94
    %vm329 = vcmp.eq.s32.totalorder %v49, %v94
    %vm330 = vcmp.eq.s32.totalorder %v50, %v94
    %vm331 = vcmp.eq.s32.totalorder %v51, %v94
    %vm332 = vcmp.eq.s32.totalorder %v28, %v97
    %vm333 = vcmp.eq.s32.totalorder %v29, %v97
    %vm334 = vcmp.eq.s32.totalorder %v30, %v97
    %vm335 = vcmp.eq.s32.totalorder %v31, %v97
    %vm336 = vcmp.eq.s32.totalorder %v32, %v97
    %vm337 = vcmp.eq.s32.totalorder %v33, %v97
    %vm338 = vcmp.eq.s32.totalorder %v34, %v97
    %vm339 = vcmp.eq.s32.totalorder %v35, %v97
    %vm340 = vcmp.eq.s32.totalorder %v36, %v97
    %vm341 = vcmp.eq.s32.totalorder %v37, %v97
    %vm342 = vcmp.eq.s32.totalorder %v38, %v97
    %vm343 = vcmp.eq.s32.totalorder %v39, %v97
    %vm344 = vcmp.eq.s32.totalorder %v40, %v97
    %vm345 = vcmp.eq.s32.totalorder %v41, %v97
    %vm346 = vcmp.eq.s32.totalorder %v42, %v97
    %vm347 = vcmp.eq.s32.totalorder %v43, %v97
    %vm348 = vcmp.eq.s32.totalorder %v44, %v97
    %vm349 = vcmp.eq.s32.totalorder %v45, %v97
    %vm350 = vcmp.eq.s32.totalorder %v46, %v97
    %vm351 = vcmp.eq.s32.totalorder %v47, %v97
    %vm352 = vcmp.eq.s32.totalorder %v48, %v97
    %vm353 = vcmp.eq.s32.totalorder %v49, %v97
    %vm354 = vcmp.eq.s32.totalorder %v50, %v97
    %vm355 = vcmp.eq.s32.totalorder %v51, %v97
    %vm356 = vcmp.eq.s32.totalorder %v28, %v100
    %vm357 = vcmp.eq.s32.totalorder %v29, %v100
    %vm358 = vcmp.eq.s32.totalorder %v30, %v100
    %vm359 = vcmp.eq.s32.totalorder %v31, %v100
    %vm360 = vcmp.eq.s32.totalorder %v32, %v100
    %vm361 = vcmp.eq.s32.totalorder %v33, %v100
    %vm362 = vcmp.eq.s32.totalorder %v34, %v100
    %vm363 = vcmp.eq.s32.totalorder %v35, %v100
    %vm364 = vcmp.eq.s32.totalorder %v36, %v100
    %vm365 = vcmp.eq.s32.totalorder %v37, %v100
    %vm366 = vcmp.eq.s32.totalorder %v38, %v100
    %vm367 = vcmp.eq.s32.totalorder %v39, %v100
    %vm368 = vcmp.eq.s32.totalorder %v40, %v100
    %vm369 = vcmp.eq.s32.totalorder %v41, %v100
    %vm370 = vcmp.eq.s32.totalorder %v42, %v100
    %vm371 = vcmp.eq.s32.totalorder %v43, %v100
    %vm372 = vcmp.eq.s32.totalorder %v44, %v100
    %vm373 = vcmp.eq.s32.totalorder %v45, %v100
    %vm374 = vcmp.eq.s32.totalorder %v46, %v100
    %vm375 = vcmp.eq.s32.totalorder %v47, %v100
    %vm376 = vcmp.eq.s32.totalorder %v48, %v100
    %vm377 = vcmp.eq.s32.totalorder %v49, %v100
    %vm378 = vcmp.eq.s32.totalorder %v50, %v100
    %vm379 = vcmp.eq.s32.totalorder %v51, %v100
    %vm380 = vcmp.eq.s32.totalorder %v28, %v103
    %vm381 = vcmp.eq.s32.totalorder %v29, %v103
    %vm382 = vcmp.eq.s32.totalorder %v30, %v103
    %vm383 = vcmp.eq.s32.totalorder %v31, %v103
    %vm384 = vcmp.eq.s32.totalorder %v32, %v103
    %vm385 = vcmp.eq.s32.totalorder %v33, %v103
    %vm386 = vcmp.eq.s32.totalorder %v34, %v103
    %vm387 = vcmp.eq.s32.totalorder %v35, %v103
    %vm388 = vcmp.eq.s32.totalorder %v36, %v103
    %vm389 = vcmp.eq.s32.totalorder %v37, %v103
    %vm390 = vcmp.eq.s32.totalorder %v38, %v103
    %vm391 = vcmp.eq.s32.totalorder %v39, %v103
    %vm392 = vcmp.eq.s32.totalorder %v40, %v103
    %vm393 = vcmp.eq.s32.totalorder %v41, %v103
    %vm394 = vcmp.eq.s32.totalorder %v42, %v103
    %vm395 = vcmp.eq.s32.totalorder %v43, %v103
    %vm396 = vcmp.eq.s32.totalorder %v44, %v103
    %vm397 = vcmp.eq.s32.totalorder %v45, %v103
    %vm398 = vcmp.eq.s32.totalorder %v46, %v103
    %vm399 = vcmp.eq.s32.totalorder %v47, %v103
    %vm400 = vcmp.eq.s32.totalorder %v48, %v103
    %vm401 = vcmp.eq.s32.totalorder %v49, %v103
    %vm402 = vcmp.eq.s32.totalorder %v50, %v103
    %vm403 = vcmp.eq.s32.totalorder %v51, %v103
    %vm404 = vcmp.eq.s32.totalorder %v28, %v106
    %vm405 = vcmp.eq.s32.totalorder %v29, %v106
    %vm406 = vcmp.eq.s32.totalorder %v30, %v106
    %vm407 = vcmp.eq.s32.totalorder %v31, %v106
    %vm408 = vcmp.eq.s32.totalorder %v32, %v106
    %vm409 = vcmp.eq.s32.totalorder %v33, %v106
    %vm410 = vcmp.eq.s32.totalorder %v34, %v106
    %vm411 = vcmp.eq.s32.totalorder %v35, %v106
    %vm412 = vcmp.eq.s32.totalorder %v36, %v106
    %vm413 = vcmp.eq.s32.totalorder %v37, %v106
    %vm414 = vcmp.eq.s32.totalorder %v38, %v106
    %vm415 = vcmp.eq.s32.totalorder %v39, %v106
    %vm416 = vcmp.eq.s32.totalorder %v40, %v106
    %vm417 = vcmp.eq.s32.totalorder %v41, %v106
    %vm418 = vcmp.eq.s32.totalorder %v42, %v106
    %vm419 = vcmp.eq.s32.totalorder %v43, %v106
    %vm420 = vcmp.eq.s32.totalorder %v44, %v106
    %vm421 = vcmp.eq.s32.totalorder %v45, %v106
    %vm422 = vcmp.eq.s32.totalorder %v46, %v106
    %vm423 = vcmp.eq.s32.totalorder %v47, %v106
    %vm424 = vcmp.eq.s32.totalorder %v48, %v106
    %vm425 = vcmp.eq.s32.totalorder %v49, %v106
    %vm426 = vcmp.eq.s32.totalorder %v50, %v106
    %vm427 = vcmp.eq.s32.totalorder %v51, %v106
    %vm428 = vcmp.eq.s32.totalorder %v28, %v109
    %vm429 = vcmp.eq.s32.totalorder %v29, %v109
    %vm430 = vcmp.eq.s32.totalorder %v30, %v109
    %vm431 = vcmp.eq.s32.totalorder %v31, %v109
    %vm432 = vcmp.eq.s32.totalorder %v32, %v109
    %vm433 = vcmp.eq.s32.totalorder %v33, %v109
    %vm434 = vcmp.eq.s32.totalorder %v34, %v109
    %vm435 = vcmp.eq.s32.totalorder %v35, %v109
    %vm436 = vcmp.eq.s32.totalorder %v36, %v109
    %vm437 = vcmp.eq.s32.totalorder %v37, %v109
    %vm438 = vcmp.eq.s32.totalorder %v38, %v109
    %vm439 = vcmp.eq.s32.totalorder %v39, %v109
    %vm440 = vcmp.eq.s32.totalorder %v40, %v109
    %vm441 = vcmp.eq.s32.totalorder %v41, %v109
    %vm442 = vcmp.eq.s32.totalorder %v42, %v109
    %vm443 = vcmp.eq.s32.totalorder %v43, %v109
    %vm444 = vcmp.eq.s32.totalorder %v44, %v109
    %vm445 = vcmp.eq.s32.totalorder %v45, %v109
    %vm446 = vcmp.eq.s32.totalorder %v46, %v109
    %vm447 = vcmp.eq.s32.totalorder %v47, %v109
    %vm448 = vcmp.eq.s32.totalorder %v48, %v109
    %vm449 = vcmp.eq.s32.totalorder %v49, %v109
    %vm450 = vcmp.eq.s32.totalorder %v50, %v109
    %vm451 = vcmp.eq.s32.totalorder %v51, %v109
    %vm452 = vcmp.eq.s32.totalorder %v28, %v112
    %vm453 = vcmp.eq.s32.totalorder %v29, %v112
    %vm454 = vcmp.eq.s32.totalorder %v30, %v112
    %vm455 = vcmp.eq.s32.totalorder %v31, %v112
    %vm456 = vcmp.eq.s32.totalorder %v32, %v112
    %vm457 = vcmp.eq.s32.totalorder %v33, %v112
    %vm458 = vcmp.eq.s32.totalorder %v34, %v112
    %vm459 = vcmp.eq.s32.totalorder %v35, %v112
    %vm460 = vcmp.eq.s32.totalorder %v36, %v112
    %vm461 = vcmp.eq.s32.totalorder %v37, %v112
    %vm462 = vcmp.eq.s32.totalorder %v38, %v112
    %vm463 = vcmp.eq.s32.totalorder %v39, %v112
    %vm464 = vcmp.eq.s32.totalorder %v40, %v112
    %vm465 = vcmp.eq.s32.totalorder %v41, %v112
    %vm466 = vcmp.eq.s32.totalorder %v42, %v112
    %vm467 = vcmp.eq.s32.totalorder %v43, %v112
    %vm468 = vcmp.eq.s32.totalorder %v44, %v112
    %vm469 = vcmp.eq.s32.totalorder %v45, %v112
    %vm470 = vcmp.eq.s32.totalorder %v46, %v112
    %vm471 = vcmp.eq.s32.totalorder %v47, %v112
    %vm472 = vcmp.eq.s32.totalorder %v48, %v112
    %vm473 = vcmp.eq.s32.totalorder %v49, %v112
    %vm474 = vcmp.eq.s32.totalorder %v50, %v112
    %vm475 = vcmp.eq.s32.totalorder %v51, %v112
    %vm476 = vcmp.eq.s32.totalorder %v28, %v115
    %vm477 = vcmp.eq.s32.totalorder %v29, %v115
    %vm478 = vcmp.eq.s32.totalorder %v30, %v115
    %vm479 = vcmp.eq.s32.totalorder %v31, %v115
    %vm480 = vcmp.eq.s32.totalorder %v32, %v115
    %vm481 = vcmp.eq.s32.totalorder %v33, %v115
    %vm482 = vcmp.eq.s32.totalorder %v34, %v115
    %vm483 = vcmp.eq.s32.totalorder %v35, %v115
    %vm484 = vcmp.eq.s32.totalorder %v36, %v115
    %vm485 = vcmp.eq.s32.totalorder %v37, %v115
    %vm486 = vcmp.eq.s32.totalorder %v38, %v115
    %vm487 = vcmp.eq.s32.totalorder %v39, %v115
    %vm488 = vcmp.eq.s32.totalorder %v40, %v115
    %vm489 = vcmp.eq.s32.totalorder %v41, %v115
    %vm490 = vcmp.eq.s32.totalorder %v42, %v115
    %vm491 = vcmp.eq.s32.totalorder %v43, %v115
    %vm492 = vcmp.eq.s32.totalorder %v44, %v115
    %vm493 = vcmp.eq.s32.totalorder %v45, %v115
    %vm494 = vcmp.eq.s32.totalorder %v46, %v115
    %vm495 = vcmp.eq.s32.totalorder %v47, %v115
    %vm496 = vcmp.eq.s32.totalorder %v48, %v115
    %vm497 = vcmp.eq.s32.totalorder %v49, %v115
    %vm498 = vcmp.eq.s32.totalorder %v50, %v115
    %vm499 = vcmp.eq.s32.totalorder %v51, %v115
    %v500 = vsel %vm116, 1, 0
    %v501 = vsel %vm117, 1, 0
    %v502 = vsel %vm118, 1, 0
    %v503 = vsel %vm119, 1, 0
    %v504 = vsel %vm120, 1, 0
    %v505 = vsel %vm121, 1, 0
    %v506 = vsel %vm122, 1, 0
    %v507 = vsel %vm123, 1, 0
    %v508 = vsel %vm124, 1, 0
    %v509 = vsel %vm125, 1, 0
    %v510 = vsel %vm126, 1, 0
    %v511 = vsel %vm127, 1, 0
    %v512 = vsel %vm128, 1, 0
    %v513 = vsel %vm129, 1, 0
    %v514 = vsel %vm130, 1, 0
    %v515 = vsel %vm131, 1, 0
    %v516 = vsel %vm132, 1, 0
    %v517 = vsel %vm133, 1, 0
    %v518 = vsel %vm134, 1, 0
    %v519 = vsel %vm135, 1, 0
    %v520 = vsel %vm136, 1, 0
    %v521 = vsel %vm137, 1, 0
    %v522 = vsel %vm138, 1, 0
    %v523 = vsel %vm139, 1, 0
    %v524 = vsel %vm140, 1, 0
    %v525 = vsel %vm141, 1, 0
    %v526 = vsel %vm142, 1, 0
    %v527 = vsel %vm143, 1, 0
    %v528 = vsel %vm144, 1, 0
    %v529 = vsel %vm145, 1, 0
    %v530 = vsel %vm146, 1, 0
    %v531 = vsel %vm147, 1, 0
    %v532 = vsel %vm148, 1, 0
    %v533 = vsel %vm149, 1, 0
    %v534 = vsel %vm150, 1, 0
    %v535 = vsel %vm151, 1, 0
    %v536 = vsel %vm152, 1, 0
    %v537 = vsel %vm153, 1, 0
    %v538 = vsel %vm154, 1, 0
    %v539 = vsel %vm155, 1, 0
    %v540 = vsel %vm156, 1, 0
    %v541 = vsel %vm157, 1, 0
    %v542 = vsel %vm158, 1, 0
    %v543 = vsel %vm159, 1, 0
    %v544 = vsel %vm160, 1, 0
    %v545 = vsel %vm161, 1, 0
    %v546 = vsel %vm162, 1, 0
    %v547 = vsel %vm163, 1, 0
    %v548 = vsel %vm164, 1, 0
    %v549 = vsel %vm165, 1, 0
    %v550 = vsel %vm166, 1, 0
    %v551 = vsel %vm167, 1, 0
    %v552 = vsel %vm168, 1, 0
    %v553 = vsel %vm169, 1, 0
    %v554 = vsel %vm170, 1, 0
    %v555 = vsel %vm171, 1, 0
    %v556 = vsel %vm172, 1, 0
    %v557 = vsel %vm173, 1, 0
    %v558 = vsel %vm174, 1, 0
    %v559 = vsel %vm175, 1, 0
    %v560 = vsel %vm176, 1, 0
    %v561 = vsel %vm177, 1, 0
    %v562 = vsel %vm178, 1, 0
    %v563 = vsel %vm179, 1, 0
    %v564 = vsel %vm180, 1, 0
    %v565 = vsel %vm181, 1, 0
    %v566 = vsel %vm182, 1, 0
    %v567 = vsel %vm183, 1, 0
    %v568 = vsel %vm184, 1, 0
    %v569 = vsel %vm185, 1, 0
    %v570 = vsel %vm186, 1, 0
    %v571 = vsel %vm187, 1, 0
    %v572 = vsel %vm188, 1, 0
    %v573 = vsel %vm189, 1, 0
    %v574 = vsel %vm190, 1, 0
    %v575 = vsel %vm191, 1, 0
    %v576 = vsel %vm192, 1, 0
    %v577 = vsel %vm193, 1, 0
    %v578 = vsel %vm194, 1, 0
    %v579 = vsel %vm195, 1, 0
    %v580 = vsel %vm196, 1, 0
    %v581 = vsel %vm197, 1, 0
    %v582 = vsel %vm198, 1, 0
    %v583 = vsel %vm199, 1, 0
    %v584 = vsel %vm200, 1, 0
    %v585 = vsel %vm201, 1, 0
    %v586 = vsel %vm202, 1, 0
    %v587 = vsel %vm203, 1, 0
    %v588 = vsel %vm204, 1, 0
    %v589 = vsel %vm205, 1, 0
    %v590 = vsel %vm206, 1, 0
    %v591 = vsel %vm207, 1, 0
    %v592 = vsel %vm208, 1, 0
    %v593 = vsel %vm209, 1, 0
    %v594 = vsel %vm210, 1, 0
    %v595 = vsel %vm211, 1, 0
    %v596 = vsel %vm212, 1, 0
    %v597 = vsel %vm213, 1, 0
    %v598 = vsel %vm214, 1, 0
    %v599 = vsel %vm215, 1, 0
    %v600 = vsel %vm216, 1, 0
    %v601 = vsel %vm217, 1, 0
    %v602 = vsel %vm218, 1, 0
    %v603 = vsel %vm219, 1, 0
    %v604 = vsel %vm220, 1, 0
    %v605 = vsel %vm221, 1, 0
    %v606 = vsel %vm222, 1, 0
    %v607 = vsel %vm223, 1, 0
    %v608 = vsel %vm224, 1, 0
    %v609 = vsel %vm225, 1, 0
    %v610 = vsel %vm226, 1, 0
    %v611 = vsel %vm227, 1, 0
    %v612 = vsel %vm228, 1, 0
    %v613 = vsel %vm229, 1, 0
    %v614 = vsel %vm230, 1, 0
    %v615 = vsel %vm231, 1, 0
    %v616 = vsel %vm232, 1, 0
    %v617 = vsel %vm233, 1, 0
    %v618 = vsel %vm234, 1, 0
    %v619 = vsel %vm235, 1, 0
    %v620 = vsel %vm236, 1, 0
    %v621 = vsel %vm237, 1, 0
    %v622 = vsel %vm238, 1, 0
    %v623 = vsel %vm239, 1, 0
    %v624 = vsel %vm240, 1, 0
    %v625 = vsel %vm241, 1, 0
    %v626 = vsel %vm242, 1, 0
    %v627 = vsel %vm243, 1, 0
    %v628 = vsel %vm244, 1, 0
    %v629 = vsel %vm245, 1, 0
    %v630 = vsel %vm246, 1, 0
    %v631 = vsel %vm247, 1, 0
    %v632 = vsel %vm248, 1, 0
    %v633 = vsel %vm249, 1, 0
    %v634 = vsel %vm250, 1, 0
    %v635 = vsel %vm251, 1, 0
    %v636 = vsel %vm252, 1, 0
    %v637 = vsel %vm253, 1, 0
    %v638 = vsel %vm254, 1, 0
    %v639 = vsel %vm255, 1, 0
    %v640 = vsel %vm256, 1, 0
    %v641 = vsel %vm257, 1, 0
    %v642 = vsel %vm258, 1, 0
    %v643 = vsel %vm259, 1, 0
    %v644 = vsel %vm260, 1, 0
    %v645 = vsel %vm261, 1, 0
    %v646 = vsel %vm262, 1, 0
    %v647 = vsel %vm263, 1, 0
    %v648 = vsel %vm264, 1, 0
    %v649 = vsel %vm265, 1, 0
    %v650 = vsel %vm266, 1, 0
    %v651 = vsel %vm267, 1, 0
    %v652 = vsel %vm268, 1, 0
    %v653 = vsel %vm269, 1, 0
    %v654 = vsel %vm270, 1, 0
    %v655 = vsel %vm271, 1, 0
    %v656 = vsel %vm272, 1, 0
    %v657 = vsel %vm273, 1, 0
    %v658 = vsel %vm274, 1, 0
    %v659 = vsel %vm275, 1, 0
    %v660 = vsel %vm276, 1, 0
    %v661 = vsel %vm277, 1, 0
    %v662 = vsel %vm278, 1, 0
    %v663 = vsel %vm279, 1, 0
    %v664 = vsel %vm280, 1, 0
    %v665 = vsel %vm281, 1, 0
    %v666 = vsel %vm282, 1, 0
    %v667 = vsel %vm283, 1, 0
    %v668 = vsel %vm284, 1, 0
    %v669 = vsel %vm285, 1, 0
    %v670 = vsel %vm286, 1, 0
    %v671 = vsel %vm287, 1, 0
    %v672 = vsel %vm288, 1, 0
    %v673 = vsel %vm289, 1, 0
    %v674 = vsel %vm290, 1, 0
    %v675 = vsel %vm291, 1, 0
    %v676 = vsel %vm292, 1, 0
    %v677 = vsel %vm293, 1, 0
    %v678 = vsel %vm294, 1, 0
    %v679 = vsel %vm295, 1, 0
    %v680 = vsel %vm296, 1, 0
    %v681 = vsel %vm297, 1, 0
    %v682 = vsel %vm298, 1, 0
    %v683 = vsel %vm299, 1, 0
    %v684 = vsel %vm300, 1, 0
    %v685 = vsel %vm301, 1, 0
    %v686 = vsel %vm302, 1, 0
    %v687 = vsel %vm303, 1, 0
    %v688 = vsel %vm304, 1, 0
    %v689 = vsel %vm305, 1, 0
    %v690 = vsel %vm306, 1, 0
    %v691 = vsel %vm307, 1, 0
    %v692 = vsel %vm308, 1, 0
    %v693 = vsel %vm309, 1, 0
    %v694 = vsel %vm310, 1, 0
    %v695 = vsel %vm311, 1, 0
    %v696 = vsel %vm312, 1, 0
    %v697 = vsel %vm313, 1, 0
    %v698 = vsel %vm314, 1, 0
    %v699 = vsel %vm315, 1, 0
    %v700 = vsel %vm316, 1, 0
    %v701 = vsel %vm317, 1, 0
    %v702 = vsel %vm318, 1, 0
    %v703 = vsel %vm319, 1, 0
    %v704 = vsel %vm320, 1, 0
    %v705 = vsel %vm321, 1, 0
    %v706 = vsel %vm322, 1, 0
    %v707 = vsel %vm323, 1, 0
    %v708 = vsel %vm324, 1, 0
    %v709 = vsel %vm325, 1, 0
    %v710 = vsel %vm326, 1, 0
    %v711 = vsel %vm327, 1, 0
    %v712 = vsel %vm328, 1, 0
    %v713 = vsel %vm329, 1, 0
    %v714 = vsel %vm330, 1, 0
    %v715 = vsel %vm331, 1, 0
    %v716 = vsel %vm332, 1, 0
    %v717 = vsel %vm333, 1, 0
    %v718 = vsel %vm334, 1, 0
    %v719 = vsel %vm335, 1, 0
    %v720 = vsel %vm336, 1, 0
    %v721 = vsel %vm337, 1, 0
    %v722 = vsel %vm338, 1, 0
    %v723 = vsel %vm339, 1, 0
    %v724 = vsel %vm340, 1, 0
    %v725 = vsel %vm341, 1, 0
    %v726 = vsel %vm342, 1, 0
    %v727 = vsel %vm343, 1, 0
    %v728 = vsel %vm344, 1, 0
    %v729 = vsel %vm345, 1, 0
    %v730 = vsel %vm346, 1, 0
    %v731 = vsel %vm347, 1, 0
    %v732 = vsel %vm348, 1, 0
    %v733 = vsel %vm349, 1, 0
    %v734 = vsel %vm350, 1, 0
    %v735 = vsel %vm351, 1, 0
    %v736 = vsel %vm352, 1, 0
    %v737 = vsel %vm353, 1, 0
    %v738 = vsel %vm354, 1, 0
    %v739 = vsel %vm355, 1, 0
    %v740 = vsel %vm356, 1, 0
    %v741 = vsel %vm357, 1, 0
    %v742 = vsel %vm358, 1, 0
    %v743 = vsel %vm359, 1, 0
    %v744 = vsel %vm360, 1, 0
    %v745 = vsel %vm361, 1, 0
    %v746 = vsel %vm362, 1, 0
    %v747 = vsel %vm363, 1, 0
    %v748 = vsel %vm364, 1, 0
    %v749 = vsel %vm365, 1, 0
    %v750 = vsel %vm366, 1, 0
    %v751 = vsel %vm367, 1, 0
    %v752 = vsel %vm368, 1, 0
    %v753 = vsel %vm369, 1, 0
    %v754 = vsel %vm370, 1, 0
    %v755 = vsel %vm371, 1, 0
    %v756 = vsel %vm372, 1, 0
    %v757 = vsel %vm373, 1, 0
    %v758 = vsel %vm374, 1, 0
    %v759 = vsel %vm375, 1, 0
    %v760 = vsel %vm376, 1, 0
    %v761 = vsel %vm377, 1, 0
    %v762 = vsel %vm378, 1, 0
    %v763 = vsel %vm379, 1, 0
    %v764 = vsel %vm380, 1, 0
    %v765 = vsel %vm381, 1, 0
    %v766 = vsel %vm382, 1, 0
    %v767 = vsel %vm383, 1, 0
    %v768 = vsel %vm384, 1, 0
    %v769 = vsel %vm385, 1, 0
    %v770 = vsel %vm386, 1, 0
    %v771 = vsel %vm387, 1, 0
    %v772 = vsel %vm388, 1, 0
    %v773 = vsel %vm389, 1, 0
    %v774 = vsel %vm390, 1, 0
    %v775 = vsel %vm391, 1, 0
    %v776 = vsel %vm392, 1, 0
    %v777 = vsel %vm393, 1, 0
    %v778 = vsel %vm394, 1, 0
    %v779 = vsel %vm395, 1, 0
    %v780 = vsel %vm396, 1, 0
    %v781 = vsel %vm397, 1, 0
    %v782 = vsel %vm398, 1, 0
    %v783 = vsel %vm399, 1, 0
    %v784 = vsel %vm400, 1, 0
    %v785 = vsel %vm401, 1, 0
    %v786 = vsel %vm402, 1, 0
    %v787 = vsel %vm403, 1, 0
    %v788 = vsel %vm404, 1, 0
    %v789 = vsel %vm405, 1, 0
    %v790 = vsel %vm406, 1, 0
    %v791 = vsel %vm407, 1, 0
    %v792 = vsel %vm408, 1, 0
    %v793 = vsel %vm409, 1, 0
    %v794 = vsel %vm410, 1, 0
    %v795 = vsel %vm411, 1, 0
    %v796 = vsel %vm412, 1, 0
    %v797 = vsel %vm413, 1, 0
    %v798 = vsel %vm414, 1, 0
    %v799 = vsel %vm415, 1, 0
    %v800 = vsel %vm416, 1, 0
    %v801 = vsel %vm417, 1, 0
    %v802 = vsel %vm418, 1, 0
    %v803 = vsel %vm419, 1, 0
    %v804 = vsel %vm420, 1, 0
    %v805 = vsel %vm421, 1, 0
    %v806 = vsel %vm422, 1, 0
    %v807 = vsel %vm423, 1, 0
    %v808 = vsel %vm424, 1, 0
    %v809 = vsel %vm425, 1, 0
    %v810 = vsel %vm426, 1, 0
    %v811 = vsel %vm427, 1, 0
    %v812 = vsel %vm428, 1, 0
    %v813 = vsel %vm429, 1, 0
    %v814 = vsel %vm430, 1, 0
    %v815 = vsel %vm431, 1, 0
    %v816 = vsel %vm432, 1, 0
    %v817 = vsel %vm433, 1, 0
    %v818 = vsel %vm434, 1, 0
    %v819 = vsel %vm435, 1, 0
    %v820 = vsel %vm436, 1, 0
    %v821 = vsel %vm437, 1, 0
    %v822 = vsel %vm438, 1, 0
    %v823 = vsel %vm439, 1, 0
    %v824 = vsel %vm440, 1, 0
    %v825 = vsel %vm441, 1, 0
    %v826 = vsel %vm442, 1, 0
    %v827 = vsel %vm443, 1, 0
    %v828 = vsel %vm444, 1, 0
    %v829 = vsel %vm445, 1, 0
    %v830 = vsel %vm446, 1, 0
    %v831 = vsel %vm447, 1, 0
    %v832 = vsel %vm448, 1, 0
    %v833 = vsel %vm449, 1, 0
    %v834 = vsel %vm450, 1, 0
    %v835 = vsel %vm451, 1, 0
    %v836 = vsel %vm452, 1, 0
    %v837 = vsel %vm453, 1, 0
    %v838 = vsel %vm454, 1, 0
    %v839 = vsel %vm455, 1, 0
    %v840 = vsel %vm456, 1, 0
    %v841 = vsel %vm457, 1, 0
    %v842 = vsel %vm458, 1, 0
    %v843 = vsel %vm459, 1, 0
    %v844 = vsel %vm460, 1, 0
    %v845 = vsel %vm461, 1, 0
    %v846 = vsel %vm462, 1, 0
    %v847 = vsel %vm463, 1, 0
    %v848 = vsel %vm464, 1, 0
    %v849 = vsel %vm465, 1, 0
    %v850 = vsel %vm466, 1, 0
    %v851 = vsel %vm467, 1, 0
    %v852 = vsel %vm468, 1, 0
    %v853 = vsel %vm469, 1, 0
    %v854 = vsel %vm470, 1, 0
    %v855 = vsel %vm471, 1, 0
    %v856 = vsel %vm472, 1, 0
    %v857 = vsel %vm473, 1, 0
    %v858 = vsel %vm474, 1, 0
    %v859 = vsel %vm475, 1, 0
    %v860 = vsel %vm476, 1, 0
    %v861 = vsel %vm477, 1, 0
    %v862 = vsel %vm478, 1, 0
    %v863 = vsel %vm479, 1, 0
    %v864 = vsel %vm480, 1, 0
    %v865 = vsel %vm481, 1, 0
    %v866 = vsel %vm482, 1, 0
    %v867 = vsel %vm483, 1, 0
    %v868 = vsel %vm484, 1, 0
    %v869 = vsel %vm485, 1, 0
    %v870 = vsel %vm486, 1, 0
    %v871 = vsel %vm487, 1, 0
    %v872 = vsel %vm488, 1, 0
    %v873 = vsel %vm489, 1, 0
    %v874 = vsel %vm490, 1, 0
    %v875 = vsel %vm491, 1, 0
    %v876 = vsel %vm492, 1, 0
    %v877 = vsel %vm493, 1, 0
    %v878 = vsel %vm494, 1, 0
    %v879 = vsel %vm495, 1, 0
    %v880 = vsel %vm496, 1, 0
    %v881 = vsel %vm497, 1, 0
    %v882 = vsel %vm498, 1, 0
    %v883 = vsel %vm499, 1, 0
    %v884 = vcvt.s32.f32 %v500
    %v885 = vcvt.s32.f32 %v501
    %v886 = vcvt.s32.f32 %v502
    %v887 = vcvt.s32.f32 %v503
    %v888 = vcvt.s32.f32 %v504
    %v889 = vcvt.s32.f32 %v505
    %v890 = vcvt.s32.f32 %v506
    %v891 = vcvt.s32.f32 %v507
    %v892 = vcvt.s32.f32 %v508
    %v893 = vcvt.s32.f32 %v509
    %v894 = vcvt.s32.f32 %v510
    %v895 = vcvt.s32.f32 %v511
    %v896 = vcvt.s32.f32 %v512
    %v897 = vcvt.s32.f32 %v513
    %v898 = vcvt.s32.f32 %v514
    %v899 = vcvt.s32.f32 %v515
    %v900 = vcvt.s32.f32 %v516
    %v901 = vcvt.s32.f32 %v517
    %v902 = vcvt.s32.f32 %v518
    %v903 = vcvt.s32.f32 %v519
    %v904 = vcvt.s32.f32 %v520
    %v905 = vcvt.s32.f32 %v521
    %v906 = vcvt.s32.f32 %v522
    %v907 = vcvt.s32.f32 %v523
    %v908 = vcvt.s32.f32 %v524
    %v909 = vcvt.s32.f32 %v525
    %v910 = vcvt.s32.f32 %v526
    %v911 = vcvt.s32.f32 %v527
    %v912 = vcvt.s32.f32 %v528
    %v913 = vcvt.s32.f32 %v529
    %v914 = vcvt.s32.f32 %v530
    %v915 = vcvt.s32.f32 %v531
    %v916 = vcvt.s32.f32 %v532
    %v917 = vcvt.s32.f32 %v533
    %v918 = vcvt.s32.f32 %v534
    %v919 = vcvt.s32.f32 %v535
    %v920 = vcvt.s32.f32 %v536
    %v921 = vcvt.s32.f32 %v537
    %v922 = vcvt.s32.f32 %v538
    %v923 = vcvt.s32.f32 %v539
    %v924 = vcvt.s32.f32 %v540
    %v925 = vcvt.s32.f32 %v541
    %v926 = vcvt.s32.f32 %v542
    %v927 = vcvt.s32.f32 %v543
    %v928 = vcvt.s32.f32 %v544
    %v929 = vcvt.s32.f32 %v545
    %v930 = vcvt.s32.f32 %v546
    %v931 = vcvt.s32.f32 %v547
    %v932 = vcvt.s32.f32 %v548
    %v933 = vcvt.s32.f32 %v549
    %v934 = vcvt.s32.f32 %v550
    %v935 = vcvt.s32.f32 %v551
    %v936 = vcvt.s32.f32 %v552
    %v937 = vcvt.s32.f32 %v553
    %v938 = vcvt.s32.f32 %v554
    %v939 = vcvt.s32.f32 %v555
    %v940 = vcvt.s32.f32 %v556
    %v941 = vcvt.s32.f32 %v557
    %v942 = vcvt.s32.f32 %v558
    %v943 = vcvt.s32.f32 %v559
    %v944 = vcvt.s32.f32 %v560
    %v945 = vcvt.s32.f32 %v561
    %v946 = vcvt.s32.f32 %v562
    %v947 = vcvt.s32.f32 %v563
    %v948 = vcvt.s32.f32 %v564
    %v949 = vcvt.s32.f32 %v565
    %v950 = vcvt.s32.f32 %v566
    %v951 = vcvt.s32.f32 %v567
    %v952 = vcvt.s32.f32 %v568
    %v953 = vcvt.s32.f32 %v569
    %v954 = vcvt.s32.f32 %v570
    %v955 = vcvt.s32.f32 %v571
    %v956 = vcvt.s32.f32 %v572
    %v957 = vcvt.s32.f32 %v573
    %v958 = vcvt.s32.f32 %v574
    %v959 = vcvt.s32.f32 %v575
    %v960 = vcvt.s32.f32 %v576
    %v961 = vcvt.s32.f32 %v577
    %v962 = vcvt.s32.f32 %v578
    %v963 = vcvt.s32.f32 %v579
    %v964 = vcvt.s32.f32 %v580
    %v965 = vcvt.s32.f32 %v581
    %v966 = vcvt.s32.f32 %v582
    %v967 = vcvt.s32.f32 %v583
    %v968 = vcvt.s32.f32 %v584
    %v969 = vcvt.s32.f32 %v585
    %v970 = vcvt.s32.f32 %v586
    %v971 = vcvt.s32.f32 %v587
    %v972 = vcvt.s32.f32 %v588
    %v973 = vcvt.s32.f32 %v589
    %v974 = vcvt.s32.f32 %v590
    %v975 = vcvt.s32.f32 %v591
    %v976 = vcvt.s32.f32 %v592
    %v977 = vcvt.s32.f32 %v593
    %v978 = vcvt.s32.f32 %v594
    %v979 = vcvt.s32.f32 %v595
    %v980 = vcvt.s32.f32 %v596
    %v981 = vcvt.s32.f32 %v597
    %v982 = vcvt.s32.f32 %v598
    %v983 = vcvt.s32.f32 %v599
    %v984 = vcvt.s32.f32 %v600
    %v985 = vcvt.s32.f32 %v601
    %v986 = vcvt.s32.f32 %v602
    %v987 = vcvt.s32.f32 %v603
    %v988 = vcvt.s32.f32 %v604
    %v989 = vcvt.s32.f32 %v605
    %v990 = vcvt.s32.f32 %v606
    %v991 = vcvt.s32.f32 %v607
    %v992 = vcvt.s32.f32 %v608
    %v993 = vcvt.s32.f32 %v609
    %v994 = vcvt.s32.f32 %v610
    %v995 = vcvt.s32.f32 %v611
    %v996 = vcvt.s32.f32 %v612
    %v997 = vcvt.s32.f32 %v613
    %v998 = vcvt.s32.f32 %v614
    %v999 = vcvt.s32.f32 %v615
    %v1000 = vcvt.s32.f32 %v616
    %v1001 = vcvt.s32.f32 %v617
    %v1002 = vcvt.s32.f32 %v618
    %v1003 = vcvt.s32.f32 %v619
    %v1004 = vcvt.s32.f32 %v620
    %v1005 = vcvt.s32.f32 %v621
    %v1006 = vcvt.s32.f32 %v622
    %v1007 = vcvt.s32.f32 %v623
    %v1008 = vcvt.s32.f32 %v624
    %v1009 = vcvt.s32.f32 %v625
    %v1010 = vcvt.s32.f32 %v626
    %v1011 = vcvt.s32.f32 %v627
    %v1012 = vcvt.s32.f32 %v628
    %v1013 = vcvt.s32.f32 %v629
    %v1014 = vcvt.s32.f32 %v630
    %v1015 = vcvt.s32.f32 %v631
    %v1016 = vcvt.s32.f32 %v632
    %v1017 = vcvt.s32.f32 %v633
    %v1018 = vcvt.s32.f32 %v634
    %v1019 = vcvt.s32.f32 %v635
    %v1020 = vcvt.s32.f32 %v636
    %v1021 = vcvt.s32.f32 %v637
    %v1022 = vcvt.s32.f32 %v638
    %v1023 = vcvt.s32.f32 %v639
    %v1024 = vcvt.s32.f32 %v640
    %v1025 = vcvt.s32.f32 %v641
    %v1026 = vcvt.s32.f32 %v642
    %v1027 = vcvt.s32.f32 %v643
    %v1028 = vcvt.s32.f32 %v644
    %v1029 = vcvt.s32.f32 %v645
    %v1030 = vcvt.s32.f32 %v646
    %v1031 = vcvt.s32.f32 %v647
    %v1032 = vcvt.s32.f32 %v648
    %v1033 = vcvt.s32.f32 %v649
    %v1034 = vcvt.s32.f32 %v650
    %v1035 = vcvt.s32.f32 %v651
    %v1036 = vcvt.s32.f32 %v652
    %v1037 = vcvt.s32.f32 %v653
    %v1038 = vcvt.s32.f32 %v654
    %v1039 = vcvt.s32.f32 %v655
    %v1040 = vcvt.s32.f32 %v656
    %v1041 = vcvt.s32.f32 %v657
    %v1042 = vcvt.s32.f32 %v658
    %v1043 = vcvt.s32.f32 %v659
    %v1044 = vcvt.s32.f32 %v660
    %v1045 = vcvt.s32.f32 %v661
    %v1046 = vcvt.s32.f32 %v662
    %v1047 = vcvt.s32.f32 %v663
    %v1048 = vcvt.s32.f32 %v664
    %v1049 = vcvt.s32.f32 %v665
    %v1050 = vcvt.s32.f32 %v666
    %v1051 = vcvt.s32.f32 %v667
    %v1052 = vcvt.s32.f32 %v668
    %v1053 = vcvt.s32.f32 %v669
    %v1054 = vcvt.s32.f32 %v670
    %v1055 = vcvt.s32.f32 %v671
    %v1056 = vcvt.s32.f32 %v672
    %v1057 = vcvt.s32.f32 %v673
    %v1058 = vcvt.s32.f32 %v674
    %v1059 = vcvt.s32.f32 %v675
    %v1060 = vcvt.s32.f32 %v676
    %v1061 = vcvt.s32.f32 %v677
    %v1062 = vcvt.s32.f32 %v678
    %v1063 = vcvt.s32.f32 %v679
    %v1064 = vcvt.s32.f32 %v680
    %v1065 = vcvt.s32.f32 %v681
    %v1066 = vcvt.s32.f32 %v682
    %v1067 = vcvt.s32.f32 %v683
    %v1068 = vcvt.s32.f32 %v684
    %v1069 = vcvt.s32.f32 %v685
    %v1070 = vcvt.s32.f32 %v686
    %v1071 = vcvt.s32.f32 %v687
    %v1072 = vcvt.s32.f32 %v688
    %v1073 = vcvt.s32.f32 %v689
    %v1074 = vcvt.s32.f32 %v690
    %v1075 = vcvt.s32.f32 %v691
    %v1076 = vcvt.s32.f32 %v692
    %v1077 = vcvt.s32.f32 %v693
    %v1078 = vcvt.s32.f32 %v694
    %v1079 = vcvt.s32.f32 %v695
    %v1080 = vcvt.s32.f32 %v696
    %v1081 = vcvt.s32.f32 %v697
    %v1082 = vcvt.s32.f32 %v698
    %v1083 = vcvt.s32.f32 %v699
    %v1084 = vcvt.s32.f32 %v700
    %v1085 = vcvt.s32.f32 %v701
    %v1086 = vcvt.s32.f32 %v702
    %v1087 = vcvt.s32.f32 %v703
    %v1088 = vcvt.s32.f32 %v704
    %v1089 = vcvt.s32.f32 %v705
    %v1090 = vcvt.s32.f32 %v706
    %v1091 = vcvt.s32.f32 %v707
    %v1092 = vcvt.s32.f32 %v708
    %v1093 = vcvt.s32.f32 %v709
    %v1094 = vcvt.s32.f32 %v710
    %v1095 = vcvt.s32.f32 %v711
    %v1096 = vcvt.s32.f32 %v712
    %v1097 = vcvt.s32.f32 %v713
    %v1098 = vcvt.s32.f32 %v714
    %v1099 = vcvt.s32.f32 %v715
    %v1100 = vcvt.s32.f32 %v716
    %v1101 = vcvt.s32.f32 %v717
    %v1102 = vcvt.s32.f32 %v718
    %v1103 = vcvt.s32.f32 %v719
    %v1104 = vcvt.s32.f32 %v720
    %v1105 = vcvt.s32.f32 %v721
    %v1106 = vcvt.s32.f32 %v722
    %v1107 = vcvt.s32.f32 %v723
    %v1108 = vcvt.s32.f32 %v724
    %v1109 = vcvt.s32.f32 %v725
    %v1110 = vcvt.s32.f32 %v726
    %v1111 = vcvt.s32.f32 %v727
    %v1112 = vcvt.s32.f32 %v728
    %v1113 = vcvt.s32.f32 %v729
    %v1114 = vcvt.s32.f32 %v730
    %v1115 = vcvt.s32.f32 %v731
    %v1116 = vcvt.s32.f32 %v732
    %v1117 = vcvt.s32.f32 %v733
    %v1118 = vcvt.s32.f32 %v734
    %v1119 = vcvt.s32.f32 %v735
    %v1120 = vcvt.s32.f32 %v736
    %v1121 = vcvt.s32.f32 %v737
    %v1122 = vcvt.s32.f32 %v738
    %v1123 = vcvt.s32.f32 %v739
    %v1124 = vcvt.s32.f32 %v740
    %v1125 = vcvt.s32.f32 %v741
    %v1126 = vcvt.s32.f32 %v742
    %v1127 = vcvt.s32.f32 %v743
    %v1128 = vcvt.s32.f32 %v744
    %v1129 = vcvt.s32.f32 %v745
    %v1130 = vcvt.s32.f32 %v746
    %v1131 = vcvt.s32.f32 %v747
    %v1132 = vcvt.s32.f32 %v748
    %v1133 = vcvt.s32.f32 %v749
    %v1134 = vcvt.s32.f32 %v750
    %v1135 = vcvt.s32.f32 %v751
    %v1136 = vcvt.s32.f32 %v752
    %v1137 = vcvt.s32.f32 %v753
    %v1138 = vcvt.s32.f32 %v754
    %v1139 = vcvt.s32.f32 %v755
    %v1140 = vcvt.s32.f32 %v756
    %v1141 = vcvt.s32.f32 %v757
    %v1142 = vcvt.s32.f32 %v758
    %v1143 = vcvt.s32.f32 %v759
    %v1144 = vcvt.s32.f32 %v760
    %v1145 = vcvt.s32.f32 %v761
    %v1146 = vcvt.s32.f32 %v762
    %v1147 = vcvt.s32.f32 %v763
    %v1148 = vcvt.s32.f32 %v764
    %v1149 = vcvt.s32.f32 %v765
    %v1150 = vcvt.s32.f32 %v766
    %v1151 = vcvt.s32.f32 %v767
    %v1152 = vcvt.s32.f32 %v768
    %v1153 = vcvt.s32.f32 %v769
    %v1154 = vcvt.s32.f32 %v770
    %v1155 = vcvt.s32.f32 %v771
    %v1156 = vcvt.s32.f32 %v772
    %v1157 = vcvt.s32.f32 %v773
    %v1158 = vcvt.s32.f32 %v774
    %v1159 = vcvt.s32.f32 %v775
    %v1160 = vcvt.s32.f32 %v776
    %v1161 = vcvt.s32.f32 %v777
    %v1162 = vcvt.s32.f32 %v778
    %v1163 = vcvt.s32.f32 %v779
    %v1164 = vcvt.s32.f32 %v780
    %v1165 = vcvt.s32.f32 %v781
    %v1166 = vcvt.s32.f32 %v782
    %v1167 = vcvt.s32.f32 %v783
    %v1168 = vcvt.s32.f32 %v784
    %v1169 = vcvt.s32.f32 %v785
    %v1170 = vcvt.s32.f32 %v786
    %v1171 = vcvt.s32.f32 %v787
    %v1172 = vcvt.s32.f32 %v788
    %v1173 = vcvt.s32.f32 %v789
    %v1174 = vcvt.s32.f32 %v790
    %v1175 = vcvt.s32.f32 %v791
    %v1176 = vcvt.s32.f32 %v792
    %v1177 = vcvt.s32.f32 %v793
    %v1178 = vcvt.s32.f32 %v794
    %v1179 = vcvt.s32.f32 %v795
    %v1180 = vcvt.s32.f32 %v796
    %v1181 = vcvt.s32.f32 %v797
    %v1182 = vcvt.s32.f32 %v798
    %v1183 = vcvt.s32.f32 %v799
    %v1184 = vcvt.s32.f32 %v800
    %v1185 = vcvt.s32.f32 %v801
    %v1186 = vcvt.s32.f32 %v802
    %v1187 = vcvt.s32.f32 %v803
    %v1188 = vcvt.s32.f32 %v804
    %v1189 = vcvt.s32.f32 %v805
    %v1190 = vcvt.s32.f32 %v806
    %v1191 = vcvt.s32.f32 %v807
    %v1192 = vcvt.s32.f32 %v808
    %v1193 = vcvt.s32.f32 %v809
    %v1194 = vcvt.s32.f32 %v810
    %v1195 = vcvt.s32.f32 %v811
    %v1196 = vcvt.s32.f32 %v812
    %v1197 = vcvt.s32.f32 %v813
    %v1198 = vcvt.s32.f32 %v814
    %v1199 = vcvt.s32.f32 %v815
    %v1200 = vcvt.s32.f32 %v816
    %v1201 = vcvt.s32.f32 %v817
    %v1202 = vcvt.s32.f32 %v818
    %v1203 = vcvt.s32.f32 %v819
    %v1204 = vcvt.s32.f32 %v820
    %v1205 = vcvt.s32.f32 %v821
    %v1206 = vcvt.s32.f32 %v822
    %v1207 = vcvt.s32.f32 %v823
    %v1208 = vcvt.s32.f32 %v824
    %v1209 = vcvt.s32.f32 %v825
    %v1210 = vcvt.s32.f32 %v826
    %v1211 = vcvt.s32.f32 %v827
    %v1212 = vcvt.s32.f32 %v828
    %v1213 = vcvt.s32.f32 %v829
    %v1214 = vcvt.s32.f32 %v830
    %v1215 = vcvt.s32.f32 %v831
    %v1216 = vcvt.s32.f32 %v832
    %v1217 = vcvt.s32.f32 %v833
    %v1218 = vcvt.s32.f32 %v834
    %v1219 = vcvt.s32.f32 %v835
    %v1220 = vcvt.s32.f32 %v836
    %v1221 = vcvt.s32.f32 %v837
    %v1222 = vcvt.s32.f32 %v838
    %v1223 = vcvt.s32.f32 %v839
    %v1224 = vcvt.s32.f32 %v840
    %v1225 = vcvt.s32.f32 %v841
    %v1226 = vcvt.s32.f32 %v842
    %v1227 = vcvt.s32.f32 %v843
    %v1228 = vcvt.s32.f32 %v844
    %v1229 = vcvt.s32.f32 %v845
    %v1230 = vcvt.s32.f32 %v846
    %v1231 = vcvt.s32.f32 %v847
    %v1232 = vcvt.s32.f32 %v848
    %v1233 = vcvt.s32.f32 %v849
    %v1234 = vcvt.s32.f32 %v850
    %v1235 = vcvt.s32.f32 %v851
    %v1236 = vcvt.s32.f32 %v852
    %v1237 = vcvt.s32.f32 %v853
    %v1238 = vcvt.s32.f32 %v854
    %v1239 = vcvt.s32.f32 %v855
    %v1240 = vcvt.s32.f32 %v856
    %v1241 = vcvt.s32.f32 %v857
    %v1242 = vcvt.s32.f32 %v858
    %v1243 = vcvt.s32.f32 %v859
    %v1244 = vcvt.s32.f32 %v860
    %v1245 = vcvt.s32.f32 %v861
    %v1246 = vcvt.s32.f32 %v862
    %v1247 = vcvt.s32.f32 %v863
    %v1248 = vcvt.s32.f32 %v864
    %v1249 = vcvt.s32.f32 %v865
    %v1250 = vcvt.s32.f32 %v866
    %v1251 = vcvt.s32.f32 %v867
    %v1252 = vcvt.s32.f32 %v868
    %v1253 = vcvt.s32.f32 %v869
    %v1254 = vcvt.s32.f32 %v870
    %v1255 = vcvt.s32.f32 %v871
    %v1256 = vcvt.s32.f32 %v872
    %v1257 = vcvt.s32.f32 %v873
    %v1258 = vcvt.s32.f32 %v874
    %v1259 = vcvt.s32.f32 %v875
    %v1260 = vcvt.s32.f32 %v876
    %v1261 = vcvt.s32.f32 %v877
    %v1262 = vcvt.s32.f32 %v878
    %v1263 = vcvt.s32.f32 %v879
    %v1264 = vcvt.s32.f32 %v880
    %v1265 = vcvt.s32.f32 %v881
    %v1266 = vcvt.s32.f32 %v882
    %v1267 = vcvt.s32.f32 %v883
    %v1268 = vpack.c.bf16 %v908, %v884
    %v1269 = vpack.c.bf16 %v909, %v885
    %v1270 = vpack.c.bf16 %v910, %v886
    %v1271 = vpack.c.bf16 %v911, %v887
    %v1272 = vpack.c.bf16 %v912, %v888
    %v1273 = vpack.c.bf16 %v913, %v889
    %v1274 = vpack.c.bf16 %v914, %v890
    %v1275 = vpack.c.bf16 %v915, %v891
    %v1276 = vpack.c.bf16 %v916, %v892
    %v1277 = vpack.c.bf16 %v917, %v893
    %v1278 = vpack.c.bf16 %v918, %v894
    %v1279 = vpack.c.bf16 %v919, %v895
    %v1280 = vpack.c.bf16 %v920, %v896
    %v1281 = vpack.c.bf16 %v921, %v897
    %v1282 = vpack.c.bf16 %v922, %v898
    %v1283 = vpack.c.bf16 %v923, %v899
    %v1284 = vpack.c.bf16 %v924, %v900
    %v1285 = vpack.c.bf16 %v925, %v901
    %v1286 = vpack.c.bf16 %v926, %v902
    %v1287 = vpack.c.bf16 %v927, %v903
    %v1288 = vpack.c.bf16 %v928, %v904
    %v1289 = vpack.c.bf16 %v929, %v905
    %v1290 = vpack.c.bf16 %v930, %v906
    %v1291 = vpack.c.bf16 %v931, %v907
    %v1292 = vpack.c.bf16 %v956, %v932
    %v1293 = vpack.c.bf16 %v957, %v933
    %v1294 = vpack.c.bf16 %v958, %v934
    %v1295 = vpack.c.bf16 %v959, %v935
    %v1296 = vpack.c.bf16 %v960, %v936
    %v1297 = vpack.c.bf16 %v961, %v937
    %v1298 = vpack.c.bf16 %v962, %v938
    %v1299 = vpack.c.bf16 %v963, %v939
    %v1300 = vpack.c.bf16 %v964, %v940
    %v1301 = vpack.c.bf16 %v965, %v941
    %v1302 = vpack.c.bf16 %v966, %v942
    %v1303 = vpack.c.bf16 %v967, %v943
    %v1304 = vpack.c.bf16 %v968, %v944
    %v1305 = vpack.c.bf16 %v969, %v945
    %v1306 = vpack.c.bf16 %v970, %v946
    %v1307 = vpack.c.bf16 %v971, %v947
    %v1308 = vpack.c.bf16 %v972, %v948
    %v1309 = vpack.c.bf16 %v973, %v949
    %v1310 = vpack.c.bf16 %v974, %v950
    %v1311 = vpack.c.bf16 %v975, %v951
    %v1312 = vpack.c.bf16 %v976, %v952
    %v1313 = vpack.c.bf16 %v977, %v953
    %v1314 = vpack.c.bf16 %v978, %v954
    %v1315 = vpack.c.bf16 %v979, %v955
    %v1316 = vpack.c.bf16 %v1004, %v980
    %v1317 = vpack.c.bf16 %v1005, %v981
    %v1318 = vpack.c.bf16 %v1006, %v982
    %v1319 = vpack.c.bf16 %v1007, %v983
    %v1320 = vpack.c.bf16 %v1008, %v984
    %v1321 = vpack.c.bf16 %v1009, %v985
    %v1322 = vpack.c.bf16 %v1010, %v986
    %v1323 = vpack.c.bf16 %v1011, %v987
    %v1324 = vpack.c.bf16 %v1012, %v988
    %v1325 = vpack.c.bf16 %v1013, %v989
    %v1326 = vpack.c.bf16 %v1014, %v990
    %v1327 = vpack.c.bf16 %v1015, %v991
    %v1328 = vpack.c.bf16 %v1016, %v992
    %v1329 = vpack.c.bf16 %v1017, %v993
    %v1330 = vpack.c.bf16 %v1018, %v994
    %v1331 = vpack.c.bf16 %v1019, %v995
    %v1332 = vpack.c.bf16 %v1020, %v996
    %v1333 = vpack.c.bf16 %v1021, %v997
    %v1334 = vpack.c.bf16 %v1022, %v998
    %v1335 = vpack.c.bf16 %v1023, %v999
    %v1336 = vpack.c.bf16 %v1024, %v1000
    %v1337 = vpack.c.bf16 %v1025, %v1001
    %v1338 = vpack.c.bf16 %v1026, %v1002
    %v1339 = vpack.c.bf16 %v1027, %v1003
    %v1340 = vpack.c.bf16 %v1052, %v1028
    %v1341 = vpack.c.bf16 %v1053, %v1029
    %v1342 = vpack.c.bf16 %v1054, %v1030
    %v1343 = vpack.c.bf16 %v1055, %v1031
    %v1344 = vpack.c.bf16 %v1056, %v1032
    %v1345 = vpack.c.bf16 %v1057, %v1033
    %v1346 = vpack.c.bf16 %v1058, %v1034
    %v1347 = vpack.c.bf16 %v1059, %v1035
    %v1348 = vpack.c.bf16 %v1060, %v1036
    %v1349 = vpack.c.bf16 %v1061, %v1037
    %v1350 = vpack.c.bf16 %v1062, %v1038
    %v1351 = vpack.c.bf16 %v1063, %v1039
    %v1352 = vpack.c.bf16 %v1064, %v1040
    %v1353 = vpack.c.bf16 %v1065, %v1041
    %v1354 = vpack.c.bf16 %v1066, %v1042
    %v1355 = vpack.c.bf16 %v1067, %v1043
    %v1356 = vpack.c.bf16 %v1068, %v1044
    %v1357 = vpack.c.bf16 %v1069, %v1045
    %v1358 = vpack.c.bf16 %v1070, %v1046
    %v1359 = vpack.c.bf16 %v1071, %v1047
    %v1360 = vpack.c.bf16 %v1072, %v1048
    %v1361 = vpack.c.bf16 %v1073, %v1049
    %v1362 = vpack.c.bf16 %v1074, %v1050
    %v1363 = vpack.c.bf16 %v1075, %v1051
    %v1364 = vpack.c.bf16 %v1100, %v1076
    %v1365 = vpack.c.bf16 %v1101, %v1077
    %v1366 = vpack.c.bf16 %v1102, %v1078
    %v1367 = vpack.c.bf16 %v1103, %v1079
    %v1368 = vpack.c.bf16 %v1104, %v1080
    %v1369 = vpack.c.bf16 %v1105, %v1081
    %v1370 = vpack.c.bf16 %v1106, %v1082
    %v1371 = vpack.c.bf16 %v1107, %v1083
    %v1372 = vpack.c.bf16 %v1108, %v1084
    %v1373 = vpack.c.bf16 %v1109, %v1085
    %v1374 = vpack.c.bf16 %v1110, %v1086
    %v1375 = vpack.c.bf16 %v1111, %v1087
    %v1376 = vpack.c.bf16 %v1112, %v1088
    %v1377 = vpack.c.bf16 %v1113, %v1089
    %v1378 = vpack.c.bf16 %v1114, %v1090
    %v1379 = vpack.c.bf16 %v1115, %v1091
    %v1380 = vpack.c.bf16 %v1116, %v1092
    %v1381 = vpack.c.bf16 %v1117, %v1093
    %v1382 = vpack.c.bf16 %v1118, %v1094
    %v1383 = vpack.c.bf16 %v1119, %v1095
    %v1384 = vpack.c.bf16 %v1120, %v1096
    %v1385 = vpack.c.bf16 %v1121, %v1097
    %v1386 = vpack.c.bf16 %v1122, %v1098
    %v1387 = vpack.c.bf16 %v1123, %v1099
    %v1388 = vpack.c.bf16 %v1148, %v1124
    %v1389 = vpack.c.bf16 %v1149, %v1125
    %v1390 = vpack.c.bf16 %v1150, %v1126
    %v1391 = vpack.c.bf16 %v1151, %v1127
    %v1392 = vpack.c.bf16 %v1152, %v1128
    %v1393 = vpack.c.bf16 %v1153, %v1129
    %v1394 = vpack.c.bf16 %v1154, %v1130
    %v1395 = vpack.c.bf16 %v1155, %v1131
    %v1396 = vpack.c.bf16 %v1156, %v1132
    %v1397 = vpack.c.bf16 %v1157, %v1133
    %v1398 = vpack.c.bf16 %v1158, %v1134
    %v1399 = vpack.c.bf16 %v1159, %v1135
    %v1400 = vpack.c.bf16 %v1160, %v1136
    %v1401 = vpack.c.bf16 %v1161, %v1137
    %v1402 = vpack.c.bf16 %v1162, %v1138
    %v1403 = vpack.c.bf16 %v1163, %v1139
    %v1404 = vpack.c.bf16 %v1164, %v1140
    %v1405 = vpack.c.bf16 %v1165, %v1141
    %v1406 = vpack.c.bf16 %v1166, %v1142
    %v1407 = vpack.c.bf16 %v1167, %v1143
    %v1408 = vpack.c.bf16 %v1168, %v1144
    %v1409 = vpack.c.bf16 %v1169, %v1145
    %v1410 = vpack.c.bf16 %v1170, %v1146
    %v1411 = vpack.c.bf16 %v1171, %v1147
    %v1412 = vpack.c.bf16 %v1196, %v1172
    %v1413 = vpack.c.bf16 %v1197, %v1173
    %v1414 = vpack.c.bf16 %v1198, %v1174
    %v1415 = vpack.c.bf16 %v1199, %v1175
    %v1416 = vpack.c.bf16 %v1200, %v1176
    %v1417 = vpack.c.bf16 %v1201, %v1177
    %v1418 = vpack.c.bf16 %v1202, %v1178
    %v1419 = vpack.c.bf16 %v1203, %v1179
    %v1420 = vpack.c.bf16 %v1204, %v1180
    %v1421 = vpack.c.bf16 %v1205, %v1181
    %v1422 = vpack.c.bf16 %v1206, %v1182
    %v1423 = vpack.c.bf16 %v1207, %v1183
    %v1424 = vpack.c.bf16 %v1208, %v1184
    %v1425 = vpack.c.bf16 %v1209, %v1185
    %v1426 = vpack.c.bf16 %v1210, %v1186
    %v1427 = vpack.c.bf16 %v1211, %v1187
    %v1428 = vpack.c.bf16 %v1212, %v1188
    %v1429 = vpack.c.bf16 %v1213, %v1189
    %v1430 = vpack.c.bf16 %v1214, %v1190
    %v1431 = vpack.c.bf16 %v1215, %v1191
    %v1432 = vpack.c.bf16 %v1216, %v1192
    %v1433 = vpack.c.bf16 %v1217, %v1193
    %v1434 = vpack.c.bf16 %v1218, %v1194
    %v1435 = vpack.c.bf16 %v1219, %v1195
    %v1436 = vpack.c.bf16 %v1244, %v1220
    %v1437 = vpack.c.bf16 %v1245, %v1221
    %v1438 = vpack.c.bf16 %v1246, %v1222
    %v1439 = vpack.c.bf16 %v1247, %v1223
    %v1440 = vpack.c.bf16 %v1248, %v1224
    %v1441 = vpack.c.bf16 %v1249, %v1225
    %v1442 = vpack.c.bf16 %v1250, %v1226
    %v1443 = vpack.c.bf16 %v1251, %v1227
    %v1444 = vpack.c.bf16 %v1252, %v1228
    %v1445 = vpack.c.bf16 %v1253, %v1229
    %v1446 = vpack.c.bf16 %v1254, %v1230
    %v1447 = vpack.c.bf16 %v1255, %v1231
    %v1448 = vpack.c.bf16 %v1256, %v1232
    %v1449 = vpack.c.bf16 %v1257, %v1233
    %v1450 = vpack.c.bf16 %v1258, %v1234
    %v1451 = vpack.c.bf16 %v1259, %v1235
    %v1452 = vpack.c.bf16 %v1260, %v1236
    %v1453 = vpack.c.bf16 %v1261, %v1237
    %v1454 = vpack.c.bf16 %v1262, %v1238
    %v1455 = vpack.c.bf16 %v1263, %v1239
    %v1456 = vpack.c.bf16 %v1264, %v1240
    %v1457 = vpack.c.bf16 %v1265, %v1241
    %v1458 = vpack.c.bf16 %v1266, %v1242
    %v1459 = vpack.c.bf16 %v1267, %v1243
    %v1460 = vld [vmem:[#allocation2] sm:$0xf]
    %v1461 = vld [vmem:[#allocation2 + $0x4] sm:$0xf]
    %v1462 = vld [vmem:[#allocation2 + $0x8] sm:$0xf]
    %v1463 = vld [vmem:[#allocation2 + $0xc] sm:$0xf]
    %v1464 = vld [vmem:[#allocation2 + $0x10] sm:$0xf]
    %v1465 = vld [vmem:[#allocation2 + $0x14] sm:$0xf]
    %v1466 = vld [vmem:[#allocation2 + $0x18] sm:$0xf]
    %v1467 = vld [vmem:[#allocation2 + $0x1c] sm:$0xf]
    %v1468 = vld [vmem:[#allocation2 + $0x20] sm:$0xf]
    %v1469 = vld [vmem:[#allocation2 + $0x24] sm:$0xf]
    %v1470 = vld [vmem:[#allocation2 + $0x28] sm:$0xf]
    %v1471 = vld [vmem:[#allocation2 + $0x2c] sm:$0xf]
    %v1472 = vld [vmem:[#allocation2 + $0x30] sm:$0xf]
    %v1473 = vld [vmem:[#allocation2 + $0x34] sm:$0xf]
    %v1474 = vld [vmem:[#allocation2 + $0x38] sm:$0xf]
    %v1475 = vld [vmem:[#allocation2 + $0x3c] sm:$0xf]
    %v1476 = vld [vmem:[#allocation2 + $0x40] sm:$0xf]
    %v1477 = vld [vmem:[#allocation2 + $0x44] sm:$0xf]
    %v1478 = vld [vmem:[#allocation2 + $0x48] sm:$0xf]
    %v1479 = vld [vmem:[#allocation2 + $0x4c] sm:$0xf]
    %v1480 = vld [vmem:[#allocation2 + $0x50] sm:$0xf]
    %v1481 = vld [vmem:[#allocation2 + $0x54] sm:$0xf]
    %v1482 = vld [vmem:[#allocation2 + $0x58] sm:$0xf]
    %v1483 = vld [vmem:[#allocation2 + $0x5c] sm:$0xf]
    %v1484 = vld [vmem:[#allocation2 + $0x60] sm:$0xf]
    %v1485 = vld [vmem:[#allocation2 + $0x64] sm:$0xf]
    %v1486 = vld [vmem:[#allocation2 + $0x68] sm:$0xf]
    %v1487 = vld [vmem:[#allocation2 + $0x6c] sm:$0xf]
    %v1488 = vld [vmem:[#allocation2 + $0x70] sm:$0xf]
    %v1489 = vld [vmem:[#allocation2 + $0x74] sm:$0xf]
    %v1490 = vld [vmem:[#allocation2 + $0x78] sm:$0xf]
    %v1491 = vld [vmem:[#allocation2 + $0x7c] sm:$0xf]
    %v1492 = vld [vmem:[#allocation2 + $0x80] sm:$0xf]
    %v1493 = vld [vmem:[#allocation2 + $0x84] sm:$0xf]
    %v1494 = vld [vmem:[#allocation2 + $0x88] sm:$0xf]
    %v1495 = vld [vmem:[#allocation2 + $0x8c] sm:$0xf]
    %v1496 = vld [vmem:[#allocation2 + $0x90] sm:$0xf]
    %v1497 = vld [vmem:[#allocation2 + $0x94] sm:$0xf]
    %v1498 = vld [vmem:[#allocation2 + $0x98] sm:$0xf]
    %v1499 = vld [vmem:[#allocation2 + $0x9c] sm:$0xf]
    %v1500 = vld [vmem:[#allocation2 + $0xa0] sm:$0xf]
    %v1501 = vld [vmem:[#allocation2 + $0xa4] sm:$0xf]
    %v1502 = vld [vmem:[#allocation2 + $0xa8] sm:$0xf]
    %v1503 = vld [vmem:[#allocation2 + $0xac] sm:$0xf]
    %v1504 = vld [vmem:[#allocation2 + $0xb0] sm:$0xf]
    %v1505 = vld [vmem:[#allocation2 + $0xb4] sm:$0xf]
    %v1506 = vld [vmem:[#allocation2 + $0xb8] sm:$0xf]
    %v1507 = vld [vmem:[#allocation2 + $0xbc] sm:$0xf]
    %v1508 = vld [vmem:[#allocation2 + $0xc0] sm:$0xf]
    %v1509 = vld [vmem:[#allocation2 + $0xc4] sm:$0xf]
    %v1510 = vld [vmem:[#allocation2 + $0xc8] sm:$0xf]
    %v1511 = vld [vmem:[#allocation2 + $0xcc] sm:$0xf]
    %v1512 = vld [vmem:[#allocation2 + $0xd0] sm:$0xf]
    %v1513 = vld [vmem:[#allocation2 + $0xd4] sm:$0xf]
    %v1514 = vld [vmem:[#allocation2 + $0xd8] sm:$0xf]
    %v1515 = vld [vmem:[#allocation2 + $0xdc] sm:$0xf]
    %v1516 = vld [vmem:[#allocation2 + $0xe0] sm:$0xf]
    %v1517 = vld [vmem:[#allocation2 + $0xe4] sm:$0xf]
    %v1518 = vld [vmem:[#allocation2 + $0xe8] sm:$0xf]
    %v1519 = vld [vmem:[#allocation2 + $0xec] sm:$0xf]
    %v1520 = vld [vmem:[#allocation2 + $0xf0] sm:$0xf]
    %v1521 = vld [vmem:[#allocation2 + $0xf4] sm:$0xf]
    %v1522 = vld [vmem:[#allocation2 + $0xf8] sm:$0xf]
    %v1523 = vld [vmem:[#allocation2 + $0xfc] sm:$0xf]
    %v1524 = vld [vmem:[#allocation2 + $0x100] sm:$0xf]
    %v1525 = vld [vmem:[#allocation2 + $0x104] sm:$0xf]
    %v1526 = vld [vmem:[#allocation2 + $0x108] sm:$0xf]
    %v1527 = vld [vmem:[#allocation2 + $0x10c] sm:$0xf]
    %v1528 = vld [vmem:[#allocation2 + $0x110] sm:$0xf]
    %v1529 = vld [vmem:[#allocation2 + $0x114] sm:$0xf]
    %v1530 = vld [vmem:[#allocation2 + $0x118] sm:$0xf]
    %v1531 = vld [vmem:[#allocation2 + $0x11c] sm:$0xf]
    %v1532 = vld [vmem:[#allocation2 + $0x120] sm:$0xf]
    %v1533 = vld [vmem:[#allocation2 + $0x124] sm:$0xf]
    %v1534 = vld [vmem:[#allocation2 + $0x128] sm:$0xf]
    %v1535 = vld [vmem:[#allocation2 + $0x12c] sm:$0xf]
    %v1536 = vld [vmem:[#allocation2 + $0x130] sm:$0xf]
    %v1537 = vld [vmem:[#allocation2 + $0x134] sm:$0xf]
    %v1538 = vld [vmem:[#allocation2 + $0x138] sm:$0xf]
    %v1539 = vld [vmem:[#allocation2 + $0x13c] sm:$0xf]
    %v1540 = vld [vmem:[#allocation2 + $0x140] sm:$0xf]
    %v1541 = vld [vmem:[#allocation2 + $0x144] sm:$0xf]
    %v1542 = vld [vmem:[#allocation2 + $0x148] sm:$0xf]
    %v1543 = vld [vmem:[#allocation2 + $0x14c] sm:$0xf]
    %v1544 = vld [vmem:[#allocation2 + $0x150] sm:$0xf]
    %v1545 = vld [vmem:[#allocation2 + $0x154] sm:$0xf]
    %v1546 = vld [vmem:[#allocation2 + $0x158] sm:$0xf]
    %v1547 = vld [vmem:[#allocation2 + $0x15c] sm:$0xf]
    %v1548 = vld [vmem:[#allocation2 + $0x160] sm:$0xf]
    %v1549 = vld [vmem:[#allocation2 + $0x164] sm:$0xf]
    %v1550 = vld [vmem:[#allocation2 + $0x168] sm:$0xf]
    %v1551 = vld [vmem:[#allocation2 + $0x16c] sm:$0xf]
    %v1552 = vld [vmem:[#allocation2 + $0x170] sm:$0xf]
    %v1553 = vld [vmem:[#allocation2 + $0x174] sm:$0xf]
    %v1554 = vld [vmem:[#allocation2 + $0x178] sm:$0xf]
    %v1555 = vld [vmem:[#allocation2 + $0x17c] sm:$0xf]
    %v1556 = vld [vmem:[#allocation2 + $0x180] sm:$0xf]
    %v1557 = vld [vmem:[#allocation2 + $0x184] sm:$0xf]
    %v1558 = vld [vmem:[#allocation2 + $0x188] sm:$0xf]
    %v1559 = vld [vmem:[#allocation2 + $0x18c] sm:$0xf]
    %v1560 = vld [vmem:[#allocation2 + $0x190] sm:$0xf]
    %v1561 = vld [vmem:[#allocation2 + $0x194] sm:$0xf]
    %v1562 = vld [vmem:[#allocation2 + $0x198] sm:$0xf]
    %v1563 = vld [vmem:[#allocation2 + $0x19c] sm:$0xf]
    %v1564 = vld [vmem:[#allocation2 + $0x1a0] sm:$0xf]
    %v1565 = vld [vmem:[#allocation2 + $0x1a4] sm:$0xf]
    %v1566 = vld [vmem:[#allocation2 + $0x1a8] sm:$0xf]
    %v1567 = vld [vmem:[#allocation2 + $0x1ac] sm:$0xf]
    %v1568 = vld [vmem:[#allocation2 + $0x1b0] sm:$0xf]
    %v1569 = vld [vmem:[#allocation2 + $0x1b4] sm:$0xf]
    %v1570 = vld [vmem:[#allocation2 + $0x1b8] sm:$0xf]
    %v1571 = vld [vmem:[#allocation2 + $0x1bc] sm:$0xf]
    %v1572 = vld [vmem:[#allocation2 + $0x1c0] sm:$0xf]
    %v1573 = vld [vmem:[#allocation2 + $0x1c4] sm:$0xf]
    %v1574 = vld [vmem:[#allocation2 + $0x1c8] sm:$0xf]
    %v1575 = vld [vmem:[#allocation2 + $0x1cc] sm:$0xf]
    %v1576 = vld [vmem:[#allocation2 + $0x1d0] sm:$0xf]
    %v1577 = vld [vmem:[#allocation2 + $0x1d4] sm:$0xf]
    %v1578 = vld [vmem:[#allocation2 + $0x1d8] sm:$0xf]
    %v1579 = vld [vmem:[#allocation2 + $0x1dc] sm:$0xf]
    %v1580 = vld [vmem:[#allocation2 + $0x1e0] sm:$0xf]
    %v1581 = vld [vmem:[#allocation2 + $0x1e4] sm:$0xf]
    %v1582 = vld [vmem:[#allocation2 + $0x1e8] sm:$0xf]
    %v1583 = vld [vmem:[#allocation2 + $0x1ec] sm:$0xf]
    %v1584 = vld [vmem:[#allocation2 + $0x1f0] sm:$0xf]
    %v1585 = vld [vmem:[#allocation2 + $0x1f4] sm:$0xf]
    %v1586 = vld [vmem:[#allocation2 + $0x1f8] sm:$0xf]
    %v1587 = vld [vmem:[#allocation2 + $0x1fc] sm:$0xf]
    %v1588 = vld [vmem:[#allocation2 + $0x200] sm:$0xf]
    %v1589 = vld [vmem:[#allocation2 + $0x204] sm:$0xf]
    %v1590 = vld [vmem:[#allocation2 + $0x208] sm:$0xf]
    %v1591 = vld [vmem:[#allocation2 + $0x20c] sm:$0xf]
    %v1592 = vld [vmem:[#allocation2 + $0x210] sm:$0xf]
    %v1593 = vld [vmem:[#allocation2 + $0x214] sm:$0xf]
    %v1594 = vld [vmem:[#allocation2 + $0x218] sm:$0xf]
    %v1595 = vld [vmem:[#allocation2 + $0x21c] sm:$0xf]
    %v1596 = vld [vmem:[#allocation2 + $0x220] sm:$0xf]
    %v1597 = vld [vmem:[#allocation2 + $0x224] sm:$0xf]
    %v1598 = vld [vmem:[#allocation2 + $0x228] sm:$0xf]
    %v1599 = vld [vmem:[#allocation2 + $0x22c] sm:$0xf]
    %v1600 = vld [vmem:[#allocation2 + $0x230] sm:$0xf]
    %v1601 = vld [vmem:[#allocation2 + $0x234] sm:$0xf]
    %v1602 = vld [vmem:[#allocation2 + $0x238] sm:$0xf]
    %v1603 = vld [vmem:[#allocation2 + $0x23c] sm:$0xf]
    %v1604 = vld [vmem:[#allocation2 + $0x240] sm:$0xf]
    %v1605 = vld [vmem:[#allocation2 + $0x244] sm:$0xf]
    %v1606 = vld [vmem:[#allocation2 + $0x248] sm:$0xf]
    %v1607 = vld [vmem:[#allocation2 + $0x24c] sm:$0xf]
    %v1608 = vld [vmem:[#allocation2 + $0x250] sm:$0xf]
    %v1609 = vld [vmem:[#allocation2 + $0x254] sm:$0xf]
    %v1610 = vld [vmem:[#allocation2 + $0x258] sm:$0xf]
    %v1611 = vld [vmem:[#allocation2 + $0x25c] sm:$0xf]
    %v1612 = vld [vmem:[#allocation2 + $0x260] sm:$0xf]
    %v1613 = vld [vmem:[#allocation2 + $0x264] sm:$0xf]
    %v1614 = vld [vmem:[#allocation2 + $0x268] sm:$0xf]
    %v1615 = vld [vmem:[#allocation2 + $0x26c] sm:$0xf]
    %v1616 = vld [vmem:[#allocation2 + $0x270] sm:$0xf]
    %v1617 = vld [vmem:[#allocation2 + $0x274] sm:$0xf]
    %v1618 = vld [vmem:[#allocation2 + $0x278] sm:$0xf]
    %v1619 = vld [vmem:[#allocation2 + $0x27c] sm:$0xf]
    %v1620 = vld [vmem:[#allocation2 + $0x280] sm:$0xf]
    %v1621 = vld [vmem:[#allocation2 + $0x284] sm:$0xf]
    %v1622 = vld [vmem:[#allocation2 + $0x288] sm:$0xf]
    %v1623 = vld [vmem:[#allocation2 + $0x28c] sm:$0xf]
    %v1624 = vld [vmem:[#allocation2 + $0x290] sm:$0xf]
    %v1625 = vld [vmem:[#allocation2 + $0x294] sm:$0xf]
    %v1626 = vld [vmem:[#allocation2 + $0x298] sm:$0xf]
    %v1627 = vld [vmem:[#allocation2 + $0x29c] sm:$0xf]
    %v1628 = vld [vmem:[#allocation2 + $0x2a0] sm:$0xf]
    %v1629 = vld [vmem:[#allocation2 + $0x2a4] sm:$0xf]
    %v1630 = vld [vmem:[#allocation2 + $0x2a8] sm:$0xf]
    %v1631 = vld [vmem:[#allocation2 + $0x2ac] sm:$0xf]
    %v1632 = vld [vmem:[#allocation2 + $0x2b0] sm:$0xf]
    %v1633 = vld [vmem:[#allocation2 + $0x2b4] sm:$0xf]
    %v1634 = vld [vmem:[#allocation2 + $0x2b8] sm:$0xf]
    %v1635 = vld [vmem:[#allocation2 + $0x2bc] sm:$0xf]
    %v1636 = vld [vmem:[#allocation2 + $0x2c0] sm:$0xf]
    %v1637 = vld [vmem:[#allocation2 + $0x2c4] sm:$0xf]
    %v1638 = vld [vmem:[#allocation2 + $0x2c8] sm:$0xf]
    %v1639 = vld [vmem:[#allocation2 + $0x2cc] sm:$0xf]
    %v1640 = vld [vmem:[#allocation2 + $0x2d0] sm:$0xf]
    %v1641 = vld [vmem:[#allocation2 + $0x2d4] sm:$0xf]
    %v1642 = vld [vmem:[#allocation2 + $0x2d8] sm:$0xf]
    %v1643 = vld [vmem:[#allocation2 + $0x2dc] sm:$0xf]
    %v1644 = vld [vmem:[#allocation2 + $0x2e0] sm:$0xf]
    %v1645 = vld [vmem:[#allocation2 + $0x2e4] sm:$0xf]
    %v1646 = vld [vmem:[#allocation2 + $0x2e8] sm:$0xf]
    %v1647 = vld [vmem:[#allocation2 + $0x2ec] sm:$0xf]
    %v1648 = vld [vmem:[#allocation2 + $0x2f0] sm:$0xf]
    %v1649 = vld [vmem:[#allocation2 + $0x2f4] sm:$0xf]
    %v1650 = vld [vmem:[#allocation2 + $0x2f8] sm:$0xf]
    %v1651 = vld [vmem:[#allocation2 + $0x2fc] sm:$0xf]
    %v1652 = vld [vmem:[#allocation2 + $0x300] sm:$0xf]
    %v1653 = vld [vmem:[#allocation2 + $0x304] sm:$0xf]
    %v1654 = vld [vmem:[#allocation2 + $0x308] sm:$0xf]
    %v1655 = vld [vmem:[#allocation2 + $0x30c] sm:$0xf]
    %v1656 = vld [vmem:[#allocation2 + $0x310] sm:$0xf]
    %v1657 = vld [vmem:[#allocation2 + $0x314] sm:$0xf]
    %v1658 = vld [vmem:[#allocation2 + $0x318] sm:$0xf]
    %v1659 = vld [vmem:[#allocation2 + $0x31c] sm:$0xf]
    %v1660 = vld [vmem:[#allocation2 + $0x320] sm:$0xf]
    %v1661 = vld [vmem:[#allocation2 + $0x324] sm:$0xf]
    %v1662 = vld [vmem:[#allocation2 + $0x328] sm:$0xf]
    %v1663 = vld [vmem:[#allocation2 + $0x32c] sm:$0xf]
    %v1664 = vld [vmem:[#allocation2 + $0x330] sm:$0xf]
    %v1665 = vld [vmem:[#allocation2 + $0x334] sm:$0xf]
    %v1666 = vld [vmem:[#allocation2 + $0x338] sm:$0xf]
    %v1667 = vld [vmem:[#allocation2 + $0x33c] sm:$0xf]
    %v1668 = vld [vmem:[#allocation2 + $0x340] sm:$0xf]
    %v1669 = vld [vmem:[#allocation2 + $0x344] sm:$0xf]
    %v1670 = vld [vmem:[#allocation2 + $0x348] sm:$0xf]
    %v1671 = vld [vmem:[#allocation2 + $0x34c] sm:$0xf]
    %v1672 = vld [vmem:[#allocation2 + $0x350] sm:$0xf]
    %v1673 = vld [vmem:[#allocation2 + $0x354] sm:$0xf]
    %v1674 = vld [vmem:[#allocation2 + $0x358] sm:$0xf]
    %v1675 = vld [vmem:[#allocation2 + $0x35c] sm:$0xf]
    %v1676 = vld [vmem:[#allocation2 + $0x360] sm:$0xf]
    %v1677 = vld [vmem:[#allocation2 + $0x364] sm:$0xf]
    %v1678 = vld [vmem:[#allocation2 + $0x368] sm:$0xf]
    %v1679 = vld [vmem:[#allocation2 + $0x36c] sm:$0xf]
    %v1680 = vld [vmem:[#allocation2 + $0x370] sm:$0xf]
    %v1681 = vld [vmem:[#allocation2 + $0x374] sm:$0xf]
    %v1682 = vld [vmem:[#allocation2 + $0x378] sm:$0xf]
    %v1683 = vld [vmem:[#allocation2 + $0x37c] sm:$0xf]
    %v1684 = vld [vmem:[#allocation2 + $0x380] sm:$0xf]
    %v1685 = vld [vmem:[#allocation2 + $0x384] sm:$0xf]
    %v1686 = vld [vmem:[#allocation2 + $0x388] sm:$0xf]
    %v1687 = vld [vmem:[#allocation2 + $0x38c] sm:$0xf]
    %v1688 = vld [vmem:[#allocation2 + $0x390] sm:$0xf]
    %v1689 = vld [vmem:[#allocation2 + $0x394] sm:$0xf]
    %v1690 = vld [vmem:[#allocation2 + $0x398] sm:$0xf]
    %v1691 = vld [vmem:[#allocation2 + $0x39c] sm:$0xf]
    %v1692 = vld [vmem:[#allocation2 + $0x3a0] sm:$0xf]
    %v1693 = vld [vmem:[#allocation2 + $0x3a4] sm:$0xf]
    %v1694 = vld [vmem:[#allocation2 + $0x3a8] sm:$0xf]
    %v1695 = vld [vmem:[#allocation2 + $0x3ac] sm:$0xf]
    %v1696 = vld [vmem:[#allocation2 + $0x3b0] sm:$0xf]
    %v1697 = vld [vmem:[#allocation2 + $0x3b4] sm:$0xf]
    %v1698 = vld [vmem:[#allocation2 + $0x3b8] sm:$0xf]
    %v1699 = vld [vmem:[#allocation2 + $0x3bc] sm:$0xf]
    %v1700 = vld [vmem:[#allocation2 + $0x3c0] sm:$0xf]
    %v1701 = vld [vmem:[#allocation2 + $0x3c4] sm:$0xf]
    %v1702 = vld [vmem:[#allocation2 + $0x3c8] sm:$0xf]
    %v1703 = vld [vmem:[#allocation2 + $0x3cc] sm:$0xf]
    %v1704 = vld [vmem:[#allocation2 + $0x3d0] sm:$0xf]
    %v1705 = vld [vmem:[#allocation2 + $0x3d4] sm:$0xf]
    %v1706 = vld [vmem:[#allocation2 + $0x3d8] sm:$0xf]
    %v1707 = vld [vmem:[#allocation2 + $0x3dc] sm:$0xf]
    %v1708 = vld [vmem:[#allocation2 + $0x3e0] sm:$0xf]
    %v1709 = vld [vmem:[#allocation2 + $0x3e4] sm:$0xf]
    %v1710 = vld [vmem:[#allocation2 + $0x3e8] sm:$0xf]
    %v1711 = vld [vmem:[#allocation2 + $0x3ec] sm:$0xf]
    %v1712 = vld [vmem:[#allocation2 + $0x3f0] sm:$0xf]
    %v1713 = vld [vmem:[#allocation2 + $0x3f4] sm:$0xf]
    %v1714 = vld [vmem:[#allocation2 + $0x3f8] sm:$0xf]
    %v1715 = vld [vmem:[#allocation2 + $0x3fc] sm:$0xf]
    %v1716 = vld [vmem:[#allocation2 + $0x400] sm:$0xf]
    %v1717 = vld [vmem:[#allocation2 + $0x404] sm:$0xf]
    %v1718 = vld [vmem:[#allocation2 + $0x408] sm:$0xf]
    %v1719 = vld [vmem:[#allocation2 + $0x40c] sm:$0xf]
    %v1720 = vld [vmem:[#allocation2 + $0x410] sm:$0xf]
    %v1721 = vld [vmem:[#allocation2 + $0x414] sm:$0xf]
    %v1722 = vld [vmem:[#allocation2 + $0x418] sm:$0xf]
    %v1723 = vld [vmem:[#allocation2 + $0x41c] sm:$0xf]
    %v1724 = vld [vmem:[#allocation2 + $0x420] sm:$0xf]
    %v1725 = vld [vmem:[#allocation2 + $0x424] sm:$0xf]
    %v1726 = vld [vmem:[#allocation2 + $0x428] sm:$0xf]
    %v1727 = vld [vmem:[#allocation2 + $0x42c] sm:$0xf]
    %v1728 = vld [vmem:[#allocation2 + $0x430] sm:$0xf]
    %v1729 = vld [vmem:[#allocation2 + $0x434] sm:$0xf]
    %v1730 = vld [vmem:[#allocation2 + $0x438] sm:$0xf]
    %v1731 = vld [vmem:[#allocation2 + $0x43c] sm:$0xf]
    %v1732 = vld [vmem:[#allocation2 + $0x440] sm:$0xf]
    %v1733 = vld [vmem:[#allocation2 + $0x444] sm:$0xf]
    %v1734 = vld [vmem:[#allocation2 + $0x448] sm:$0xf]
    %v1735 = vld [vmem:[#allocation2 + $0x44c] sm:$0xf]
    %v1736 = vld [vmem:[#allocation2 + $0x450] sm:$0xf]
    %v1737 = vld [vmem:[#allocation2 + $0x454] sm:$0xf]
    %v1738 = vld [vmem:[#allocation2 + $0x458] sm:$0xf]
    %v1739 = vld [vmem:[#allocation2 + $0x45c] sm:$0xf]
    %v1740 = vld [vmem:[#allocation2 + $0x460] sm:$0xf]
    %v1741 = vld [vmem:[#allocation2 + $0x464] sm:$0xf]
    %v1742 = vld [vmem:[#allocation2 + $0x468] sm:$0xf]
    %v1743 = vld [vmem:[#allocation2 + $0x46c] sm:$0xf]
    %v1744 = vld [vmem:[#allocation2 + $0x470] sm:$0xf]
    %v1745 = vld [vmem:[#allocation2 + $0x474] sm:$0xf]
    %v1746 = vld [vmem:[#allocation2 + $0x478] sm:$0xf]
    %v1747 = vld [vmem:[#allocation2 + $0x47c] sm:$0xf]
    %v1748 = vld [vmem:[#allocation2 + $0x480] sm:$0xf]
    %v1749 = vld [vmem:[#allocation2 + $0x484] sm:$0xf]
    %v1750 = vld [vmem:[#allocation2 + $0x488] sm:$0xf]
    %v1751 = vld [vmem:[#allocation2 + $0x48c] sm:$0xf]
    %v1752 = vld [vmem:[#allocation2 + $0x490] sm:$0xf]
    %v1753 = vld [vmem:[#allocation2 + $0x494] sm:$0xf]
    %v1754 = vld [vmem:[#allocation2 + $0x498] sm:$0xf]
    %v1755 = vld [vmem:[#allocation2 + $0x49c] sm:$0xf]
    %v1756 = vld [vmem:[#allocation2 + $0x4a0] sm:$0xf]
    %v1757 = vld [vmem:[#allocation2 + $0x4a4] sm:$0xf]
    %v1758 = vld [vmem:[#allocation2 + $0x4a8] sm:$0xf]
    %v1759 = vld [vmem:[#allocation2 + $0x4ac] sm:$0xf]
    %v1760 = vld [vmem:[#allocation2 + $0x4b0] sm:$0xf]
    %v1761 = vld [vmem:[#allocation2 + $0x4b4] sm:$0xf]
    %v1762 = vld [vmem:[#allocation2 + $0x4b8] sm:$0xf]
    %v1763 = vld [vmem:[#allocation2 + $0x4bc] sm:$0xf]
    %v1764 = vld [vmem:[#allocation2 + $0x4c0] sm:$0xf]
    %v1765 = vld [vmem:[#allocation2 + $0x4c4] sm:$0xf]
    %v1766 = vld [vmem:[#allocation2 + $0x4c8] sm:$0xf]
    %v1767 = vld [vmem:[#allocation2 + $0x4cc] sm:$0xf]
    %v1768 = vld [vmem:[#allocation2 + $0x4d0] sm:$0xf]
    %v1769 = vld [vmem:[#allocation2 + $0x4d4] sm:$0xf]
    %v1770 = vld [vmem:[#allocation2 + $0x4d8] sm:$0xf]
    %v1771 = vld [vmem:[#allocation2 + $0x4dc] sm:$0xf]
    %v1772 = vld [vmem:[#allocation2 + $0x4e0] sm:$0xf]
    %v1773 = vld [vmem:[#allocation2 + $0x4e4] sm:$0xf]
    %v1774 = vld [vmem:[#allocation2 + $0x4e8] sm:$0xf]
    %v1775 = vld [vmem:[#allocation2 + $0x4ec] sm:$0xf]
    %v1776 = vld [vmem:[#allocation2 + $0x4f0] sm:$0xf]
    %v1777 = vld [vmem:[#allocation2 + $0x4f4] sm:$0xf]
    %v1778 = vld [vmem:[#allocation2 + $0x4f8] sm:$0xf]
    %v1779 = vld [vmem:[#allocation2 + $0x4fc] sm:$0xf]
    %v1780 = vld [vmem:[#allocation2 + $0x500] sm:$0xf]
    %v1781 = vld [vmem:[#allocation2 + $0x504] sm:$0xf]
    %v1782 = vld [vmem:[#allocation2 + $0x508] sm:$0xf]
    %v1783 = vld [vmem:[#allocation2 + $0x50c] sm:$0xf]
    %v1784 = vld [vmem:[#allocation2 + $0x510] sm:$0xf]
    %v1785 = vld [vmem:[#allocation2 + $0x514] sm:$0xf]
    %v1786 = vld [vmem:[#allocation2 + $0x518] sm:$0xf]
    %v1787 = vld [vmem:[#allocation2 + $0x51c] sm:$0xf]
    %v1788 = vld [vmem:[#allocation2 + $0x520] sm:$0xf]
    %v1789 = vld [vmem:[#allocation2 + $0x524] sm:$0xf]
    %v1790 = vld [vmem:[#allocation2 + $0x528] sm:$0xf]
    %v1791 = vld [vmem:[#allocation2 + $0x52c] sm:$0xf]
    %v1792 = vld [vmem:[#allocation2 + $0x530] sm:$0xf]
    %v1793 = vld [vmem:[#allocation2 + $0x534] sm:$0xf]
    %v1794 = vld [vmem:[#allocation2 + $0x538] sm:$0xf]
    %v1795 = vld [vmem:[#allocation2 + $0x53c] sm:$0xf]
    %v1796 = vld [vmem:[#allocation2 + $0x540] sm:$0xf]
    %v1797 = vld [vmem:[#allocation2 + $0x544] sm:$0xf]
    %v1798 = vld [vmem:[#allocation2 + $0x548] sm:$0xf]
    %v1799 = vld [vmem:[#allocation2 + $0x54c] sm:$0xf]
    %v1800 = vld [vmem:[#allocation2 + $0x550] sm:$0xf]
    %v1801 = vld [vmem:[#allocation2 + $0x554] sm:$0xf]
    %v1802 = vld [vmem:[#allocation2 + $0x558] sm:$0xf]
    %v1803 = vld [vmem:[#allocation2 + $0x55c] sm:$0xf]
    %v1804 = vld [vmem:[#allocation2 + $0x560] sm:$0xf]
    %v1805 = vld [vmem:[#allocation2 + $0x564] sm:$0xf]
    %v1806 = vld [vmem:[#allocation2 + $0x568] sm:$0xf]
    %v1807 = vld [vmem:[#allocation2 + $0x56c] sm:$0xf]
    %v1808 = vld [vmem:[#allocation2 + $0x570] sm:$0xf]
    %v1809 = vld [vmem:[#allocation2 + $0x574] sm:$0xf]
    %v1810 = vld [vmem:[#allocation2 + $0x578] sm:$0xf]
    %v1811 = vld [vmem:[#allocation2 + $0x57c] sm:$0xf]
    %v1812 = vld [vmem:[#allocation2 + $0x580] sm:$0xf]
    %v1813 = vld [vmem:[#allocation2 + $0x584] sm:$0xf]
    %v1814 = vld [vmem:[#allocation2 + $0x588] sm:$0xf]
    %v1815 = vld [vmem:[#allocation2 + $0x58c] sm:$0xf]
    %v1816 = vld [vmem:[#allocation2 + $0x590] sm:$0xf]
    %v1817 = vld [vmem:[#allocation2 + $0x594] sm:$0xf]
    %v1818 = vld [vmem:[#allocation2 + $0x598] sm:$0xf]
    %v1819 = vld [vmem:[#allocation2 + $0x59c] sm:$0xf]
    %v1820 = vld [vmem:[#allocation2 + $0x5a0] sm:$0xf]
    %v1821 = vld [vmem:[#allocation2 + $0x5a4] sm:$0xf]
    %v1822 = vld [vmem:[#allocation2 + $0x5a8] sm:$0xf]
    %v1823 = vld [vmem:[#allocation2 + $0x5ac] sm:$0xf]
    %v1824 = vld [vmem:[#allocation2 + $0x5b0] sm:$0xf]
    %v1825 = vld [vmem:[#allocation2 + $0x5b4] sm:$0xf]
    %v1826 = vld [vmem:[#allocation2 + $0x5b8] sm:$0xf]
    %v1827 = vld [vmem:[#allocation2 + $0x5bc] sm:$0xf]
    %v1828 = vld [vmem:[#allocation2 + $0x5c0] sm:$0xf]
    %v1829 = vld [vmem:[#allocation2 + $0x5c4] sm:$0xf]
    %v1830 = vld [vmem:[#allocation2 + $0x5c8] sm:$0xf]
    %v1831 = vld [vmem:[#allocation2 + $0x5cc] sm:$0xf]
    %v1832 = vld [vmem:[#allocation2 + $0x5d0] sm:$0xf]
    %v1833 = vld [vmem:[#allocation2 + $0x5d4] sm:$0xf]
    %v1834 = vld [vmem:[#allocation2 + $0x5d8] sm:$0xf]
    %v1835 = vld [vmem:[#allocation2 + $0x5dc] sm:$0xf]
    %v1836 = vld [vmem:[#allocation2 + $0x5e0] sm:$0xf]
    %v1837 = vld [vmem:[#allocation2 + $0x5e4] sm:$0xf]
    %v1838 = vld [vmem:[#allocation2 + $0x5e8] sm:$0xf]
    %v1839 = vld [vmem:[#allocation2 + $0x5ec] sm:$0xf]
    %v1840 = vld [vmem:[#allocation2 + $0x5f0] sm:$0xf]
    %v1841 = vld [vmem:[#allocation2 + $0x5f4] sm:$0xf]
    %v1842 = vld [vmem:[#allocation2 + $0x5f8] sm:$0xf]
    %v1843 = vld [vmem:[#allocation2 + $0x5fc] sm:$0xf]
    %v2228 = vunpack.c.l.b16 %v1460
    %v2229 = vunpack.c.l.b16 %v1461
    %v2230 = vunpack.c.l.b16 %v1462
    %v2231 = vunpack.c.l.b16 %v1463
    %v2232 = vunpack.c.l.b16 %v1464
    %v2233 = vunpack.c.l.b16 %v1465
    %v2234 = vunpack.c.l.b16 %v1466
    %v2235 = vunpack.c.l.b16 %v1467
    %v2236 = vunpack.c.l.b16 %v1468
    %v2237 = vunpack.c.l.b16 %v1469
    %v2238 = vunpack.c.l.b16 %v1470
    %v2239 = vunpack.c.l.b16 %v1471
    %v2240 = vunpack.c.l.b16 %v1472
    %v2241 = vunpack.c.l.b16 %v1473
    %v2242 = vunpack.c.l.b16 %v1474
    %v2243 = vunpack.c.l.b16 %v1475
    %v2244 = vunpack.c.l.b16 %v1476
    %v2245 = vunpack.c.l.b16 %v1477
    %v2246 = vunpack.c.l.b16 %v1478
    %v2247 = vunpack.c.l.b16 %v1479
    %v2248 = vunpack.c.l.b16 %v1480
    %v2249 = vunpack.c.l.b16 %v1481
    %v2250 = vunpack.c.l.b16 %v1482
    %v2251 = vunpack.c.l.b16 %v1483
    %v2252 = vunpack.c.l.b16 %v1484
    %v2253 = vunpack.c.l.b16 %v1485
    %v2254 = vunpack.c.l.b16 %v1486
    %v2255 = vunpack.c.l.b16 %v1487
    %v2256 = vunpack.c.l.b16 %v1488
    %v2257 = vunpack.c.l.b16 %v1489
    %v2258 = vunpack.c.l.b16 %v1490
    %v2259 = vunpack.c.l.b16 %v1491
    %v2260 = vunpack.c.l.b16 %v1492
    %v2261 = vunpack.c.l.b16 %v1493
    %v2262 = vunpack.c.l.b16 %v1494
    %v2263 = vunpack.c.l.b16 %v1495
    %v2264 = vunpack.c.l.b16 %v1496
    %v2265 = vunpack.c.l.b16 %v1497
    %v2266 = vunpack.c.l.b16 %v1498
    %v2267 = vunpack.c.l.b16 %v1499
    %v2268 = vunpack.c.l.b16 %v1500
    %v2269 = vunpack.c.l.b16 %v1501
    %v2270 = vunpack.c.l.b16 %v1502
    %v2271 = vunpack.c.l.b16 %v1503
    %v2272 = vunpack.c.l.b16 %v1504
    %v2273 = vunpack.c.l.b16 %v1505
    %v2274 = vunpack.c.l.b16 %v1506
    %v2275 = vunpack.c.l.b16 %v1507
    %v2276 = vunpack.c.l.b16 %v1508
    %v2277 = vunpack.c.l.b16 %v1509
    %v2278 = vunpack.c.l.b16 %v1510
    %v2279 = vunpack.c.l.b16 %v1511
    %v2280 = vunpack.c.l.b16 %v1512
    %v2281 = vunpack.c.l.b16 %v1513
    %v2282 = vunpack.c.l.b16 %v1514
    %v2283 = vunpack.c.l.b16 %v1515
    %v2284 = vunpack.c.l.b16 %v1516
    %v2285 = vunpack.c.l.b16 %v1517
    %v2286 = vunpack.c.l.b16 %v1518
    %v2287 = vunpack.c.l.b16 %v1519
    %v2288 = vunpack.c.l.b16 %v1520
    %v2289 = vunpack.c.l.b16 %v1521
    %v2290 = vunpack.c.l.b16 %v1522
    %v2291 = vunpack.c.l.b16 %v1523
    %v2292 = vunpack.c.l.b16 %v1524
    %v2293 = vunpack.c.l.b16 %v1525
    %v2294 = vunpack.c.l.b16 %v1526
    %v2295 = vunpack.c.l.b16 %v1527
    %v2296 = vunpack.c.l.b16 %v1528
    %v2297 = vunpack.c.l.b16 %v1529
    %v2298 = vunpack.c.l.b16 %v1530
    %v2299 = vunpack.c.l.b16 %v1531
    %v2300 = vunpack.c.l.b16 %v1532
    %v2301 = vunpack.c.l.b16 %v1533
    %v2302 = vunpack.c.l.b16 %v1534
    %v2303 = vunpack.c.l.b16 %v1535
    %v2304 = vunpack.c.l.b16 %v1536
    %v2305 = vunpack.c.l.b16 %v1537
    %v2306 = vunpack.c.l.b16 %v1538
    %v2307 = vunpack.c.l.b16 %v1539
    %v2308 = vunpack.c.l.b16 %v1540
    %v2309 = vunpack.c.l.b16 %v1541
    %v2310 = vunpack.c.l.b16 %v1542
    %v2311 = vunpack.c.l.b16 %v1543
    %v2312 = vunpack.c.l.b16 %v1544
    %v2313 = vunpack.c.l.b16 %v1545
    %v2314 = vunpack.c.l.b16 %v1546
    %v2315 = vunpack.c.l.b16 %v1547
    %v2316 = vunpack.c.l.b16 %v1548
    %v2317 = vunpack.c.l.b16 %v1549
    %v2318 = vunpack.c.l.b16 %v1550
    %v2319 = vunpack.c.l.b16 %v1551
    %v2320 = vunpack.c.l.b16 %v1552
    %v2321 = vunpack.c.l.b16 %v1553
    %v2322 = vunpack.c.l.b16 %v1554
    %v2323 = vunpack.c.l.b16 %v1555
    %v2324 = vunpack.c.l.b16 %v1556
    %v2325 = vunpack.c.l.b16 %v1557
    %v2326 = vunpack.c.l.b16 %v1558
    %v2327 = vunpack.c.l.b16 %v1559
    %v2328 = vunpack.c.l.b16 %v1560
    %v2329 = vunpack.c.l.b16 %v1561
    %v2330 = vunpack.c.l.b16 %v1562
    %v2331 = vunpack.c.l.b16 %v1563
    %v2332 = vunpack.c.l.b16 %v1564
    %v2333 = vunpack.c.l.b16 %v1565
    %v2334 = vunpack.c.l.b16 %v1566
    %v2335 = vunpack.c.l.b16 %v1567
    %v2336 = vunpack.c.l.b16 %v1568
    %v2337 = vunpack.c.l.b16 %v1569
    %v2338 = vunpack.c.l.b16 %v1570
    %v2339 = vunpack.c.l.b16 %v1571
    %v2340 = vunpack.c.l.b16 %v1572
    %v2341 = vunpack.c.l.b16 %v1573
    %v2342 = vunpack.c.l.b16 %v1574
    %v2343 = vunpack.c.l.b16 %v1575
    %v2344 = vunpack.c.l.b16 %v1576
    %v2345 = vunpack.c.l.b16 %v1577
    %v2346 = vunpack.c.l.b16 %v1578
    %v2347 = vunpack.c.l.b16 %v1579
    %v2348 = vunpack.c.l.b16 %v1580
    %v2349 = vunpack.c.l.b16 %v1581
    %v2350 = vunpack.c.l.b16 %v1582
    %v2351 = vunpack.c.l.b16 %v1583
    %v2352 = vunpack.c.l.b16 %v1584
    %v2353 = vunpack.c.l.b16 %v1585
    %v2354 = vunpack.c.l.b16 %v1586
    %v2355 = vunpack.c.l.b16 %v1587
    %v2356 = vunpack.c.l.b16 %v1588
    %v2357 = vunpack.c.l.b16 %v1589
    %v2358 = vunpack.c.l.b16 %v1590
    %v2359 = vunpack.c.l.b16 %v1591
    %v2360 = vunpack.c.l.b16 %v1592
    %v2361 = vunpack.c.l.b16 %v1593
    %v2362 = vunpack.c.l.b16 %v1594
    %v2363 = vunpack.c.l.b16 %v1595
    %v2364 = vunpack.c.l.b16 %v1596
    %v2365 = vunpack.c.l.b16 %v1597
    %v2366 = vunpack.c.l.b16 %v1598
    %v2367 = vunpack.c.l.b16 %v1599
    %v2368 = vunpack.c.l.b16 %v1600
    %v2369 = vunpack.c.l.b16 %v1601
    %v2370 = vunpack.c.l.b16 %v1602
    %v2371 = vunpack.c.l.b16 %v1603
    %v2372 = vunpack.c.l.b16 %v1604
    %v2373 = vunpack.c.l.b16 %v1605
    %v2374 = vunpack.c.l.b16 %v1606
    %v2375 = vunpack.c.l.b16 %v1607
    %v2376 = vunpack.c.l.b16 %v1608
    %v2377 = vunpack.c.l.b16 %v1609
    %v2378 = vunpack.c.l.b16 %v1610
    %v2379 = vunpack.c.l.b16 %v1611
    %v2380 = vunpack.c.l.b16 %v1612
    %v2381 = vunpack.c.l.b16 %v1613
    %v2382 = vunpack.c.l.b16 %v1614
    %v2383 = vunpack.c.l.b16 %v1615
    %v2384 = vunpack.c.l.b16 %v1616
    %v2385 = vunpack.c.l.b16 %v1617
    %v2386 = vunpack.c.l.b16 %v1618
    %v2387 = vunpack.c.l.b16 %v1619
    %v2388 = vunpack.c.l.b16 %v1620
    %v2389 = vunpack.c.l.b16 %v1621
    %v2390 = vunpack.c.l.b16 %v1622
    %v2391 = vunpack.c.l.b16 %v1623
    %v2392 = vunpack.c.l.b16 %v1624
    %v2393 = vunpack.c.l.b16 %v1625
    %v2394 = vunpack.c.l.b16 %v1626
    %v2395 = vunpack.c.l.b16 %v1627
    %v2396 = vunpack.c.l.b16 %v1628
    %v2397 = vunpack.c.l.b16 %v1629
    %v2398 = vunpack.c.l.b16 %v1630
    %v2399 = vunpack.c.l.b16 %v1631
    %v2400 = vunpack.c.l.b16 %v1632
    %v2401 = vunpack.c.l.b16 %v1633
    %v2402 = vunpack.c.l.b16 %v1634
    %v2403 = vunpack.c.l.b16 %v1635
    %v2404 = vunpack.c.l.b16 %v1636
    %v2405 = vunpack.c.l.b16 %v1637
    %v2406 = vunpack.c.l.b16 %v1638
    %v2407 = vunpack.c.l.b16 %v1639
    %v2408 = vunpack.c.l.b16 %v1640
    %v2409 = vunpack.c.l.b16 %v1641
    %v2410 = vunpack.c.l.b16 %v1642
    %v2411 = vunpack.c.l.b16 %v1643
    %v2412 = vunpack.c.l.b16 %v1644
    %v2413 = vunpack.c.l.b16 %v1645
    %v2414 = vunpack.c.l.b16 %v1646
    %v2415 = vunpack.c.l.b16 %v1647
    %v2416 = vunpack.c.l.b16 %v1648
    %v2417 = vunpack.c.l.b16 %v1649
    %v2418 = vunpack.c.l.b16 %v1650
    %v2419 = vunpack.c.l.b16 %v1651
    %v2420 = vunpack.c.l.b16 %v1652
    %v2421 = vunpack.c.l.b16 %v1653
    %v2422 = vunpack.c.l.b16 %v1654
    %v2423 = vunpack.c.l.b16 %v1655
    %v2424 = vunpack.c.l.b16 %v1656
    %v2425 = vunpack.c.l.b16 %v1657
    %v2426 = vunpack.c.l.b16 %v1658
    %v2427 = vunpack.c.l.b16 %v1659
    %v2428 = vunpack.c.l.b16 %v1660
    %v2429 = vunpack.c.l.b16 %v1661
    %v2430 = vunpack.c.l.b16 %v1662
    %v2431 = vunpack.c.l.b16 %v1663
    %v2432 = vunpack.c.l.b16 %v1664
    %v2433 = vunpack.c.l.b16 %v1665
    %v2434 = vunpack.c.l.b16 %v1666
    %v2435 = vunpack.c.l.b16 %v1667
    %v2436 = vunpack.c.l.b16 %v1668
    %v2437 = vunpack.c.l.b16 %v1669
    %v2438 = vunpack.c.l.b16 %v1670
    %v2439 = vunpack.c.l.b16 %v1671
    %v2440 = vunpack.c.l.b16 %v1672
    %v2441 = vunpack.c.l.b16 %v1673
    %v2442 = vunpack.c.l.b16 %v1674
    %v2443 = vunpack.c.l.b16 %v1675
    %v2444 = vunpack.c.l.b16 %v1676
    %v2445 = vunpack.c.l.b16 %v1677
    %v2446 = vunpack.c.l.b16 %v1678
    %v2447 = vunpack.c.l.b16 %v1679
    %v2448 = vunpack.c.l.b16 %v1680
    %v2449 = vunpack.c.l.b16 %v1681
    %v2450 = vunpack.c.l.b16 %v1682
    %v2451 = vunpack.c.l.b16 %v1683
    %v2452 = vunpack.c.l.b16 %v1684
    %v2453 = vunpack.c.l.b16 %v1685
    %v2454 = vunpack.c.l.b16 %v1686
    %v2455 = vunpack.c.l.b16 %v1687
    %v2456 = vunpack.c.l.b16 %v1688
    %v2457 = vunpack.c.l.b16 %v1689
    %v2458 = vunpack.c.l.b16 %v1690
    %v2459 = vunpack.c.l.b16 %v1691
    %v2460 = vunpack.c.l.b16 %v1692
    %v2461 = vunpack.c.l.b16 %v1693
    %v2462 = vunpack.c.l.b16 %v1694
    %v2463 = vunpack.c.l.b16 %v1695
    %v2464 = vunpack.c.l.b16 %v1696
    %v2465 = vunpack.c.l.b16 %v1697
    %v2466 = vunpack.c.l.b16 %v1698
    %v2467 = vunpack.c.l.b16 %v1699
    %v2468 = vunpack.c.l.b16 %v1700
    %v2469 = vunpack.c.l.b16 %v1701
    %v2470 = vunpack.c.l.b16 %v1702
    %v2471 = vunpack.c.l.b16 %v1703
    %v2472 = vunpack.c.l.b16 %v1704
    %v2473 = vunpack.c.l.b16 %v1705
    %v2474 = vunpack.c.l.b16 %v1706
    %v2475 = vunpack.c.l.b16 %v1707
    %v2476 = vunpack.c.l.b16 %v1708
    %v2477 = vunpack.c.l.b16 %v1709
    %v2478 = vunpack.c.l.b16 %v1710
    %v2479 = vunpack.c.l.b16 %v1711
    %v2480 = vunpack.c.l.b16 %v1712
    %v2481 = vunpack.c.l.b16 %v1713
    %v2482 = vunpack.c.l.b16 %v1714
    %v2483 = vunpack.c.l.b16 %v1715
    %v2484 = vunpack.c.l.b16 %v1716
    %v2485 = vunpack.c.l.b16 %v1717
    %v2486 = vunpack.c.l.b16 %v1718
    %v2487 = vunpack.c.l.b16 %v1719
    %v2488 = vunpack.c.l.b16 %v1720
    %v2489 = vunpack.c.l.b16 %v1721
    %v2490 = vunpack.c.l.b16 %v1722
    %v2491 = vunpack.c.l.b16 %v1723
    %v2492 = vunpack.c.l.b16 %v1724
    %v2493 = vunpack.c.l.b16 %v1725
    %v2494 = vunpack.c.l.b16 %v1726
    %v2495 = vunpack.c.l.b16 %v1727
    %v2496 = vunpack.c.l.b16 %v1728
    %v2497 = vunpack.c.l.b16 %v1729
    %v2498 = vunpack.c.l.b16 %v1730
    %v2499 = vunpack.c.l.b16 %v1731
    %v2500 = vunpack.c.l.b16 %v1732
    %v2501 = vunpack.c.l.b16 %v1733
    %v2502 = vunpack.c.l.b16 %v1734
    %v2503 = vunpack.c.l.b16 %v1735
    %v2504 = vunpack.c.l.b16 %v1736
    %v2505 = vunpack.c.l.b16 %v1737
    %v2506 = vunpack.c.l.b16 %v1738
    %v2507 = vunpack.c.l.b16 %v1739
    %v2508 = vunpack.c.l.b16 %v1740
    %v2509 = vunpack.c.l.b16 %v1741
    %v2510 = vunpack.c.l.b16 %v1742
    %v2511 = vunpack.c.l.b16 %v1743
    %v2512 = vunpack.c.l.b16 %v1744
    %v2513 = vunpack.c.l.b16 %v1745
    %v2514 = vunpack.c.l.b16 %v1746
    %v2515 = vunpack.c.l.b16 %v1747
    %v2516 = vunpack.c.l.b16 %v1748
    %v2517 = vunpack.c.l.b16 %v1749
    %v2518 = vunpack.c.l.b16 %v1750
    %v2519 = vunpack.c.l.b16 %v1751
    %v2520 = vunpack.c.l.b16 %v1752
    %v2521 = vunpack.c.l.b16 %v1753
    %v2522 = vunpack.c.l.b16 %v1754
    %v2523 = vunpack.c.l.b16 %v1755
    %v2524 = vunpack.c.l.b16 %v1756
    %v2525 = vunpack.c.l.b16 %v1757
    %v2526 = vunpack.c.l.b16 %v1758
    %v2527 = vunpack.c.l.b16 %v1759
    %v2528 = vunpack.c.l.b16 %v1760
    %v2529 = vunpack.c.l.b16 %v1761
    %v2530 = vunpack.c.l.b16 %v1762
    %v2531 = vunpack.c.l.b16 %v1763
    %v2532 = vunpack.c.l.b16 %v1764
    %v2533 = vunpack.c.l.b16 %v1765
    %v2534 = vunpack.c.l.b16 %v1766
    %v2535 = vunpack.c.l.b16 %v1767
    %v2536 = vunpack.c.l.b16 %v1768
    %v2537 = vunpack.c.l.b16 %v1769
    %v2538 = vunpack.c.l.b16 %v1770
    %v2539 = vunpack.c.l.b16 %v1771
    %v2540 = vunpack.c.l.b16 %v1772
    %v2541 = vunpack.c.l.b16 %v1773
    %v2542 = vunpack.c.l.b16 %v1774
    %v2543 = vunpack.c.l.b16 %v1775
    %v2544 = vunpack.c.l.b16 %v1776
    %v2545 = vunpack.c.l.b16 %v1777
    %v2546 = vunpack.c.l.b16 %v1778
    %v2547 = vunpack.c.l.b16 %v1779
    %v2548 = vunpack.c.l.b16 %v1780
    %v2549 = vunpack.c.l.b16 %v1781
    %v2550 = vunpack.c.l.b16 %v1782
    %v2551 = vunpack.c.l.b16 %v1783
    %v2552 = vunpack.c.l.b16 %v1784
    %v2553 = vunpack.c.l.b16 %v1785
    %v2554 = vunpack.c.l.b16 %v1786
    %v2555 = vunpack.c.l.b16 %v1787
    %v2556 = vunpack.c.l.b16 %v1788
    %v2557 = vunpack.c.l.b16 %v1789
    %v2558 = vunpack.c.l.b16 %v1790
    %v2559 = vunpack.c.l.b16 %v1791
    %v2560 = vunpack.c.l.b16 %v1792
    %v2561 = vunpack.c.l.b16 %v1793
    %v2562 = vunpack.c.l.b16 %v1794
    %v2563 = vunpack.c.l.b16 %v1795
    %v2564 = vunpack.c.l.b16 %v1796
    %v2565 = vunpack.c.l.b16 %v1797
    %v2566 = vunpack.c.l.b16 %v1798
    %v2567 = vunpack.c.l.b16 %v1799
    %v2568 = vunpack.c.l.b16 %v1800
    %v2569 = vunpack.c.l.b16 %v1801
    %v2570 = vunpack.c.l.b16 %v1802
    %v2571 = vunpack.c.l.b16 %v1803
    %v2572 = vunpack.c.l.b16 %v1804
    %v2573 = vunpack.c.l.b16 %v1805
    %v2574 = vunpack.c.l.b16 %v1806
    %v2575 = vunpack.c.l.b16 %v1807
    %v2576 = vunpack.c.l.b16 %v1808
    %v2577 = vunpack.c.l.b16 %v1809
    %v2578 = vunpack.c.l.b16 %v1810
    %v2579 = vunpack.c.l.b16 %v1811
    %v2580 = vunpack.c.l.b16 %v1812
    %v2581 = vunpack.c.l.b16 %v1813
    %v2582 = vunpack.c.l.b16 %v1814
    %v2583 = vunpack.c.l.b16 %v1815
    %v2584 = vunpack.c.l.b16 %v1816
    %v2585 = vunpack.c.l.b16 %v1817
    %v2586 = vunpack.c.l.b16 %v1818
    %v2587 = vunpack.c.l.b16 %v1819
    %v2588 = vunpack.c.l.b16 %v1820
    %v2589 = vunpack.c.l.b16 %v1821
    %v2590 = vunpack.c.l.b16 %v1822
    %v2591 = vunpack.c.l.b16 %v1823
    %v2592 = vunpack.c.l.b16 %v1824
    %v2593 = vunpack.c.l.b16 %v1825
    %v2594 = vunpack.c.l.b16 %v1826
    %v2595 = vunpack.c.l.b16 %v1827
    %v2596 = vunpack.c.l.b16 %v1828
    %v2597 = vunpack.c.l.b16 %v1829
    %v2598 = vunpack.c.l.b16 %v1830
    %v2599 = vunpack.c.l.b16 %v1831
    %v2600 = vunpack.c.l.b16 %v1832
    %v2601 = vunpack.c.l.b16 %v1833
    %v2602 = vunpack.c.l.b16 %v1834
    %v2603 = vunpack.c.l.b16 %v1835
    %v2604 = vunpack.c.l.b16 %v1836
    %v2605 = vunpack.c.l.b16 %v1837
    %v2606 = vunpack.c.l.b16 %v1838
    %v2607 = vunpack.c.l.b16 %v1839
    %v2608 = vunpack.c.l.b16 %v1840
    %v2609 = vunpack.c.l.b16 %v1841
    %v2610 = vunpack.c.l.b16 %v1842
    %v2611 = vunpack.c.l.b16 %v1843
    %v2612 = vpack.c.b16 %v2229, %v2228
    %v2613 = vpack.c.b16 %v2231, %v2230
    %v2614 = vpack.c.b16 %v2233, %v2232
    %v2615 = vpack.c.b16 %v2235, %v2234
    %v2616 = vpack.c.b16 %v2237, %v2236
    %v2617 = vpack.c.b16 %v2239, %v2238
    %v2618 = vpack.c.b16 %v2241, %v2240
    %v2619 = vpack.c.b16 %v2243, %v2242
    %v2620 = vpack.c.b16 %v2245, %v2244
    %v2621 = vpack.c.b16 %v2247, %v2246
    %v2622 = vpack.c.b16 %v2249, %v2248
    %v2623 = vpack.c.b16 %v2251, %v2250
    %v2624 = vpack.c.b16 %v2253, %v2252
    %v2625 = vpack.c.b16 %v2255, %v2254
    %v2626 = vpack.c.b16 %v2257, %v2256
    %v2627 = vpack.c.b16 %v2259, %v2258
    %v2628 = vpack.c.b16 %v2261, %v2260
    %v2629 = vpack.c.b16 %v2263, %v2262
    %v2630 = vpack.c.b16 %v2265, %v2264
    %v2631 = vpack.c.b16 %v2267, %v2266
    %v2632 = vpack.c.b16 %v2269, %v2268
    %v2633 = vpack.c.b16 %v2271, %v2270
    %v2634 = vpack.c.b16 %v2273, %v2272
    %v2635 = vpack.c.b16 %v2275, %v2274
    %v2636 = vpack.c.b16 %v2277, %v2276
    %v2637 = vpack.c.b16 %v2279, %v2278
    %v2638 = vpack.c.b16 %v2281, %v2280
    %v2639 = vpack.c.b16 %v2283, %v2282
    %v2640 = vpack.c.b16 %v2285, %v2284
    %v2641 = vpack.c.b16 %v2287, %v2286
    %v2642 = vpack.c.b16 %v2289, %v2288
    %v2643 = vpack.c.b16 %v2291, %v2290
    %v2644 = vpack.c.b16 %v2293, %v2292
    %v2645 = vpack.c.b16 %v2295, %v2294
    %v2646 = vpack.c.b16 %v2297, %v2296
    %v2647 = vpack.c.b16 %v2299, %v2298
    %v2648 = vpack.c.b16 %v2301, %v2300
    %v2649 = vpack.c.b16 %v2303, %v2302
    %v2650 = vpack.c.b16 %v2305, %v2304
    %v2651 = vpack.c.b16 %v2307, %v2306
    %v2652 = vpack.c.b16 %v2309, %v2308
    %v2653 = vpack.c.b16 %v2311, %v2310
    %v2654 = vpack.c.b16 %v2313, %v2312
    %v2655 = vpack.c.b16 %v2315, %v2314
    %v2656 = vpack.c.b16 %v2317, %v2316
    %v2657 = vpack.c.b16 %v2319, %v2318
    %v2658 = vpack.c.b16 %v2321, %v2320
    %v2659 = vpack.c.b16 %v2323, %v2322
    %v2660 = vpack.c.b16 %v2325, %v2324
    %v2661 = vpack.c.b16 %v2327, %v2326
    %v2662 = vpack.c.b16 %v2329, %v2328
    %v2663 = vpack.c.b16 %v2331, %v2330
    %v2664 = vpack.c.b16 %v2333, %v2332
    %v2665 = vpack.c.b16 %v2335, %v2334
    %v2666 = vpack.c.b16 %v2337, %v2336
    %v2667 = vpack.c.b16 %v2339, %v2338
    %v2668 = vpack.c.b16 %v2341, %v2340
    %v2669 = vpack.c.b16 %v2343, %v2342
    %v2670 = vpack.c.b16 %v2345, %v2344
    %v2671 = vpack.c.b16 %v2347, %v2346
    %v2672 = vpack.c.b16 %v2349, %v2348
    %v2673 = vpack.c.b16 %v2351, %v2350
    %v2674 = vpack.c.b16 %v2353, %v2352
    %v2675 = vpack.c.b16 %v2355, %v2354
    %v2676 = vpack.c.b16 %v2357, %v2356
    %v2677 = vpack.c.b16 %v2359, %v2358
    %v2678 = vpack.c.b16 %v2361, %v2360
    %v2679 = vpack.c.b16 %v2363, %v2362
    %v2680 = vpack.c.b16 %v2365, %v2364
    %v2681 = vpack.c.b16 %v2367, %v2366
    %v2682 = vpack.c.b16 %v2369, %v2368
    %v2683 = vpack.c.b16 %v2371, %v2370
    %v2684 = vpack.c.b16 %v2373, %v2372
    %v2685 = vpack.c.b16 %v2375, %v2374
    %v2686 = vpack.c.b16 %v2377, %v2376
    %v2687 = vpack.c.b16 %v2379, %v2378
    %v2688 = vpack.c.b16 %v2381, %v2380
    %v2689 = vpack.c.b16 %v2383, %v2382
    %v2690 = vpack.c.b16 %v2385, %v2384
    %v2691 = vpack.c.b16 %v2387, %v2386
    %v2692 = vpack.c.b16 %v2389, %v2388
    %v2693 = vpack.c.b16 %v2391, %v2390
    %v2694 = vpack.c.b16 %v2393, %v2392
    %v2695 = vpack.c.b16 %v2395, %v2394
    %v2696 = vpack.c.b16 %v2397, %v2396
    %v2697 = vpack.c.b16 %v2399, %v2398
    %v2698 = vpack.c.b16 %v2401, %v2400
    %v2699 = vpack.c.b16 %v2403, %v2402
    %v2700 = vpack.c.b16 %v2405, %v2404
    %v2701 = vpack.c.b16 %v2407, %v2406
    %v2702 = vpack.c.b16 %v2409, %v2408
    %v2703 = vpack.c.b16 %v2411, %v2410
    %v2704 = vpack.c.b16 %v2413, %v2412
    %v2705 = vpack.c.b16 %v2415, %v2414
    %v2706 = vpack.c.b16 %v2417, %v2416
    %v2707 = vpack.c.b16 %v2419, %v2418
    %v2708 = vpack.c.b16 %v2421, %v2420
    %v2709 = vpack.c.b16 %v2423, %v2422
    %v2710 = vpack.c.b16 %v2425, %v2424
    %v2711 = vpack.c.b16 %v2427, %v2426
    %v2712 = vpack.c.b16 %v2429, %v2428
    %v2713 = vpack.c.b16 %v2431, %v2430
    %v2714 = vpack.c.b16 %v2433, %v2432
    %v2715 = vpack.c.b16 %v2435, %v2434
    %v2716 = vpack.c.b16 %v2437, %v2436
    %v2717 = vpack.c.b16 %v2439, %v2438
    %v2718 = vpack.c.b16 %v2441, %v2440
    %v2719 = vpack.c.b16 %v2443, %v2442
    %v2720 = vpack.c.b16 %v2445, %v2444
    %v2721 = vpack.c.b16 %v2447, %v2446
    %v2722 = vpack.c.b16 %v2449, %v2448
    %v2723 = vpack.c.b16 %v2451, %v2450
    %v2724 = vpack.c.b16 %v2453, %v2452
    %v2725 = vpack.c.b16 %v2455, %v2454
    %v2726 = vpack.c.b16 %v2457, %v2456
    %v2727 = vpack.c.b16 %v2459, %v2458
    %v2728 = vpack.c.b16 %v2461, %v2460
    %v2729 = vpack.c.b16 %v2463, %v2462
    %v2730 = vpack.c.b16 %v2465, %v2464
    %v2731 = vpack.c.b16 %v2467, %v2466
    %v2732 = vpack.c.b16 %v2469, %v2468
    %v2733 = vpack.c.b16 %v2471, %v2470
    %v2734 = vpack.c.b16 %v2473, %v2472
    %v2735 = vpack.c.b16 %v2475, %v2474
    %v2736 = vpack.c.b16 %v2477, %v2476
    %v2737 = vpack.c.b16 %v2479, %v2478
    %v2738 = vpack.c.b16 %v2481, %v2480
    %v2739 = vpack.c.b16 %v2483, %v2482
    %v2740 = vpack.c.b16 %v2485, %v2484
    %v2741 = vpack.c.b16 %v2487, %v2486
    %v2742 = vpack.c.b16 %v2489, %v2488
    %v2743 = vpack.c.b16 %v2491, %v2490
    %v2744 = vpack.c.b16 %v2493, %v2492
    %v2745 = vpack.c.b16 %v2495, %v2494
    %v2746 = vpack.c.b16 %v2497, %v2496
    %v2747 = vpack.c.b16 %v2499, %v2498
    %v2748 = vpack.c.b16 %v2501, %v2500
    %v2749 = vpack.c.b16 %v2503, %v2502
    %v2750 = vpack.c.b16 %v2505, %v2504
    %v2751 = vpack.c.b16 %v2507, %v2506
    %v2752 = vpack.c.b16 %v2509, %v2508
    %v2753 = vpack.c.b16 %v2511, %v2510
    %v2754 = vpack.c.b16 %v2513, %v2512
    %v2755 = vpack.c.b16 %v2515, %v2514
    %v2756 = vpack.c.b16 %v2517, %v2516
    %v2757 = vpack.c.b16 %v2519, %v2518
    %v2758 = vpack.c.b16 %v2521, %v2520
    %v2759 = vpack.c.b16 %v2523, %v2522
    %v2760 = vpack.c.b16 %v2525, %v2524
    %v2761 = vpack.c.b16 %v2527, %v2526
    %v2762 = vpack.c.b16 %v2529, %v2528
    %v2763 = vpack.c.b16 %v2531, %v2530
    %v2764 = vpack.c.b16 %v2533, %v2532
    %v2765 = vpack.c.b16 %v2535, %v2534
    %v2766 = vpack.c.b16 %v2537, %v2536
    %v2767 = vpack.c.b16 %v2539, %v2538
    %v2768 = vpack.c.b16 %v2541, %v2540
    %v2769 = vpack.c.b16 %v2543, %v2542
    %v2770 = vpack.c.b16 %v2545, %v2544
    %v2771 = vpack.c.b16 %v2547, %v2546
    %v2772 = vpack.c.b16 %v2549, %v2548
    %v2773 = vpack.c.b16 %v2551, %v2550
    %v2774 = vpack.c.b16 %v2553, %v2552
    %v2775 = vpack.c.b16 %v2555, %v2554
    %v2776 = vpack.c.b16 %v2557, %v2556
    %v2777 = vpack.c.b16 %v2559, %v2558
    %v2778 = vpack.c.b16 %v2561, %v2560
    %v2779 = vpack.c.b16 %v2563, %v2562
    %v2780 = vpack.c.b16 %v2565, %v2564
    %v2781 = vpack.c.b16 %v2567, %v2566
    %v2782 = vpack.c.b16 %v2569, %v2568
    %v2783 = vpack.c.b16 %v2571, %v2570
    %v2784 = vpack.c.b16 %v2573, %v2572
    %v2785 = vpack.c.b16 %v2575, %v2574
    %v2786 = vpack.c.b16 %v2577, %v2576
    %v2787 = vpack.c.b16 %v2579, %v2578
    %v2788 = vpack.c.b16 %v2581, %v2580
    %v2789 = vpack.c.b16 %v2583, %v2582
    %v2790 = vpack.c.b16 %v2585, %v2584
    %v2791 = vpack.c.b16 %v2587, %v2586
    %v2792 = vpack.c.b16 %v2589, %v2588
    %v2793 = vpack.c.b16 %v2591, %v2590
    %v2794 = vpack.c.b16 %v2593, %v2592
    %v2795 = vpack.c.b16 %v2595, %v2594
    %v2796 = vpack.c.b16 %v2597, %v2596
    %v2797 = vpack.c.b16 %v2599, %v2598
    %v2798 = vpack.c.b16 %v2601, %v2600
    %v2799 = vpack.c.b16 %v2603, %v2602
    %v2800 = vpack.c.b16 %v2605, %v2604
    %v2801 = vpack.c.b16 %v2607, %v2606
    %v2802 = vpack.c.b16 %v2609, %v2608
    %v2803 = vpack.c.b16 %v2611, %v2610
    %2996 = vmatpush.bf16.msra.mxu0 %v2619
    %2997 = vmatpush.bf16.msra.mxu0 %v2618
    %2998 = vmatpush.bf16.msra.mxu0 %v2617
    %2999 = vmatpush.bf16.msra.mxu0 %v2616
    %3000 = vmatpush.bf16.msra.mxu0 %v2615
    %3001 = vmatpush.bf16.msra.mxu0 %v2614
    %3002 = vmatpush.bf16.msra.mxu0 %v2613
    %3003 = vmatpush.bf16.msra.mxu0 %v2612
    %3004 = vmatmul.bf16.gmra.mxu0 %v1268
    %v3005 = vpop.f32.mrf.mxu0
    %v3006 = vadd.f32 0.0, %v3005
    %v3007 = vpop.f32.mrf.mxu0
    %v3008 = vadd.f32 0.0, %v3007
    %3009 = vmatmul.bf16.gmra.mxu0 %v1292
    %v3010 = vpop.f32.mrf.mxu0
    %v3011 = vadd.f32 0.0, %v3010
    %v3012 = vpop.f32.mrf.mxu0
    %v3013 = vadd.f32 0.0, %v3012
    %3014 = vmatmul.bf16.gmra.mxu0 %v1316
    %v3015 = vpop.f32.mrf.mxu0
    %v3016 = vadd.f32 0.0, %v3015
    %v3017 = vpop.f32.mrf.mxu0
    %v3018 = vadd.f32 0.0, %v3017
    %3019 = vmatmul.bf16.gmra.mxu0 %v1340
    %v3020 = vpop.f32.mrf.mxu0
    %v3021 = vadd.f32 0.0, %v3020
    %v3022 = vpop.f32.mrf.mxu0
    %v3023 = vadd.f32 0.0, %v3022
    %3024 = vmatmul.bf16.gmra.mxu0 %v1364
    %v3025 = vpop.f32.mrf.mxu0
    %v3026 = vadd.f32 0.0, %v3025
    %v3027 = vpop.f32.mrf.mxu0
    %v3028 = vadd.f32 0.0, %v3027
    %3029 = vmatmul.bf16.gmra.mxu0 %v1388
    %v3030 = vpop.f32.mrf.mxu0
    %v3031 = vadd.f32 0.0, %v3030
    %v3032 = vpop.f32.mrf.mxu0
    %v3033 = vadd.f32 0.0, %v3032
    %3034 = vmatmul.bf16.gmra.mxu0 %v1412
    %v3035 = vpop.f32.mrf.mxu0
    %v3036 = vadd.f32 0.0, %v3035
    %v3037 = vpop.f32.mrf.mxu0
    %v3038 = vadd.f32 0.0, %v3037
    %3039 = vmatmul.bf16.gmra.mxu0 %v1436
    %v3040 = vpop.f32.mrf.mxu0
    %v3041 = vadd.f32 0.0, %v3040
    %v3042 = vpop.f32.mrf.mxu0
    %v3043 = vadd.f32 0.0, %v3042
    %3044 = vdwg.mxu0
    %3045 = vmatpush.bf16.msra.mxu0 %v2627
    %3046 = vmatpush.bf16.msra.mxu0 %v2626
    %3047 = vmatpush.bf16.msra.mxu0 %v2625
    %3048 = vmatpush.bf16.msra.mxu0 %v2624
    %3049 = vmatpush.bf16.msra.mxu0 %v2623
    %3050 = vmatpush.bf16.msra.mxu0 %v2622
    %3051 = vmatpush.bf16.msra.mxu0 %v2621
    %3052 = vmatpush.bf16.msra.mxu0 %v2620
    %3053 = vmatmul.bf16.gmra.mxu0 %v1269
    %v3054 = vpop.f32.mrf.mxu0
    %v3055 = vadd.f32 %v3006, %v3054
    %v3056 = vpop.f32.mrf.mxu0
    %v3057 = vadd.f32 %v3008, %v3056
    %3058 = vmatmul.bf16.gmra.mxu0 %v1293
    %v3059 = vpop.f32.mrf.mxu0
    %v3060 = vadd.f32 %v3011, %v3059
    %v3061 = vpop.f32.mrf.mxu0
    %v3062 = vadd.f32 %v3013, %v3061
    %3063 = vmatmul.bf16.gmra.mxu0 %v1317
    %v3064 = vpop.f32.mrf.mxu0
    %v3065 = vadd.f32 %v3016, %v3064
    %v3066 = vpop.f32.mrf.mxu0
    %v3067 = vadd.f32 %v3018, %v3066
    %3068 = vmatmul.bf16.gmra.mxu0 %v1341
    %v3069 = vpop.f32.mrf.mxu0
    %v3070 = vadd.f32 %v3021, %v3069
    %v3071 = vpop.f32.mrf.mxu0
    %v3072 = vadd.f32 %v3023, %v3071
    %3073 = vmatmul.bf16.gmra.mxu0 %v1365
    %v3074 = vpop.f32.mrf.mxu0
    %v3075 = vadd.f32 %v3026, %v3074
    %v3076 = vpop.f32.mrf.mxu0
    %v3077 = vadd.f32 %v3028, %v3076
    %3078 = vmatmul.bf16.gmra.mxu0 %v1389
    %v3079 = vpop.f32.mrf.mxu0
    %v3080 = vadd.f32 %v3031, %v3079
    %v3081 = vpop.f32.mrf.mxu0
    %v3082 = vadd.f32 %v3033, %v3081
    %3083 = vmatmul.bf16.gmra.mxu0 %v1413
    %v3084 = vpop.f32.mrf.mxu0
    %v3085 = vadd.f32 %v3036, %v3084
    %v3086 = vpop.f32.mrf.mxu0
    %v3087 = vadd.f32 %v3038, %v3086
    %3088 = vmatmul.bf16.gmra.mxu0 %v1437
    %v3089 = vpop.f32.mrf.mxu0
    %v3090 = vadd.f32 %v3041, %v3089
    %v3091 = vpop.f32.mrf.mxu0
    %v3092 = vadd.f32 %v3043, %v3091
    %3093 = vdwg.mxu0
    %3094 = vmatpush.bf16.msra.mxu0 %v2635
    %3095 = vmatpush.bf16.msra.mxu0 %v2634
    %3096 = vmatpush.bf16.msra.mxu0 %v2633
    %3097 = vmatpush.bf16.msra.mxu0 %v2632
    %3098 = vmatpush.bf16.msra.mxu0 %v2631
    %3099 = vmatpush.bf16.msra.mxu0 %v2630
    %3100 = vmatpush.bf16.msra.mxu0 %v2629
    %3101 = vmatpush.bf16.msra.mxu0 %v2628
    %3102 = vmatmul.bf16.gmra.mxu0 %v1270
    %v3103 = vpop.f32.mrf.mxu0
    %v3104 = vadd.f32 %v3055, %v3103
    %v3105 = vpop.f32.mrf.mxu0
    %v3106 = vadd.f32 %v3057, %v3105
    %3107 = vmatmul.bf16.gmra.mxu0 %v1294
    %v3108 = vpop.f32.mrf.mxu0
    %v3109 = vadd.f32 %v3060, %v3108
    %v3110 = vpop.f32.mrf.mxu0
    %v3111 = vadd.f32 %v3062, %v3110
    %3112 = vmatmul.bf16.gmra.mxu0 %v1318
    %v3113 = vpop.f32.mrf.mxu0
    %v3114 = vadd.f32 %v3065, %v3113
    %v3115 = vpop.f32.mrf.mxu0
    %v3116 = vadd.f32 %v3067, %v3115
    %3117 = vmatmul.bf16.gmra.mxu0 %v1342
    %v3118 = vpop.f32.mrf.mxu0
    %v3119 = vadd.f32 %v3070, %v3118
    %v3120 = vpop.f32.mrf.mxu0
    %v3121 = vadd.f32 %v3072, %v3120
    %3122 = vmatmul.bf16.gmra.mxu0 %v1366
    %v3123 = vpop.f32.mrf.mxu0
    %v3124 = vadd.f32 %v3075, %v3123
    %v3125 = vpop.f32.mrf.mxu0
    %v3126 = vadd.f32 %v3077, %v3125
    %3127 = vmatmul.bf16.gmra.mxu0 %v1390
    %v3128 = vpop.f32.mrf.mxu0
    %v3129 = vadd.f32 %v3080, %v3128
    %v3130 = vpop.f32.mrf.mxu0
    %v3131 = vadd.f32 %v3082, %v3130
    %3132 = vmatmul.bf16.gmra.mxu0 %v1414
    %v3133 = vpop.f32.mrf.mxu0
    %v3134 = vadd.f32 %v3085, %v3133
    %v3135 = vpop.f32.mrf.mxu0
    %v3136 = vadd.f32 %v3087, %v3135
    %3137 = vmatmul.bf16.gmra.mxu0 %v1438
    %v3138 = vpop.f32.mrf.mxu0
    %v3139 = vadd.f32 %v3090, %v3138
    %v3140 = vpop.f32.mrf.mxu0
    %v3141 = vadd.f32 %v3092, %v3140
    %3142 = vdwg.mxu0
    %3143 = vmatpush.bf16.msra.mxu0 %v2643
    %3144 = vmatpush.bf16.msra.mxu0 %v2642
    %3145 = vmatpush.bf16.msra.mxu0 %v2641
    %3146 = vmatpush.bf16.msra.mxu0 %v2640
    %3147 = vmatpush.bf16.msra.mxu0 %v2639
    %3148 = vmatpush.bf16.msra.mxu0 %v2638
    %3149 = vmatpush.bf16.msra.mxu0 %v2637
    %3150 = vmatpush.bf16.msra.mxu0 %v2636
    %3151 = vmatmul.bf16.gmra.mxu0 %v1271
    %v3152 = vpop.f32.mrf.mxu0
    %v3153 = vadd.f32 %v3104, %v3152
    %v3154 = vpop.f32.mrf.mxu0
    %v3155 = vadd.f32 %v3106, %v3154
    %3156 = vmatmul.bf16.gmra.mxu0 %v1295
    %v3157 = vpop.f32.mrf.mxu0
    %v3158 = vadd.f32 %v3109, %v3157
    %v3159 = vpop.f32.mrf.mxu0
    %v3160 = vadd.f32 %v3111, %v3159
    %3161 = vmatmul.bf16.gmra.mxu0 %v1319
    %v3162 = vpop.f32.mrf.mxu0
    %v3163 = vadd.f32 %v3114, %v3162
    %v3164 = vpop.f32.mrf.mxu0
    %v3165 = vadd.f32 %v3116, %v3164
    %3166 = vmatmul.bf16.gmra.mxu0 %v1343
    %v3167 = vpop.f32.mrf.mxu0
    %v3168 = vadd.f32 %v3119, %v3167
    %v3169 = vpop.f32.mrf.mxu0
    %v3170 = vadd.f32 %v3121, %v3169
    %3171 = vmatmul.bf16.gmra.mxu0 %v1367
    %v3172 = vpop.f32.mrf.mxu0
    %v3173 = vadd.f32 %v3124, %v3172
    %v3174 = vpop.f32.mrf.mxu0
    %v3175 = vadd.f32 %v3126, %v3174
    %3176 = vmatmul.bf16.gmra.mxu0 %v1391
    %v3177 = vpop.f32.mrf.mxu0
    %v3178 = vadd.f32 %v3129, %v3177
    %v3179 = vpop.f32.mrf.mxu0
    %v3180 = vadd.f32 %v3131, %v3179
    %3181 = vmatmul.bf16.gmra.mxu0 %v1415
    %v3182 = vpop.f32.mrf.mxu0
    %v3183 = vadd.f32 %v3134, %v3182
    %v3184 = vpop.f32.mrf.mxu0
    %v3185 = vadd.f32 %v3136, %v3184
    %3186 = vmatmul.bf16.gmra.mxu0 %v1439
    %v3187 = vpop.f32.mrf.mxu0
    %v3188 = vadd.f32 %v3139, %v3187
    %v3189 = vpop.f32.mrf.mxu0
    %v3190 = vadd.f32 %v3141, %v3189
    %3191 = vdwg.mxu0
    %3192 = vmatpush.bf16.msra.mxu0 %v2651
    %3193 = vmatpush.bf16.msra.mxu0 %v2650
    %3194 = vmatpush.bf16.msra.mxu0 %v2649
    %3195 = vmatpush.bf16.msra.mxu0 %v2648
    %3196 = vmatpush.bf16.msra.mxu0 %v2647
    %3197 = vmatpush.bf16.msra.mxu0 %v2646
    %3198 = vmatpush.bf16.msra.mxu0 %v2645
    %3199 = vmatpush.bf16.msra.mxu0 %v2644
    %3200 = vmatmul.bf16.gmra.mxu0 %v1272
    %v3201 = vpop.f32.mrf.mxu0
    %v3202 = vadd.f32 %v3153, %v3201
    %v3203 = vpop.f32.mrf.mxu0
    %v3204 = vadd.f32 %v3155, %v3203
    %3205 = vmatmul.bf16.gmra.mxu0 %v1296
    %v3206 = vpop.f32.mrf.mxu0
    %v3207 = vadd.f32 %v3158, %v3206
    %v3208 = vpop.f32.mrf.mxu0
    %v3209 = vadd.f32 %v3160, %v3208
    %3210 = vmatmul.bf16.gmra.mxu0 %v1320
    %v3211 = vpop.f32.mrf.mxu0
    %v3212 = vadd.f32 %v3163, %v3211
    %v3213 = vpop.f32.mrf.mxu0
    %v3214 = vadd.f32 %v3165, %v3213
    %3215 = vmatmul.bf16.gmra.mxu0 %v1344
    %v3216 = vpop.f32.mrf.mxu0
    %v3217 = vadd.f32 %v3168, %v3216
    %v3218 = vpop.f32.mrf.mxu0
    %v3219 = vadd.f32 %v3170, %v3218
    %3220 = vmatmul.bf16.gmra.mxu0 %v1368
    %v3221 = vpop.f32.mrf.mxu0
    %v3222 = vadd.f32 %v3173, %v3221
    %v3223 = vpop.f32.mrf.mxu0
    %v3224 = vadd.f32 %v3175, %v3223
    %3225 = vmatmul.bf16.gmra.mxu0 %v1392
    %v3226 = vpop.f32.mrf.mxu0
    %v3227 = vadd.f32 %v3178, %v3226
    %v3228 = vpop.f32.mrf.mxu0
    %v3229 = vadd.f32 %v3180, %v3228
    %3230 = vmatmul.bf16.gmra.mxu0 %v1416
    %v3231 = vpop.f32.mrf.mxu0
    %v3232 = vadd.f32 %v3183, %v3231
    %v3233 = vpop.f32.mrf.mxu0
    %v3234 = vadd.f32 %v3185, %v3233
    %3235 = vmatmul.bf16.gmra.mxu0 %v1440
    %v3236 = vpop.f32.mrf.mxu0
    %v3237 = vadd.f32 %v3188, %v3236
    %v3238 = vpop.f32.mrf.mxu0
    %v3239 = vadd.f32 %v3190, %v3238
    %3240 = vdwg.mxu0
    %3241 = vmatpush.bf16.msra.mxu0 %v2659
    %3242 = vmatpush.bf16.msra.mxu0 %v2658
    %3243 = vmatpush.bf16.msra.mxu0 %v2657
    %3244 = vmatpush.bf16.msra.mxu0 %v2656
    %3245 = vmatpush.bf16.msra.mxu0 %v2655
    %3246 = vmatpush.bf16.msra.mxu0 %v2654
    %3247 = vmatpush.bf16.msra.mxu0 %v2653
    %3248 = vmatpush.bf16.msra.mxu0 %v2652
    %3249 = vmatmul.bf16.gmra.mxu0 %v1273
    %v3250 = vpop.f32.mrf.mxu0
    %v3251 = vadd.f32 %v3202, %v3250
    %v3252 = vpop.f32.mrf.mxu0
    %v3253 = vadd.f32 %v3204, %v3252
    %3254 = vmatmul.bf16.gmra.mxu0 %v1297
    %v3255 = vpop.f32.mrf.mxu0
    %v3256 = vadd.f32 %v3207, %v3255
    %v3257 = vpop.f32.mrf.mxu0
    %v3258 = vadd.f32 %v3209, %v3257
    %3259 = vmatmul.bf16.gmra.mxu0 %v1321
    %v3260 = vpop.f32.mrf.mxu0
    %v3261 = vadd.f32 %v3212, %v3260
    %v3262 = vpop.f32.mrf.mxu0
    %v3263 = vadd.f32 %v3214, %v3262
    %3264 = vmatmul.bf16.gmra.mxu0 %v1345
    %v3265 = vpop.f32.mrf.mxu0
    %v3266 = vadd.f32 %v3217, %v3265
    %v3267 = vpop.f32.mrf.mxu0
    %v3268 = vadd.f32 %v3219, %v3267
    %3269 = vmatmul.bf16.gmra.mxu0 %v1369
    %v3270 = vpop.f32.mrf.mxu0
    %v3271 = vadd.f32 %v3222, %v3270
    %v3272 = vpop.f32.mrf.mxu0
    %v3273 = vadd.f32 %v3224, %v3272
    %3274 = vmatmul.bf16.gmra.mxu0 %v1393
    %v3275 = vpop.f32.mrf.mxu0
    %v3276 = vadd.f32 %v3227, %v3275
    %v3277 = vpop.f32.mrf.mxu0
    %v3278 = vadd.f32 %v3229, %v3277
    %3279 = vmatmul.bf16.gmra.mxu0 %v1417
    %v3280 = vpop.f32.mrf.mxu0
    %v3281 = vadd.f32 %v3232, %v3280
    %v3282 = vpop.f32.mrf.mxu0
    %v3283 = vadd.f32 %v3234, %v3282
    %3284 = vmatmul.bf16.gmra.mxu0 %v1441
    %v3285 = vpop.f32.mrf.mxu0
    %v3286 = vadd.f32 %v3237, %v3285
    %v3287 = vpop.f32.mrf.mxu0
    %v3288 = vadd.f32 %v3239, %v3287
    %3289 = vdwg.mxu0
    %3290 = vmatpush.bf16.msra.mxu0 %v2667
    %3291 = vmatpush.bf16.msra.mxu0 %v2666
    %3292 = vmatpush.bf16.msra.mxu0 %v2665
    %3293 = vmatpush.bf16.msra.mxu0 %v2664
    %3294 = vmatpush.bf16.msra.mxu0 %v2663
    %3295 = vmatpush.bf16.msra.mxu0 %v2662
    %3296 = vmatpush.bf16.msra.mxu0 %v2661
    %3297 = vmatpush.bf16.msra.mxu0 %v2660
    %3298 = vmatmul.bf16.gmra.mxu0 %v1274
    %v3299 = vpop.f32.mrf.mxu0
    %v3300 = vadd.f32 %v3251, %v3299
    %v3301 = vpop.f32.mrf.mxu0
    %v3302 = vadd.f32 %v3253, %v3301
    %3303 = vmatmul.bf16.gmra.mxu0 %v1298
    %v3304 = vpop.f32.mrf.mxu0
    %v3305 = vadd.f32 %v3256, %v3304
    %v3306 = vpop.f32.mrf.mxu0
    %v3307 = vadd.f32 %v3258, %v3306
    %3308 = vmatmul.bf16.gmra.mxu0 %v1322
    %v3309 = vpop.f32.mrf.mxu0
    %v3310 = vadd.f32 %v3261, %v3309
    %v3311 = vpop.f32.mrf.mxu0
    %v3312 = vadd.f32 %v3263, %v3311
    %3313 = vmatmul.bf16.gmra.mxu0 %v1346
    %v3314 = vpop.f32.mrf.mxu0
    %v3315 = vadd.f32 %v3266, %v3314
    %v3316 = vpop.f32.mrf.mxu0
    %v3317 = vadd.f32 %v3268, %v3316
    %3318 = vmatmul.bf16.gmra.mxu0 %v1370
    %v3319 = vpop.f32.mrf.mxu0
    %v3320 = vadd.f32 %v3271, %v3319
    %v3321 = vpop.f32.mrf.mxu0
    %v3322 = vadd.f32 %v3273, %v3321
    %3323 = vmatmul.bf16.gmra.mxu0 %v1394
    %v3324 = vpop.f32.mrf.mxu0
    %v3325 = vadd.f32 %v3276, %v3324
    %v3326 = vpop.f32.mrf.mxu0
    %v3327 = vadd.f32 %v3278, %v3326
    %3328 = vmatmul.bf16.gmra.mxu0 %v1418
    %v3329 = vpop.f32.mrf.mxu0
    %v3330 = vadd.f32 %v3281, %v3329
    %v3331 = vpop.f32.mrf.mxu0
    %v3332 = vadd.f32 %v3283, %v3331
    %3333 = vmatmul.bf16.gmra.mxu0 %v1442
    %v3334 = vpop.f32.mrf.mxu0
    %v3335 = vadd.f32 %v3286, %v3334
    %v3336 = vpop.f32.mrf.mxu0
    %v3337 = vadd.f32 %v3288, %v3336
    %3338 = vdwg.mxu0
    %3339 = vmatpush.bf16.msra.mxu0 %v2675
    %3340 = vmatpush.bf16.msra.mxu0 %v2674
    %3341 = vmatpush.bf16.msra.mxu0 %v2673
    %3342 = vmatpush.bf16.msra.mxu0 %v2672
    %3343 = vmatpush.bf16.msra.mxu0 %v2671
    %3344 = vmatpush.bf16.msra.mxu0 %v2670
    %3345 = vmatpush.bf16.msra.mxu0 %v2669
    %3346 = vmatpush.bf16.msra.mxu0 %v2668
    %3347 = vmatmul.bf16.gmra.mxu0 %v1275
    %v3348 = vpop.f32.mrf.mxu0
    %v3349 = vadd.f32 %v3300, %v3348
    %v3350 = vpop.f32.mrf.mxu0
    %v3351 = vadd.f32 %v3302, %v3350
    %3352 = vmatmul.bf16.gmra.mxu0 %v1299
    %v3353 = vpop.f32.mrf.mxu0
    %v3354 = vadd.f32 %v3305, %v3353
    %v3355 = vpop.f32.mrf.mxu0
    %v3356 = vadd.f32 %v3307, %v3355
    %3357 = vmatmul.bf16.gmra.mxu0 %v1323
    %v3358 = vpop.f32.mrf.mxu0
    %v3359 = vadd.f32 %v3310, %v3358
    %v3360 = vpop.f32.mrf.mxu0
    %v3361 = vadd.f32 %v3312, %v3360
    %3362 = vmatmul.bf16.gmra.mxu0 %v1347
    %v3363 = vpop.f32.mrf.mxu0
    %v3364 = vadd.f32 %v3315, %v3363
    %v3365 = vpop.f32.mrf.mxu0
    %v3366 = vadd.f32 %v3317, %v3365
    %3367 = vmatmul.bf16.gmra.mxu0 %v1371
    %v3368 = vpop.f32.mrf.mxu0
    %v3369 = vadd.f32 %v3320, %v3368
    %v3370 = vpop.f32.mrf.mxu0
    %v3371 = vadd.f32 %v3322, %v3370
    %3372 = vmatmul.bf16.gmra.mxu0 %v1395
    %v3373 = vpop.f32.mrf.mxu0
    %v3374 = vadd.f32 %v3325, %v3373
    %v3375 = vpop.f32.mrf.mxu0
    %v3376 = vadd.f32 %v3327, %v3375
    %3377 = vmatmul.bf16.gmra.mxu0 %v1419
    %v3378 = vpop.f32.mrf.mxu0
    %v3379 = vadd.f32 %v3330, %v3378
    %v3380 = vpop.f32.mrf.mxu0
    %v3381 = vadd.f32 %v3332, %v3380
    %3382 = vmatmul.bf16.gmra.mxu0 %v1443
    %v3383 = vpop.f32.mrf.mxu0
    %v3384 = vadd.f32 %v3335, %v3383
    %v3385 = vpop.f32.mrf.mxu0
    %v3386 = vadd.f32 %v3337, %v3385
    %3387 = vdwg.mxu0
    %3388 = vmatpush.bf16.msra.mxu0 %v2683
    %3389 = vmatpush.bf16.msra.mxu0 %v2682
    %3390 = vmatpush.bf16.msra.mxu0 %v2681
    %3391 = vmatpush.bf16.msra.mxu0 %v2680
    %3392 = vmatpush.bf16.msra.mxu0 %v2679
    %3393 = vmatpush.bf16.msra.mxu0 %v2678
    %3394 = vmatpush.bf16.msra.mxu0 %v2677
    %3395 = vmatpush.bf16.msra.mxu0 %v2676
    %3396 = vmatmul.bf16.gmra.mxu0 %v1276
    %v3397 = vpop.f32.mrf.mxu0
    %v3398 = vadd.f32 %v3349, %v3397
    %v3399 = vpop.f32.mrf.mxu0
    %v3400 = vadd.f32 %v3351, %v3399
    %3401 = vmatmul.bf16.gmra.mxu0 %v1300
    %v3402 = vpop.f32.mrf.mxu0
    %v3403 = vadd.f32 %v3354, %v3402
    %v3404 = vpop.f32.mrf.mxu0
    %v3405 = vadd.f32 %v3356, %v3404
    %3406 = vmatmul.bf16.gmra.mxu0 %v1324
    %v3407 = vpop.f32.mrf.mxu0
    %v3408 = vadd.f32 %v3359, %v3407
    %v3409 = vpop.f32.mrf.mxu0
    %v3410 = vadd.f32 %v3361, %v3409
    %3411 = vmatmul.bf16.gmra.mxu0 %v1348
    %v3412 = vpop.f32.mrf.mxu0
    %v3413 = vadd.f32 %v3364, %v3412
    %v3414 = vpop.f32.mrf.mxu0
    %v3415 = vadd.f32 %v3366, %v3414
    %3416 = vmatmul.bf16.gmra.mxu0 %v1372
    %v3417 = vpop.f32.mrf.mxu0
    %v3418 = vadd.f32 %v3369, %v3417
    %v3419 = vpop.f32.mrf.mxu0
    %v3420 = vadd.f32 %v3371, %v3419
    %3421 = vmatmul.bf16.gmra.mxu0 %v1396
    %v3422 = vpop.f32.mrf.mxu0
    %v3423 = vadd.f32 %v3374, %v3422
    %v3424 = vpop.f32.mrf.mxu0
    %v3425 = vadd.f32 %v3376, %v3424
    %3426 = vmatmul.bf16.gmra.mxu0 %v1420
    %v3427 = vpop.f32.mrf.mxu0
    %v3428 = vadd.f32 %v3379, %v3427
    %v3429 = vpop.f32.mrf.mxu0
    %v3430 = vadd.f32 %v3381, %v3429
    %3431 = vmatmul.bf16.gmra.mxu0 %v1444
    %v3432 = vpop.f32.mrf.mxu0
    %v3433 = vadd.f32 %v3384, %v3432
    %v3434 = vpop.f32.mrf.mxu0
    %v3435 = vadd.f32 %v3386, %v3434
    %3436 = vdwg.mxu0
    %3437 = vmatpush.bf16.msra.mxu0 %v2691
    %3438 = vmatpush.bf16.msra.mxu0 %v2690
    %3439 = vmatpush.bf16.msra.mxu0 %v2689
    %3440 = vmatpush.bf16.msra.mxu0 %v2688
    %3441 = vmatpush.bf16.msra.mxu0 %v2687
    %3442 = vmatpush.bf16.msra.mxu0 %v2686
    %3443 = vmatpush.bf16.msra.mxu0 %v2685
    %3444 = vmatpush.bf16.msra.mxu0 %v2684
    %3445 = vmatmul.bf16.gmra.mxu0 %v1277
    %v3446 = vpop.f32.mrf.mxu0
    %v3447 = vadd.f32 %v3398, %v3446
    %v3448 = vpop.f32.mrf.mxu0
    %v3449 = vadd.f32 %v3400, %v3448
    %3450 = vmatmul.bf16.gmra.mxu0 %v1301
    %v3451 = vpop.f32.mrf.mxu0
    %v3452 = vadd.f32 %v3403, %v3451
    %v3453 = vpop.f32.mrf.mxu0
    %v3454 = vadd.f32 %v3405, %v3453
    %3455 = vmatmul.bf16.gmra.mxu0 %v1325
    %v3456 = vpop.f32.mrf.mxu0
    %v3457 = vadd.f32 %v3408, %v3456
    %v3458 = vpop.f32.mrf.mxu0
    %v3459 = vadd.f32 %v3410, %v3458
    %3460 = vmatmul.bf16.gmra.mxu0 %v1349
    %v3461 = vpop.f32.mrf.mxu0
    %v3462 = vadd.f32 %v3413, %v3461
    %v3463 = vpop.f32.mrf.mxu0
    %v3464 = vadd.f32 %v3415, %v3463
    %3465 = vmatmul.bf16.gmra.mxu0 %v1373
    %v3466 = vpop.f32.mrf.mxu0
    %v3467 = vadd.f32 %v3418, %v3466
    %v3468 = vpop.f32.mrf.mxu0
    %v3469 = vadd.f32 %v3420, %v3468
    %3470 = vmatmul.bf16.gmra.mxu0 %v1397
    %v3471 = vpop.f32.mrf.mxu0
    %v3472 = vadd.f32 %v3423, %v3471
    %v3473 = vpop.f32.mrf.mxu0
    %v3474 = vadd.f32 %v3425, %v3473
    %3475 = vmatmul.bf16.gmra.mxu0 %v1421
    %v3476 = vpop.f32.mrf.mxu0
    %v3477 = vadd.f32 %v3428, %v3476
    %v3478 = vpop.f32.mrf.mxu0
    %v3479 = vadd.f32 %v3430, %v3478
    %3480 = vmatmul.bf16.gmra.mxu0 %v1445
    %v3481 = vpop.f32.mrf.mxu0
    %v3482 = vadd.f32 %v3433, %v3481
    %v3483 = vpop.f32.mrf.mxu0
    %v3484 = vadd.f32 %v3435, %v3483
    %3485 = vdwg.mxu0
    %3486 = vmatpush.bf16.msra.mxu0 %v2699
    %3487 = vmatpush.bf16.msra.mxu0 %v2698
    %3488 = vmatpush.bf16.msra.mxu0 %v2697
    %3489 = vmatpush.bf16.msra.mxu0 %v2696
    %3490 = vmatpush.bf16.msra.mxu0 %v2695
    %3491 = vmatpush.bf16.msra.mxu0 %v2694
    %3492 = vmatpush.bf16.msra.mxu0 %v2693
    %3493 = vmatpush.bf16.msra.mxu0 %v2692
    %3494 = vmatmul.bf16.gmra.mxu0 %v1278
    %v3495 = vpop.f32.mrf.mxu0
    %v3496 = vadd.f32 %v3447, %v3495
    %v3497 = vpop.f32.mrf.mxu0
    %v3498 = vadd.f32 %v3449, %v3497
    %3499 = vmatmul.bf16.gmra.mxu0 %v1302
    %v3500 = vpop.f32.mrf.mxu0
    %v3501 = vadd.f32 %v3452, %v3500
    %v3502 = vpop.f32.mrf.mxu0
    %v3503 = vadd.f32 %v3454, %v3502
    %3504 = vmatmul.bf16.gmra.mxu0 %v1326
    %v3505 = vpop.f32.mrf.mxu0
    %v3506 = vadd.f32 %v3457, %v3505
    %v3507 = vpop.f32.mrf.mxu0
    %v3508 = vadd.f32 %v3459, %v3507
    %3509 = vmatmul.bf16.gmra.mxu0 %v1350
    %v3510 = vpop.f32.mrf.mxu0
    %v3511 = vadd.f32 %v3462, %v3510
    %v3512 = vpop.f32.mrf.mxu0
    %v3513 = vadd.f32 %v3464, %v3512
    %3514 = vmatmul.bf16.gmra.mxu0 %v1374
    %v3515 = vpop.f32.mrf.mxu0
    %v3516 = vadd.f32 %v3467, %v3515
    %v3517 = vpop.f32.mrf.mxu0
    %v3518 = vadd.f32 %v3469, %v3517
    %3519 = vmatmul.bf16.gmra.mxu0 %v1398
    %v3520 = vpop.f32.mrf.mxu0
    %v3521 = vadd.f32 %v3472, %v3520
    %v3522 = vpop.f32.mrf.mxu0
    %v3523 = vadd.f32 %v3474, %v3522
    %3524 = vmatmul.bf16.gmra.mxu0 %v1422
    %v3525 = vpop.f32.mrf.mxu0
    %v3526 = vadd.f32 %v3477, %v3525
    %v3527 = vpop.f32.mrf.mxu0
    %v3528 = vadd.f32 %v3479, %v3527
    %3529 = vmatmul.bf16.gmra.mxu0 %v1446
    %v3530 = vpop.f32.mrf.mxu0
    %v3531 = vadd.f32 %v3482, %v3530
    %v3532 = vpop.f32.mrf.mxu0
    %v3533 = vadd.f32 %v3484, %v3532
    %3534 = vdwg.mxu0
    %3535 = vmatpush.bf16.msra.mxu0 %v2707
    %3536 = vmatpush.bf16.msra.mxu0 %v2706
    %3537 = vmatpush.bf16.msra.mxu0 %v2705
    %3538 = vmatpush.bf16.msra.mxu0 %v2704
    %3539 = vmatpush.bf16.msra.mxu0 %v2703
    %3540 = vmatpush.bf16.msra.mxu0 %v2702
    %3541 = vmatpush.bf16.msra.mxu0 %v2701
    %3542 = vmatpush.bf16.msra.mxu0 %v2700
    %3543 = vmatmul.bf16.gmra.mxu0 %v1279
    %v3544 = vpop.f32.mrf.mxu0
    %v3545 = vadd.f32 %v3496, %v3544
    %v3546 = vpop.f32.mrf.mxu0
    %v3547 = vadd.f32 %v3498, %v3546
    %3548 = vmatmul.bf16.gmra.mxu0 %v1303
    %v3549 = vpop.f32.mrf.mxu0
    %v3550 = vadd.f32 %v3501, %v3549
    %v3551 = vpop.f32.mrf.mxu0
    %v3552 = vadd.f32 %v3503, %v3551
    %3553 = vmatmul.bf16.gmra.mxu0 %v1327
    %v3554 = vpop.f32.mrf.mxu0
    %v3555 = vadd.f32 %v3506, %v3554
    %v3556 = vpop.f32.mrf.mxu0
    %v3557 = vadd.f32 %v3508, %v3556
    %3558 = vmatmul.bf16.gmra.mxu0 %v1351
    %v3559 = vpop.f32.mrf.mxu0
    %v3560 = vadd.f32 %v3511, %v3559
    %v3561 = vpop.f32.mrf.mxu0
    %v3562 = vadd.f32 %v3513, %v3561
    %3563 = vmatmul.bf16.gmra.mxu0 %v1375
    %v3564 = vpop.f32.mrf.mxu0
    %v3565 = vadd.f32 %v3516, %v3564
    %v3566 = vpop.f32.mrf.mxu0
    %v3567 = vadd.f32 %v3518, %v3566
    %3568 = vmatmul.bf16.gmra.mxu0 %v1399
    %v3569 = vpop.f32.mrf.mxu0
    %v3570 = vadd.f32 %v3521, %v3569
    %v3571 = vpop.f32.mrf.mxu0
    %v3572 = vadd.f32 %v3523, %v3571
    %3573 = vmatmul.bf16.gmra.mxu0 %v1423
    %v3574 = vpop.f32.mrf.mxu0
    %v3575 = vadd.f32 %v3526, %v3574
    %v3576 = vpop.f32.mrf.mxu0
    %v3577 = vadd.f32 %v3528, %v3576
    %3578 = vmatmul.bf16.gmra.mxu0 %v1447
    %v3579 = vpop.f32.mrf.mxu0
    %v3580 = vadd.f32 %v3531, %v3579
    %v3581 = vpop.f32.mrf.mxu0
    %v3582 = vadd.f32 %v3533, %v3581
    %3583 = vdwg.mxu0
    %3584 = vmatpush.bf16.msra.mxu0 %v2715
    %3585 = vmatpush.bf16.msra.mxu0 %v2714
    %3586 = vmatpush.bf16.msra.mxu0 %v2713
    %3587 = vmatpush.bf16.msra.mxu0 %v2712
    %3588 = vmatpush.bf16.msra.mxu0 %v2711
    %3589 = vmatpush.bf16.msra.mxu0 %v2710
    %3590 = vmatpush.bf16.msra.mxu0 %v2709
    %3591 = vmatpush.bf16.msra.mxu0 %v2708
    %3592 = vmatmul.bf16.gmra.mxu0 %v1280
    %v3593 = vpop.f32.mrf.mxu0
    %v3594 = vadd.f32 %v3545, %v3593
    %v3595 = vpop.f32.mrf.mxu0
    %v3596 = vadd.f32 %v3547, %v3595
    %3597 = vmatmul.bf16.gmra.mxu0 %v1304
    %v3598 = vpop.f32.mrf.mxu0
    %v3599 = vadd.f32 %v3550, %v3598
    %v3600 = vpop.f32.mrf.mxu0
    %v3601 = vadd.f32 %v3552, %v3600
    %3602 = vmatmul.bf16.gmra.mxu0 %v1328
    %v3603 = vpop.f32.mrf.mxu0
    %v3604 = vadd.f32 %v3555, %v3603
    %v3605 = vpop.f32.mrf.mxu0
    %v3606 = vadd.f32 %v3557, %v3605
    %3607 = vmatmul.bf16.gmra.mxu0 %v1352
    %v3608 = vpop.f32.mrf.mxu0
    %v3609 = vadd.f32 %v3560, %v3608
    %v3610 = vpop.f32.mrf.mxu0
    %v3611 = vadd.f32 %v3562, %v3610
    %3612 = vmatmul.bf16.gmra.mxu0 %v1376
    %v3613 = vpop.f32.mrf.mxu0
    %v3614 = vadd.f32 %v3565, %v3613
    %v3615 = vpop.f32.mrf.mxu0
    %v3616 = vadd.f32 %v3567, %v3615
    %3617 = vmatmul.bf16.gmra.mxu0 %v1400
    %v3618 = vpop.f32.mrf.mxu0
    %v3619 = vadd.f32 %v3570, %v3618
    %v3620 = vpop.f32.mrf.mxu0
    %v3621 = vadd.f32 %v3572, %v3620
    %3622 = vmatmul.bf16.gmra.mxu0 %v1424
    %v3623 = vpop.f32.mrf.mxu0
    %v3624 = vadd.f32 %v3575, %v3623
    %v3625 = vpop.f32.mrf.mxu0
    %v3626 = vadd.f32 %v3577, %v3625
    %3627 = vmatmul.bf16.gmra.mxu0 %v1448
    %v3628 = vpop.f32.mrf.mxu0
    %v3629 = vadd.f32 %v3580, %v3628
    %v3630 = vpop.f32.mrf.mxu0
    %v3631 = vadd.f32 %v3582, %v3630
    %3632 = vdwg.mxu0
    %3633 = vmatpush.bf16.msra.mxu0 %v2723
    %3634 = vmatpush.bf16.msra.mxu0 %v2722
    %3635 = vmatpush.bf16.msra.mxu0 %v2721
    %3636 = vmatpush.bf16.msra.mxu0 %v2720
    %3637 = vmatpush.bf16.msra.mxu0 %v2719
    %3638 = vmatpush.bf16.msra.mxu0 %v2718
    %3639 = vmatpush.bf16.msra.mxu0 %v2717
    %3640 = vmatpush.bf16.msra.mxu0 %v2716
    %3641 = vmatmul.bf16.gmra.mxu0 %v1281
    %v3642 = vpop.f32.mrf.mxu0
    %v3643 = vadd.f32 %v3594, %v3642
    %v3644 = vpop.f32.mrf.mxu0
    %v3645 = vadd.f32 %v3596, %v3644
    %3646 = vmatmul.bf16.gmra.mxu0 %v1305
    %v3647 = vpop.f32.mrf.mxu0
    %v3648 = vadd.f32 %v3599, %v3647
    %v3649 = vpop.f32.mrf.mxu0
    %v3650 = vadd.f32 %v3601, %v3649
    %3651 = vmatmul.bf16.gmra.mxu0 %v1329
    %v3652 = vpop.f32.mrf.mxu0
    %v3653 = vadd.f32 %v3604, %v3652
    %v3654 = vpop.f32.mrf.mxu0
    %v3655 = vadd.f32 %v3606, %v3654
    %3656 = vmatmul.bf16.gmra.mxu0 %v1353
    %v3657 = vpop.f32.mrf.mxu0
    %v3658 = vadd.f32 %v3609, %v3657
    %v3659 = vpop.f32.mrf.mxu0
    %v3660 = vadd.f32 %v3611, %v3659
    %3661 = vmatmul.bf16.gmra.mxu0 %v1377
    %v3662 = vpop.f32.mrf.mxu0
    %v3663 = vadd.f32 %v3614, %v3662
    %v3664 = vpop.f32.mrf.mxu0
    %v3665 = vadd.f32 %v3616, %v3664
    %3666 = vmatmul.bf16.gmra.mxu0 %v1401
    %v3667 = vpop.f32.mrf.mxu0
    %v3668 = vadd.f32 %v3619, %v3667
    %v3669 = vpop.f32.mrf.mxu0
    %v3670 = vadd.f32 %v3621, %v3669
    %3671 = vmatmul.bf16.gmra.mxu0 %v1425
    %v3672 = vpop.f32.mrf.mxu0
    %v3673 = vadd.f32 %v3624, %v3672
    %v3674 = vpop.f32.mrf.mxu0
    %v3675 = vadd.f32 %v3626, %v3674
    %3676 = vmatmul.bf16.gmra.mxu0 %v1449
    %v3677 = vpop.f32.mrf.mxu0
    %v3678 = vadd.f32 %v3629, %v3677
    %v3679 = vpop.f32.mrf.mxu0
    %v3680 = vadd.f32 %v3631, %v3679
    %3681 = vdwg.mxu0
    %3682 = vmatpush.bf16.msra.mxu0 %v2731
    %3683 = vmatpush.bf16.msra.mxu0 %v2730
    %3684 = vmatpush.bf16.msra.mxu0 %v2729
    %3685 = vmatpush.bf16.msra.mxu0 %v2728
    %3686 = vmatpush.bf16.msra.mxu0 %v2727
    %3687 = vmatpush.bf16.msra.mxu0 %v2726
    %3688 = vmatpush.bf16.msra.mxu0 %v2725
    %3689 = vmatpush.bf16.msra.mxu0 %v2724
    %3690 = vmatmul.bf16.gmra.mxu0 %v1282
    %v3691 = vpop.f32.mrf.mxu0
    %v3692 = vadd.f32 %v3643, %v3691
    %v3693 = vpop.f32.mrf.mxu0
    %v3694 = vadd.f32 %v3645, %v3693
    %3695 = vmatmul.bf16.gmra.mxu0 %v1306
    %v3696 = vpop.f32.mrf.mxu0
    %v3697 = vadd.f32 %v3648, %v3696
    %v3698 = vpop.f32.mrf.mxu0
    %v3699 = vadd.f32 %v3650, %v3698
    %3700 = vmatmul.bf16.gmra.mxu0 %v1330
    %v3701 = vpop.f32.mrf.mxu0
    %v3702 = vadd.f32 %v3653, %v3701
    %v3703 = vpop.f32.mrf.mxu0
    %v3704 = vadd.f32 %v3655, %v3703
    %3705 = vmatmul.bf16.gmra.mxu0 %v1354
    %v3706 = vpop.f32.mrf.mxu0
    %v3707 = vadd.f32 %v3658, %v3706
    %v3708 = vpop.f32.mrf.mxu0
    %v3709 = vadd.f32 %v3660, %v3708
    %3710 = vmatmul.bf16.gmra.mxu0 %v1378
    %v3711 = vpop.f32.mrf.mxu0
    %v3712 = vadd.f32 %v3663, %v3711
    %v3713 = vpop.f32.mrf.mxu0
    %v3714 = vadd.f32 %v3665, %v3713
    %3715 = vmatmul.bf16.gmra.mxu0 %v1402
    %v3716 = vpop.f32.mrf.mxu0
    %v3717 = vadd.f32 %v3668, %v3716
    %v3718 = vpop.f32.mrf.mxu0
    %v3719 = vadd.f32 %v3670, %v3718
    %3720 = vmatmul.bf16.gmra.mxu0 %v1426
    %v3721 = vpop.f32.mrf.mxu0
    %v3722 = vadd.f32 %v3673, %v3721
    %v3723 = vpop.f32.mrf.mxu0
    %v3724 = vadd.f32 %v3675, %v3723
    %3725 = vmatmul.bf16.gmra.mxu0 %v1450
    %v3726 = vpop.f32.mrf.mxu0
    %v3727 = vadd.f32 %v3678, %v3726
    %v3728 = vpop.f32.mrf.mxu0
    %v3729 = vadd.f32 %v3680, %v3728
    %3730 = vdwg.mxu0
    %3731 = vmatpush.bf16.msra.mxu0 %v2739
    %3732 = vmatpush.bf16.msra.mxu0 %v2738
    %3733 = vmatpush.bf16.msra.mxu0 %v2737
    %3734 = vmatpush.bf16.msra.mxu0 %v2736
    %3735 = vmatpush.bf16.msra.mxu0 %v2735
    %3736 = vmatpush.bf16.msra.mxu0 %v2734
    %3737 = vmatpush.bf16.msra.mxu0 %v2733
    %3738 = vmatpush.bf16.msra.mxu0 %v2732
    %3739 = vmatmul.bf16.gmra.mxu0 %v1283
    %v3740 = vpop.f32.mrf.mxu0
    %v3741 = vadd.f32 %v3692, %v3740
    %v3742 = vpop.f32.mrf.mxu0
    %v3743 = vadd.f32 %v3694, %v3742
    %3744 = vmatmul.bf16.gmra.mxu0 %v1307
    %v3745 = vpop.f32.mrf.mxu0
    %v3746 = vadd.f32 %v3697, %v3745
    %v3747 = vpop.f32.mrf.mxu0
    %v3748 = vadd.f32 %v3699, %v3747
    %3749 = vmatmul.bf16.gmra.mxu0 %v1331
    %v3750 = vpop.f32.mrf.mxu0
    %v3751 = vadd.f32 %v3702, %v3750
    %v3752 = vpop.f32.mrf.mxu0
    %v3753 = vadd.f32 %v3704, %v3752
    %3754 = vmatmul.bf16.gmra.mxu0 %v1355
    %v3755 = vpop.f32.mrf.mxu0
    %v3756 = vadd.f32 %v3707, %v3755
    %v3757 = vpop.f32.mrf.mxu0
    %v3758 = vadd.f32 %v3709, %v3757
    %3759 = vmatmul.bf16.gmra.mxu0 %v1379
    %v3760 = vpop.f32.mrf.mxu0
    %v3761 = vadd.f32 %v3712, %v3760
    %v3762 = vpop.f32.mrf.mxu0
    %v3763 = vadd.f32 %v3714, %v3762
    %3764 = vmatmul.bf16.gmra.mxu0 %v1403
    %v3765 = vpop.f32.mrf.mxu0
    %v3766 = vadd.f32 %v3717, %v3765
    %v3767 = vpop.f32.mrf.mxu0
    %v3768 = vadd.f32 %v3719, %v3767
    %3769 = vmatmul.bf16.gmra.mxu0 %v1427
    %v3770 = vpop.f32.mrf.mxu0
    %v3771 = vadd.f32 %v3722, %v3770
    %v3772 = vpop.f32.mrf.mxu0
    %v3773 = vadd.f32 %v3724, %v3772
    %3774 = vmatmul.bf16.gmra.mxu0 %v1451
    %v3775 = vpop.f32.mrf.mxu0
    %v3776 = vadd.f32 %v3727, %v3775
    %v3777 = vpop.f32.mrf.mxu0
    %v3778 = vadd.f32 %v3729, %v3777
    %3779 = vdwg.mxu0
    %3780 = vmatpush.bf16.msra.mxu0 %v2747
    %3781 = vmatpush.bf16.msra.mxu0 %v2746
    %3782 = vmatpush.bf16.msra.mxu0 %v2745
    %3783 = vmatpush.bf16.msra.mxu0 %v2744
    %3784 = vmatpush.bf16.msra.mxu0 %v2743
    %3785 = vmatpush.bf16.msra.mxu0 %v2742
    %3786 = vmatpush.bf16.msra.mxu0 %v2741
    %3787 = vmatpush.bf16.msra.mxu0 %v2740
    %3788 = vmatmul.bf16.gmra.mxu0 %v1284
    %v3789 = vpop.f32.mrf.mxu0
    %v3790 = vadd.f32 %v3741, %v3789
    %v3791 = vpop.f32.mrf.mxu0
    %v3792 = vadd.f32 %v3743, %v3791
    %3793 = vmatmul.bf16.gmra.mxu0 %v1308
    %v3794 = vpop.f32.mrf.mxu0
    %v3795 = vadd.f32 %v3746, %v3794
    %v3796 = vpop.f32.mrf.mxu0
    %v3797 = vadd.f32 %v3748, %v3796
    %3798 = vmatmul.bf16.gmra.mxu0 %v1332
    %v3799 = vpop.f32.mrf.mxu0
    %v3800 = vadd.f32 %v3751, %v3799
    %v3801 = vpop.f32.mrf.mxu0
    %v3802 = vadd.f32 %v3753, %v3801
    %3803 = vmatmul.bf16.gmra.mxu0 %v1356
    %v3804 = vpop.f32.mrf.mxu0
    %v3805 = vadd.f32 %v3756, %v3804
    %v3806 = vpop.f32.mrf.mxu0
    %v3807 = vadd.f32 %v3758, %v3806
    %3808 = vmatmul.bf16.gmra.mxu0 %v1380
    %v3809 = vpop.f32.mrf.mxu0
    %v3810 = vadd.f32 %v3761, %v3809
    %v3811 = vpop.f32.mrf.mxu0
    %v3812 = vadd.f32 %v3763, %v3811
    %3813 = vmatmul.bf16.gmra.mxu0 %v1404
    %v3814 = vpop.f32.mrf.mxu0
    %v3815 = vadd.f32 %v3766, %v3814
    %v3816 = vpop.f32.mrf.mxu0
    %v3817 = vadd.f32 %v3768, %v3816
    %3818 = vmatmul.bf16.gmra.mxu0 %v1428
    %v3819 = vpop.f32.mrf.mxu0
    %v3820 = vadd.f32 %v3771, %v3819
    %v3821 = vpop.f32.mrf.mxu0
    %v3822 = vadd.f32 %v3773, %v3821
    %3823 = vmatmul.bf16.gmra.mxu0 %v1452
    %v3824 = vpop.f32.mrf.mxu0
    %v3825 = vadd.f32 %v3776, %v3824
    %v3826 = vpop.f32.mrf.mxu0
    %v3827 = vadd.f32 %v3778, %v3826
    %3828 = vdwg.mxu0
    %3829 = vmatpush.bf16.msra.mxu0 %v2755
    %3830 = vmatpush.bf16.msra.mxu0 %v2754
    %3831 = vmatpush.bf16.msra.mxu0 %v2753
    %3832 = vmatpush.bf16.msra.mxu0 %v2752
    %3833 = vmatpush.bf16.msra.mxu0 %v2751
    %3834 = vmatpush.bf16.msra.mxu0 %v2750
    %3835 = vmatpush.bf16.msra.mxu0 %v2749
    %3836 = vmatpush.bf16.msra.mxu0 %v2748
    %3837 = vmatmul.bf16.gmra.mxu0 %v1285
    %v3838 = vpop.f32.mrf.mxu0
    %v3839 = vadd.f32 %v3790, %v3838
    %v3840 = vpop.f32.mrf.mxu0
    %v3841 = vadd.f32 %v3792, %v3840
    %3842 = vmatmul.bf16.gmra.mxu0 %v1309
    %v3843 = vpop.f32.mrf.mxu0
    %v3844 = vadd.f32 %v3795, %v3843
    %v3845 = vpop.f32.mrf.mxu0
    %v3846 = vadd.f32 %v3797, %v3845
    %3847 = vmatmul.bf16.gmra.mxu0 %v1333
    %v3848 = vpop.f32.mrf.mxu0
    %v3849 = vadd.f32 %v3800, %v3848
    %v3850 = vpop.f32.mrf.mxu0
    %v3851 = vadd.f32 %v3802, %v3850
    %3852 = vmatmul.bf16.gmra.mxu0 %v1357
    %v3853 = vpop.f32.mrf.mxu0
    %v3854 = vadd.f32 %v3805, %v3853
    %v3855 = vpop.f32.mrf.mxu0
    %v3856 = vadd.f32 %v3807, %v3855
    %3857 = vmatmul.bf16.gmra.mxu0 %v1381
    %v3858 = vpop.f32.mrf.mxu0
    %v3859 = vadd.f32 %v3810, %v3858
    %v3860 = vpop.f32.mrf.mxu0
    %v3861 = vadd.f32 %v3812, %v3860
    %3862 = vmatmul.bf16.gmra.mxu0 %v1405
    %v3863 = vpop.f32.mrf.mxu0
    %v3864 = vadd.f32 %v3815, %v3863
    %v3865 = vpop.f32.mrf.mxu0
    %v3866 = vadd.f32 %v3817, %v3865
    %3867 = vmatmul.bf16.gmra.mxu0 %v1429
    %v3868 = vpop.f32.mrf.mxu0
    %v3869 = vadd.f32 %v3820, %v3868
    %v3870 = vpop.f32.mrf.mxu0
    %v3871 = vadd.f32 %v3822, %v3870
    %3872 = vmatmul.bf16.gmra.mxu0 %v1453
    %v3873 = vpop.f32.mrf.mxu0
    %v3874 = vadd.f32 %v3825, %v3873
    %v3875 = vpop.f32.mrf.mxu0
    %v3876 = vadd.f32 %v3827, %v3875
    %3877 = vdwg.mxu0
    %3878 = vmatpush.bf16.msra.mxu0 %v2763
    %3879 = vmatpush.bf16.msra.mxu0 %v2762
    %3880 = vmatpush.bf16.msra.mxu0 %v2761
    %3881 = vmatpush.bf16.msra.mxu0 %v2760
    %3882 = vmatpush.bf16.msra.mxu0 %v2759
    %3883 = vmatpush.bf16.msra.mxu0 %v2758
    %3884 = vmatpush.bf16.msra.mxu0 %v2757
    %3885 = vmatpush.bf16.msra.mxu0 %v2756
    %3886 = vmatmul.bf16.gmra.mxu0 %v1286
    %v3887 = vpop.f32.mrf.mxu0
    %v3888 = vadd.f32 %v3839, %v3887
    %v3889 = vpop.f32.mrf.mxu0
    %v3890 = vadd.f32 %v3841, %v3889
    %3891 = vmatmul.bf16.gmra.mxu0 %v1310
    %v3892 = vpop.f32.mrf.mxu0
    %v3893 = vadd.f32 %v3844, %v3892
    %v3894 = vpop.f32.mrf.mxu0
    %v3895 = vadd.f32 %v3846, %v3894
    %3896 = vmatmul.bf16.gmra.mxu0 %v1334
    %v3897 = vpop.f32.mrf.mxu0
    %v3898 = vadd.f32 %v3849, %v3897
    %v3899 = vpop.f32.mrf.mxu0
    %v3900 = vadd.f32 %v3851, %v3899
    %3901 = vmatmul.bf16.gmra.mxu0 %v1358
    %v3902 = vpop.f32.mrf.mxu0
    %v3903 = vadd.f32 %v3854, %v3902
    %v3904 = vpop.f32.mrf.mxu0
    %v3905 = vadd.f32 %v3856, %v3904
    %3906 = vmatmul.bf16.gmra.mxu0 %v1382
    %v3907 = vpop.f32.mrf.mxu0
    %v3908 = vadd.f32 %v3859, %v3907
    %v3909 = vpop.f32.mrf.mxu0
    %v3910 = vadd.f32 %v3861, %v3909
    %3911 = vmatmul.bf16.gmra.mxu0 %v1406
    %v3912 = vpop.f32.mrf.mxu0
    %v3913 = vadd.f32 %v3864, %v3912
    %v3914 = vpop.f32.mrf.mxu0
    %v3915 = vadd.f32 %v3866, %v3914
    %3916 = vmatmul.bf16.gmra.mxu0 %v1430
    %v3917 = vpop.f32.mrf.mxu0
    %v3918 = vadd.f32 %v3869, %v3917
    %v3919 = vpop.f32.mrf.mxu0
    %v3920 = vadd.f32 %v3871, %v3919
    %3921 = vmatmul.bf16.gmra.mxu0 %v1454
    %v3922 = vpop.f32.mrf.mxu0
    %v3923 = vadd.f32 %v3874, %v3922
    %v3924 = vpop.f32.mrf.mxu0
    %v3925 = vadd.f32 %v3876, %v3924
    %3926 = vdwg.mxu0
    %3927 = vmatpush.bf16.msra.mxu0 %v2771
    %3928 = vmatpush.bf16.msra.mxu0 %v2770
    %3929 = vmatpush.bf16.msra.mxu0 %v2769
    %3930 = vmatpush.bf16.msra.mxu0 %v2768
    %3931 = vmatpush.bf16.msra.mxu0 %v2767
    %3932 = vmatpush.bf16.msra.mxu0 %v2766
    %3933 = vmatpush.bf16.msra.mxu0 %v2765
    %3934 = vmatpush.bf16.msra.mxu0 %v2764
    %3935 = vmatmul.bf16.gmra.mxu0 %v1287
    %v3936 = vpop.f32.mrf.mxu0
    %v3937 = vadd.f32 %v3888, %v3936
    %v3938 = vpop.f32.mrf.mxu0
    %v3939 = vadd.f32 %v3890, %v3938
    %3940 = vmatmul.bf16.gmra.mxu0 %v1311
    %v3941 = vpop.f32.mrf.mxu0
    %v3942 = vadd.f32 %v3893, %v3941
    %v3943 = vpop.f32.mrf.mxu0
    %v3944 = vadd.f32 %v3895, %v3943
    %3945 = vmatmul.bf16.gmra.mxu0 %v1335
    %v3946 = vpop.f32.mrf.mxu0
    %v3947 = vadd.f32 %v3898, %v3946
    %v3948 = vpop.f32.mrf.mxu0
    %v3949 = vadd.f32 %v3900, %v3948
    %3950 = vmatmul.bf16.gmra.mxu0 %v1359
    %v3951 = vpop.f32.mrf.mxu0
    %v3952 = vadd.f32 %v3903, %v3951
    %v3953 = vpop.f32.mrf.mxu0
    %v3954 = vadd.f32 %v3905, %v3953
    %3955 = vmatmul.bf16.gmra.mxu0 %v1383
    %v3956 = vpop.f32.mrf.mxu0
    %v3957 = vadd.f32 %v3908, %v3956
    %v3958 = vpop.f32.mrf.mxu0
    %v3959 = vadd.f32 %v3910, %v3958
    %3960 = vmatmul.bf16.gmra.mxu0 %v1407
    %v3961 = vpop.f32.mrf.mxu0
    %v3962 = vadd.f32 %v3913, %v3961
    %v3963 = vpop.f32.mrf.mxu0
    %v3964 = vadd.f32 %v3915, %v3963
    %3965 = vmatmul.bf16.gmra.mxu0 %v1431
    %v3966 = vpop.f32.mrf.mxu0
    %v3967 = vadd.f32 %v3918, %v3966
    %v3968 = vpop.f32.mrf.mxu0
    %v3969 = vadd.f32 %v3920, %v3968
    %3970 = vmatmul.bf16.gmra.mxu0 %v1455
    %v3971 = vpop.f32.mrf.mxu0
    %v3972 = vadd.f32 %v3923, %v3971
    %v3973 = vpop.f32.mrf.mxu0
    %v3974 = vadd.f32 %v3925, %v3973
    %3975 = vdwg.mxu0
    %3976 = vmatpush.bf16.msra.mxu0 %v2779
    %3977 = vmatpush.bf16.msra.mxu0 %v2778
    %3978 = vmatpush.bf16.msra.mxu0 %v2777
    %3979 = vmatpush.bf16.msra.mxu0 %v2776
    %3980 = vmatpush.bf16.msra.mxu0 %v2775
    %3981 = vmatpush.bf16.msra.mxu0 %v2774
    %3982 = vmatpush.bf16.msra.mxu0 %v2773
    %3983 = vmatpush.bf16.msra.mxu0 %v2772
    %3984 = vmatmul.bf16.gmra.mxu0 %v1288
    %v3985 = vpop.f32.mrf.mxu0
    %v3986 = vadd.f32 %v3937, %v3985
    %v3987 = vpop.f32.mrf.mxu0
    %v3988 = vadd.f32 %v3939, %v3987
    %3989 = vmatmul.bf16.gmra.mxu0 %v1312
    %v3990 = vpop.f32.mrf.mxu0
    %v3991 = vadd.f32 %v3942, %v3990
    %v3992 = vpop.f32.mrf.mxu0
    %v3993 = vadd.f32 %v3944, %v3992
    %3994 = vmatmul.bf16.gmra.mxu0 %v1336
    %v3995 = vpop.f32.mrf.mxu0
    %v3996 = vadd.f32 %v3947, %v3995
    %v3997 = vpop.f32.mrf.mxu0
    %v3998 = vadd.f32 %v3949, %v3997
    %3999 = vmatmul.bf16.gmra.mxu0 %v1360
    %v4000 = vpop.f32.mrf.mxu0
    %v4001 = vadd.f32 %v3952, %v4000
    %v4002 = vpop.f32.mrf.mxu0
    %v4003 = vadd.f32 %v3954, %v4002
    %4004 = vmatmul.bf16.gmra.mxu0 %v1384
    %v4005 = vpop.f32.mrf.mxu0
    %v4006 = vadd.f32 %v3957, %v4005
    %v4007 = vpop.f32.mrf.mxu0
    %v4008 = vadd.f32 %v3959, %v4007
    %4009 = vmatmul.bf16.gmra.mxu0 %v1408
    %v4010 = vpop.f32.mrf.mxu0
    %v4011 = vadd.f32 %v3962, %v4010
    %v4012 = vpop.f32.mrf.mxu0
    %v4013 = vadd.f32 %v3964, %v4012
    %4014 = vmatmul.bf16.gmra.mxu0 %v1432
    %v4015 = vpop.f32.mrf.mxu0
    %v4016 = vadd.f32 %v3967, %v4015
    %v4017 = vpop.f32.mrf.mxu0
    %v4018 = vadd.f32 %v3969, %v4017
    %4019 = vmatmul.bf16.gmra.mxu0 %v1456
    %v4020 = vpop.f32.mrf.mxu0
    %v4021 = vadd.f32 %v3972, %v4020
    %v4022 = vpop.f32.mrf.mxu0
    %v4023 = vadd.f32 %v3974, %v4022
    %4024 = vdwg.mxu0
    %4025 = vmatpush.bf16.msra.mxu0 %v2787
    %4026 = vmatpush.bf16.msra.mxu0 %v2786
    %4027 = vmatpush.bf16.msra.mxu0 %v2785
    %4028 = vmatpush.bf16.msra.mxu0 %v2784
    %4029 = vmatpush.bf16.msra.mxu0 %v2783
    %4030 = vmatpush.bf16.msra.mxu0 %v2782
    %4031 = vmatpush.bf16.msra.mxu0 %v2781
    %4032 = vmatpush.bf16.msra.mxu0 %v2780
    %4033 = vmatmul.bf16.gmra.mxu0 %v1289
    %v4034 = vpop.f32.mrf.mxu0
    %v4035 = vadd.f32 %v3986, %v4034
    %v4036 = vpop.f32.mrf.mxu0
    %v4037 = vadd.f32 %v3988, %v4036
    %4038 = vmatmul.bf16.gmra.mxu0 %v1313
    %v4039 = vpop.f32.mrf.mxu0
    %v4040 = vadd.f32 %v3991, %v4039
    %v4041 = vpop.f32.mrf.mxu0
    %v4042 = vadd.f32 %v3993, %v4041
    %4043 = vmatmul.bf16.gmra.mxu0 %v1337
    %v4044 = vpop.f32.mrf.mxu0
    %v4045 = vadd.f32 %v3996, %v4044
    %v4046 = vpop.f32.mrf.mxu0
    %v4047 = vadd.f32 %v3998, %v4046
    %4048 = vmatmul.bf16.gmra.mxu0 %v1361
    %v4049 = vpop.f32.mrf.mxu0
    %v4050 = vadd.f32 %v4001, %v4049
    %v4051 = vpop.f32.mrf.mxu0
    %v4052 = vadd.f32 %v4003, %v4051
    %4053 = vmatmul.bf16.gmra.mxu0 %v1385
    %v4054 = vpop.f32.mrf.mxu0
    %v4055 = vadd.f32 %v4006, %v4054
    %v4056 = vpop.f32.mrf.mxu0
    %v4057 = vadd.f32 %v4008, %v4056
    %4058 = vmatmul.bf16.gmra.mxu0 %v1409
    %v4059 = vpop.f32.mrf.mxu0
    %v4060 = vadd.f32 %v4011, %v4059
    %v4061 = vpop.f32.mrf.mxu0
    %v4062 = vadd.f32 %v4013, %v4061
    %4063 = vmatmul.bf16.gmra.mxu0 %v1433
    %v4064 = vpop.f32.mrf.mxu0
    %v4065 = vadd.f32 %v4016, %v4064
    %v4066 = vpop.f32.mrf.mxu0
    %v4067 = vadd.f32 %v4018, %v4066
    %4068 = vmatmul.bf16.gmra.mxu0 %v1457
    %v4069 = vpop.f32.mrf.mxu0
    %v4070 = vadd.f32 %v4021, %v4069
    %v4071 = vpop.f32.mrf.mxu0
    %v4072 = vadd.f32 %v4023, %v4071
    %4073 = vdwg.mxu0
    %4074 = vmatpush.bf16.msra.mxu0 %v2795
    %4075 = vmatpush.bf16.msra.mxu0 %v2794
    %4076 = vmatpush.bf16.msra.mxu0 %v2793
    %4077 = vmatpush.bf16.msra.mxu0 %v2792
    %4078 = vmatpush.bf16.msra.mxu0 %v2791
    %4079 = vmatpush.bf16.msra.mxu0 %v2790
    %4080 = vmatpush.bf16.msra.mxu0 %v2789
    %4081 = vmatpush.bf16.msra.mxu0 %v2788
    %4082 = vmatmul.bf16.gmra.mxu0 %v1290
    %v4083 = vpop.f32.mrf.mxu0
    %v4084 = vadd.f32 %v4035, %v4083
    %v4085 = vpop.f32.mrf.mxu0
    %v4086 = vadd.f32 %v4037, %v4085
    %4087 = vmatmul.bf16.gmra.mxu0 %v1314
    %v4088 = vpop.f32.mrf.mxu0
    %v4089 = vadd.f32 %v4040, %v4088
    %v4090 = vpop.f32.mrf.mxu0
    %v4091 = vadd.f32 %v4042, %v4090
    %4092 = vmatmul.bf16.gmra.mxu0 %v1338
    %v4093 = vpop.f32.mrf.mxu0
    %v4094 = vadd.f32 %v4045, %v4093
    %v4095 = vpop.f32.mrf.mxu0
    %v4096 = vadd.f32 %v4047, %v4095
    %4097 = vmatmul.bf16.gmra.mxu0 %v1362
    %v4098 = vpop.f32.mrf.mxu0
    %v4099 = vadd.f32 %v4050, %v4098
    %v4100 = vpop.f32.mrf.mxu0
    %v4101 = vadd.f32 %v4052, %v4100
    %4102 = vmatmul.bf16.gmra.mxu0 %v1386
    %v4103 = vpop.f32.mrf.mxu0
    %v4104 = vadd.f32 %v4055, %v4103
    %v4105 = vpop.f32.mrf.mxu0
    %v4106 = vadd.f32 %v4057, %v4105
    %4107 = vmatmul.bf16.gmra.mxu0 %v1410
    %v4108 = vpop.f32.mrf.mxu0
    %v4109 = vadd.f32 %v4060, %v4108
    %v4110 = vpop.f32.mrf.mxu0
    %v4111 = vadd.f32 %v4062, %v4110
    %4112 = vmatmul.bf16.gmra.mxu0 %v1434
    %v4113 = vpop.f32.mrf.mxu0
    %v4114 = vadd.f32 %v4065, %v4113
    %v4115 = vpop.f32.mrf.mxu0
    %v4116 = vadd.f32 %v4067, %v4115
    %4117 = vmatmul.bf16.gmra.mxu0 %v1458
    %v4118 = vpop.f32.mrf.mxu0
    %v4119 = vadd.f32 %v4070, %v4118
    %v4120 = vpop.f32.mrf.mxu0
    %v4121 = vadd.f32 %v4072, %v4120
    %4122 = vdwg.mxu0
    %4123 = vmatpush.bf16.msra.mxu0 %v2803
    %4124 = vmatpush.bf16.msra.mxu0 %v2802
    %4125 = vmatpush.bf16.msra.mxu0 %v2801
    %4126 = vmatpush.bf16.msra.mxu0 %v2800
    %4127 = vmatpush.bf16.msra.mxu0 %v2799
    %4128 = vmatpush.bf16.msra.mxu0 %v2798
    %4129 = vmatpush.bf16.msra.mxu0 %v2797
    %4130 = vmatpush.bf16.msra.mxu0 %v2796
    %4131 = vmatmul.bf16.gmra.mxu0 %v1291
    %v4132 = vpop.f32.mrf.mxu0
    %v4133 = vadd.f32 %v4084, %v4132
    %v4134 = vpop.f32.mrf.mxu0
    %v4135 = vadd.f32 %v4086, %v4134
    %4136 = vmatmul.bf16.gmra.mxu0 %v1315
    %v4137 = vpop.f32.mrf.mxu0
    %v4138 = vadd.f32 %v4089, %v4137
    %v4139 = vpop.f32.mrf.mxu0
    %v4140 = vadd.f32 %v4091, %v4139
    %4141 = vmatmul.bf16.gmra.mxu0 %v1339
    %v4142 = vpop.f32.mrf.mxu0
    %v4143 = vadd.f32 %v4094, %v4142
    %v4144 = vpop.f32.mrf.mxu0
    %v4145 = vadd.f32 %v4096, %v4144
    %4146 = vmatmul.bf16.gmra.mxu0 %v1363
    %v4147 = vpop.f32.mrf.mxu0
    %v4148 = vadd.f32 %v4099, %v4147
    %v4149 = vpop.f32.mrf.mxu0
    %v4150 = vadd.f32 %v4101, %v4149
    %4151 = vmatmul.bf16.gmra.mxu0 %v1387
    %v4152 = vpop.f32.mrf.mxu0
    %v4153 = vadd.f32 %v4104, %v4152
    %v4154 = vpop.f32.mrf.mxu0
    %v4155 = vadd.f32 %v4106, %v4154
    %4156 = vmatmul.bf16.gmra.mxu0 %v1411
    %v4157 = vpop.f32.mrf.mxu0
    %v4158 = vadd.f32 %v4109, %v4157
    %v4159 = vpop.f32.mrf.mxu0
    %v4160 = vadd.f32 %v4111, %v4159
    %4161 = vmatmul.bf16.gmra.mxu0 %v1435
    %v4162 = vpop.f32.mrf.mxu0
    %v4163 = vadd.f32 %v4114, %v4162
    %v4164 = vpop.f32.mrf.mxu0
    %v4165 = vadd.f32 %v4116, %v4164
    %4166 = vmatmul.bf16.gmra.mxu0 %v1459
    %v4167 = vpop.f32.mrf.mxu0
    %v4168 = vadd.f32 %v4119, %v4167
    %v4169 = vpop.f32.mrf.mxu0
    %v4170 = vadd.f32 %v4121, %v4169
    %4171 = vdwg.mxu0
    %4188 = vrot.lane.b32.xlu0 %v4133, 96
    %v4189 = vpop.permute.xlu0 %4188
    %4190 = vrot.lane.b32.xlu0 %v4135, 96
    %v4191 = vpop.permute.xlu0 %4190
    %4192 = vrot.lane.b32.xlu0 %v4138, 96
    %v4193 = vpop.permute.xlu0 %4192
    %4194 = vrot.lane.b32.xlu0 %v4140, 96
    %v4195 = vpop.permute.xlu0 %4194
    %4196 = vrot.lane.b32.xlu0 %v4143, 96
    %v4197 = vpop.permute.xlu0 %4196
    %4198 = vrot.lane.b32.xlu0 %v4145, 96
    %v4199 = vpop.permute.xlu0 %4198
    %4200 = vrot.lane.b32.xlu0 %v4148, 96
    %v4201 = vpop.permute.xlu0 %4200
    %4202 = vrot.lane.b32.xlu0 %v4150, 96
    %v4203 = vpop.permute.xlu0 %4202
    %4204 = vrot.lane.b32.xlu0 %v4153, 96
    %v4205 = vpop.permute.xlu0 %4204
    %4206 = vrot.lane.b32.xlu0 %v4155, 96
    %v4207 = vpop.permute.xlu0 %4206
    %4208 = vrot.lane.b32.xlu0 %v4158, 96
    %v4209 = vpop.permute.xlu0 %4208
    %4210 = vrot.lane.b32.xlu0 %v4160, 96
    %v4211 = vpop.permute.xlu0 %4210
    %4212 = vrot.lane.b32.xlu0 %v4163, 96
    %v4213 = vpop.permute.xlu0 %4212
    %4214 = vrot.lane.b32.xlu0 %v4165, 96
    %v4215 = vpop.permute.xlu0 %4214
    %4216 = vrot.lane.b32.xlu0 %v4168, 96
    %v4217 = vpop.permute.xlu0 %4216
    %4218 = vrot.lane.b32.xlu0 %v4170, 96
    %v4219 = vpop.permute.xlu0 %4218
    %v4236 = vadd.f32 %v4133, %v4189
    %v4237 = vadd.f32 %v4135, %v4191
    %v4238 = vadd.f32 %v4138, %v4193
    %v4239 = vadd.f32 %v4140, %v4195
    %v4240 = vadd.f32 %v4143, %v4197
    %v4241 = vadd.f32 %v4145, %v4199
    %v4242 = vadd.f32 %v4148, %v4201
    %v4243 = vadd.f32 %v4150, %v4203
    %v4244 = vadd.f32 %v4153, %v4205
    %v4245 = vadd.f32 %v4155, %v4207
    %v4246 = vadd.f32 %v4158, %v4209
    %v4247 = vadd.f32 %v4160, %v4211
    %v4248 = vadd.f32 %v4163, %v4213
    %v4249 = vadd.f32 %v4165, %v4215
    %v4250 = vadd.f32 %v4168, %v4217
    %v4251 = vadd.f32 %v4170, %v4219
    %4252 = vrot.lane.b32.xlu0 %v4133, 64
    %v4253 = vpop.permute.xlu0 %4252
    %4254 = vrot.lane.b32.xlu0 %v4135, 64
    %v4255 = vpop.permute.xlu0 %4254
    %4256 = vrot.lane.b32.xlu0 %v4138, 64
    %v4257 = vpop.permute.xlu0 %4256
    %4258 = vrot.lane.b32.xlu0 %v4140, 64
    %v4259 = vpop.permute.xlu0 %4258
    %4260 = vrot.lane.b32.xlu0 %v4143, 64
    %v4261 = vpop.permute.xlu0 %4260
    %4262 = vrot.lane.b32.xlu0 %v4145, 64
    %v4263 = vpop.permute.xlu0 %4262
    %4264 = vrot.lane.b32.xlu0 %v4148, 64
    %v4265 = vpop.permute.xlu0 %4264
    %4266 = vrot.lane.b32.xlu0 %v4150, 64
    %v4267 = vpop.permute.xlu0 %4266
    %4268 = vrot.lane.b32.xlu0 %v4153, 64
    %v4269 = vpop.permute.xlu0 %4268
    %4270 = vrot.lane.b32.xlu0 %v4155, 64
    %v4271 = vpop.permute.xlu0 %4270
    %4272 = vrot.lane.b32.xlu0 %v4158, 64
    %v4273 = vpop.permute.xlu0 %4272
    %4274 = vrot.lane.b32.xlu0 %v4160, 64
    %v4275 = vpop.permute.xlu0 %4274
    %4276 = vrot.lane.b32.xlu0 %v4163, 64
    %v4277 = vpop.permute.xlu0 %4276
    %4278 = vrot.lane.b32.xlu0 %v4165, 64
    %v4279 = vpop.permute.xlu0 %4278
    %4280 = vrot.lane.b32.xlu0 %v4168, 64
    %v4281 = vpop.permute.xlu0 %4280
    %4282 = vrot.lane.b32.xlu0 %v4170, 64
    %v4283 = vpop.permute.xlu0 %4282
    %v4300 = vadd.f32 %v4236, %v4253
    %v4301 = vadd.f32 %v4237, %v4255
    %v4302 = vadd.f32 %v4238, %v4257
    %v4303 = vadd.f32 %v4239, %v4259
    %v4304 = vadd.f32 %v4240, %v4261
    %v4305 = vadd.f32 %v4241, %v4263
    %v4306 = vadd.f32 %v4242, %v4265
    %v4307 = vadd.f32 %v4243, %v4267
    %v4308 = vadd.f32 %v4244, %v4269
    %v4309 = vadd.f32 %v4245, %v4271
    %v4310 = vadd.f32 %v4246, %v4273
    %v4311 = vadd.f32 %v4247, %v4275
    %v4312 = vadd.f32 %v4248, %v4277
    %v4313 = vadd.f32 %v4249, %v4279
    %v4314 = vadd.f32 %v4250, %v4281
    %v4315 = vadd.f32 %v4251, %v4283
    %vm4316 = vcmask 261120
    %4317 = vst.msk [vmem:[%s2] sm:$0xff] %vm4316, %v4300
    %4318 = vst.msk [vmem:[%s2 + $0x8] sm:$0xff] %vm4316, %v4301
    %4319 = vst.msk [vmem:[%s2 + $0x10] sm:$0xff] %vm4316, %v4302
    %4320 = vst.msk [vmem:[%s2 + $0x18] sm:$0xff] %vm4316, %v4303
    %4321 = vst.msk [vmem:[%s2 + $0x20] sm:$0xff] %vm4316, %v4304
    %4322 = vst.msk [vmem:[%s2 + $0x28] sm:$0xff] %vm4316, %v4305
    %4323 = vst.msk [vmem:[%s2 + $0x30] sm:$0xff] %vm4316, %v4306
    %4324 = vst.msk [vmem:[%s2 + $0x38] sm:$0xff] %vm4316, %v4307
    %4325 = vst.msk [vmem:[%s2 + $0x40] sm:$0xff] %vm4316, %v4308
    %4326 = vst.msk [vmem:[%s2 + $0x48] sm:$0xff] %vm4316, %v4309
    %4327 = vst.msk [vmem:[%s2 + $0x50] sm:$0xff] %vm4316, %v4310
    %4328 = vst.msk [vmem:[%s2 + $0x58] sm:$0xff] %vm4316, %v4311
    %4329 = vst.msk [vmem:[%s2 + $0x60] sm:$0xff] %vm4316, %v4312
    %4330 = vst.msk [vmem:[%s2 + $0x68] sm:$0xff] %vm4316, %v4313
    %4331 = vst.msk [vmem:[%s2 + $0x70] sm:$0xff] %vm4316, %v4314
    %4332 = vst.msk [vmem:[%s2 + $0x78] sm:$0xff] %vm4316, %v4315
    // Predicated region
    $region14: #{tpu_custom_call.1} parent=1 // pred_check
      _
    $region15: #{tpu_custom_call.1} parent=1 // pred_check_branch
      %4334 = sbr.rel (0) target = $region17
    $region16: #{tpu_custom_call.1} parent=1 // pred_region
      _
    $region17: #{tpu_custom_call.1} parent=1 // pred_fallthru
      _
    // Predicated region
    $region18: #{tpu_custom_call.1} parent=1 // pred_check
      _
    $region19: #{tpu_custom_call.1} parent=1 // pred_check_branch
      %4336 = sbr.rel (0) target = $region21
    $region20: #{tpu_custom_call.1} parent=1 // pred_region
      _
    $region21: #{tpu_custom_call.1} parent=1 // pred_fallthru
      _
    %4337 = vsyncpa [#allocation3], 1

</llo_original>
